<compile_context>
chip_gen: v7x
topology: tpu7x:2x2x1
jax: 0.10.0
libtpu: 0.0.40
codegen_flags: <defaults>
</compile_context>

<pallas_src>
import functools

import jax
import jax.numpy as jnp
from jax.experimental import pallas as pl
from jax.experimental.pallas import tpu as pltpu


def _cdiv(a: int, b: int) -> int:
    return -(-a // b)


def _bce_loss_kernel(seed_ref, oemb_ref, pemb_ref, w_ref, num_ref, den_ref,
                     carry_ref, *, inv_temperature, n_rows, tiles_per_core,
                     tile_rows, n_cores):
    c = pl.program_id(0)          # core-split axis
    t = pl.program_id(1)          # sequential tile axis ("arbitrary")
    f32 = jnp.float32
    g_rows = tile_rows // 128     # lane-dense groups per tile
    d = oemb_ref.shape[-1]

    @pl.when(t == 0)
    def _():
        num_ref[...] = jnp.zeros_like(num_ref)
        den_ref[...] = jnp.zeros_like(den_ref)
        # Embedding of the row preceding this core's first row.  Core 0 wraps
        # to the global last row -- matches the roll-by-1 negatives sampler.
        if n_cores == 1:
            prev = seed_ref[0:1, :]
        else:
            prev = jnp.where(c == 0, seed_ref[0:1, :], seed_ref[1:2, :])
        carry_ref[...] = prev.astype(f32)

    out_f = oemb_ref[...].astype(f32)      # (tm, D)
    pos_f = pemb_ref[...].astype(f32)      # (tm, D)

    # Negatives = positives shifted down by one row, with the cross-tile
    # boundary row carried in VMEM across the sequential grid axis.
    neg_f = jnp.concatenate([carry_ref[...], pos_f[:tile_rows - 1, :]], axis=0)
    carry_ref[...] = pos_f[tile_rows - 1:tile_rows, :]          # next tile

    # D-axis reduction on the MXU (ones-matvec) instead of XLU lane reduces.
    # HIGHEST precision keeps the f32 dot exact (MXU is idle here anyway).
    ones_col = jnp.ones((d, 1), f32)
    pos_col = jnp.dot(out_f * pos_f, ones_col,
                      preferred_element_type=f32,
                      precision=jax.lax.Precision.HIGHEST)      # (tm, 1)
    neg_col = jnp.dot(out_f * neg_f, ones_col,
                      preferred_element_type=f32,
                      precision=jax.lax.Precision.HIGHEST)      # (tm, 1)

    # Lane-dense relayout of the per-row scalars: (tm, 1) -> (G, 128).
    pos_ld = pos_col.reshape(g_rows, 128) * inv_temperature
    neg_ld = neg_col.reshape(g_rows, 128) * inv_temperature

    # Flat row index of every (group, lane) element; masks the padded tail of
    # the last tile and fully clamped duplicate tiles (their rows are >= M).
    ridx = (jax.lax.broadcasted_iota(jnp.int32, (g_rows, 128), 0) * 128 +
            jax.lax.broadcasted_iota(jnp.int32, (g_rows, 128), 1))
    base = (c * tiles_per_core + t) * tile_rows
    valid = (base + ridx) < n_rows

    lw = jnp.where(valid, w_ref[0], 0.0)                        # (G, 128)
    # BCE-with-logits: target=1 -> softplus(-x), target=0 -> softplus(x).
    bce = jax.nn.softplus(-pos_ld) + jax.nn.softplus(neg_ld)
    # This second mask is load-bearing: it keeps NaN/Inf from garbage
    # tail/clamped-tile logits (which are 0-weighted) out of the accumulator.
    weighted = jnp.where(valid, bce * lw * 0.5, 0.0)            # (G, 128)

    # Lane-dense accumulation into VMEM-resident output blocks.
    num_ref[...] += weighted[None]
    den_ref[...] += lw[None]


def bce_loss_forward(lengths, output_embeddings, supervision_ids,
                     supervision_embeddings, supervision_weights,
                     temperature: float, *, max_tile_rows: int = 8192):
    """Dense-input BCELoss.forward. Returns a scalar float32 loss."""
    B, N, D = output_embeddings.shape
    assert supervision_embeddings.shape == (B, N, D)
    assert supervision_ids.shape == (B, N)
    assert supervision_weights.shape == (B, N)

    f32 = jnp.float32
    M = B * N

    # --- tiny [B, N]-sized prep kept in XLA (negligible HBM traffic) -------
    ids = supervision_ids.reshape(M).astype(jnp.int32)
    neg_ids = jnp.roll(ids, shift=1, axis=0)
    # TODO(synk): stochastic in-batch / global-uniform negative sampling is
    # replaced by this deterministic roll-by-1 sampler.
    length_mask = (jnp.arange(N, dtype=jnp.int32)[None, :] < lengths[:, None])
    lw = (supervision_weights.astype(f32) * length_mask.astype(f32)).reshape(M)
    lw = lw * (ids != neg_ids).astype(f32)

    # Embeddings in native dtype (no wrapper upcast, no roll copy).
    out_e = output_embeddings.reshape(M, D)
    pos_e = supervision_embeddings.reshape(M, D)

    # --- chip-aware knobs ---------------------------------------------------
    try:
        kind = jax.devices()[0].device_kind.lower()
    except Exception:
        kind = ""
    two_cores = ("v7" in kind) or ("tpu7" in kind)   # v7x: 2 TCs, 64 MiB VMEM
    n_cores = 2 if two_cores else 1
    vmem_limit = (40 if two_cores else 64) * 1024 * 1024

    itemsize = jnp.dtype(output_embeddings.dtype).itemsize
    # Per-row VMEM: 2 double-buffered native input streams + ~5 f32 temps.
    per_row = D * (4 * itemsize + 20) + 16
    budget = int(vmem_limit * 0.55)
    tm = (min(max_tile_rows, max(128, budget // per_row)) // 128) * 128
    tm = max(tm, 128)

    pad_rows = 0
    if M < 128:                          # tiny inputs: pad up to one tile
        tm = 128
        pad_rows = 128 - M
        out_e = jnp.pad(out_e, ((0, pad_rows), (0, 0)))
        pos_e = jnp.pad(pos_e, ((0, pad_rows), (0, 0)))
    elif M < tm:                         # keep tm <= M (no M x D padding)
        tm = (M // 128) * 128

    rows = M + pad_rows
    n_blocks = _cdiv(rows, tm)
    G = tm // 128
    tiles_per_core = _cdiv(n_blocks, n_cores)
    last_block = n_blocks - 1

    # Lane-dense, zero-padded weight stream ([M]-sized pad -> negligible).
    w_ld = jnp.pad(lw, (0, n_blocks * tm - M)).reshape(n_blocks, G, 128)

    # Per-core seed rows: embedding of the row preceding each core's first
    # row (core 0 wraps to the global last row, as in jnp.roll).
    if n_cores == 1:
        seed = pos_e[M - 1][None, :]
    else:
        seed = jnp.stack(
            [pos_e[M - 1], pos_e[min(tiles_per_core * tm, M) - 1]], axis=0)

    def emb_map(c, t):
        # Clamp so DMAs never start past the last block; fully out-of-range
        # (duplicate) tiles are masked to zero inside the kernel.
        return (jnp.minimum(c * tiles_per_core + t, last_block), 0)

    def w_map(c, t):
        return (jnp.minimum(c * tiles_per_core + t, last_block), 0, 0)

    emb_spec = pl.BlockSpec((tm, D), emb_map)
    w_spec = pl.BlockSpec((1, G, 128), w_map)
    seed_spec = pl.BlockSpec((n_cores, D), lambda c, t: (0, 0))
    out_spec = pl.BlockSpec((1, G, 128), lambda c, t: (c, 0, 0))

    cost = pl.CostEstimate(
        flops=6 * M * D + 32 * M,
        transcendentals=4 * M,                     # softplus ~ exp + log1p
        bytes_accessed=2 * M * D * itemsize + 4 * M
                       + 2 * n_cores * G * 128 * 4)

    if n_cores > 1:
        dims = (pltpu.CORE_PARALLEL, pltpu.ARBITRARY)
    else:
        dims = (pltpu.ARBITRARY, pltpu.ARBITRARY)

    num_part, den_part = pl.pallas_call(
        functools.partial(_bce_loss_kernel,
                          inv_temperature=1.0 / temperature,
                          n_rows=M,
                          tiles_per_core=tiles_per_core,
                          tile_rows=tm,
                          n_cores=n_cores),
        out_shape=(jax.ShapeDtypeStruct((n_cores, G, 128), f32),
                   jax.ShapeDtypeStruct((n_cores, G, 128), f32)),
        grid_spec=pltpu.PrefetchScalarGridSpec(
            num_scalar_prefetch=0,
            grid=(n_cores, tiles_per_core),
            in_specs=[seed_spec, emb_spec, emb_spec, w_spec],
            out_specs=[out_spec, out_spec],
            scratch_shapes=[pltpu.VMEM((1, D), f32)]),    # carry row
        compiler_params=pltpu.CompilerParams(
            dimension_semantics=dims,
            vmem_limit_bytes=vmem_limit),
        cost_estimate=cost,
    )(seed, out_e, pos_e, w_ld)

    num = jnp.sum(num_part)
    den = jnp.sum(den_part)
    return num / den


def _reference_loss(lengths, out_emb, sup_ids, sup_emb, sup_w, temperature):
    """Pure-JAX reference mirroring BCELoss.jagged_forward."""
    B, N, D = out_emb.shape
    mask = (jnp.arange(N)[None, :] < lengths[:, None]).astype(jnp.float32)
    w = (sup_w * mask).reshape(-1)
    out = out_emb.reshape(-1, D).astype(jnp.float32)
    pos = sup_emb.reshape(-1, D).astype(jnp.float32)
    ids = sup_ids.reshape(-1).astype(jnp.int32)
    nids = jnp.roll(ids, 1)
    neg = jnp.roll(pos, 1, axis=0)
    pos_l = jnp.sum(out * pos, -1) / temperature
    neg_l = jnp.sum(out * neg, -1) / temperature
    lw = w * (ids != nids).astype(jnp.float32)
    losses = (jax.nn.softplus(-pos_l) + jax.nn.softplus(neg_l)) * lw * 0.5
    return jnp.sum(losses) / jnp.sum(lw)


if __name__ == "__main__":
    key = jax.random.PRNGKey(0)
    B, N, D = 2, 8, 32
    temperature = 0.05

    k1, k2, k3, k4, k5 = jax.random.split(key, 5)
    output_embeddings = jax.random.normal(k1, (B, N, D), dtype=jnp.float32)
    supervision_embeddings = jax.random.normal(k2, (B, N, D), dtype=jnp.float32)
    supervision_ids = jax.random.randint(k3, (B, N), 1, 1000, dtype=jnp.int32)
    supervision_weights = jax.random.uniform(k4, (B, N), dtype=jnp.float32)
    lengths = jax.random.randint(k5, (B,), 1, N + 1, dtype=jnp.int32)

    loss = bce_loss_forward(lengths, output_embeddings, supervision_ids,
                            supervision_embeddings, supervision_weights,
                            temperature)
    loss = jax.block_until_ready(loss)

    ref = _reference_loss(lengths, output_embeddings, supervision_ids,
                          supervision_embeddings, supervision_weights,
                          temperature)
    assert jnp.allclose(loss, ref, rtol=1e-4, atol=1e-4), (loss, ref)
    print("KERNEL_OK")
</pallas_src>

<mosaic_0001>
module attributes {stable_mosaic.version = 11 : i64} {
  func.func @_bce_loss_kernel(%arg0: i32, %arg1: i32, %arg2: memref<1x32xf32, #tpu.memory_space<vmem>>, %arg3: memref<128x32xf32, #tpu.memory_space<vmem>>, %arg4: memref<128x32xf32, #tpu.memory_space<vmem>>, %arg5: memref<1x1x128xf32, #tpu.memory_space<vmem>>, %arg6: memref<1x1x128xf32, #tpu.memory_space<vmem>>, %arg7: memref<1x1x128xf32, #tpu.memory_space<vmem>>, %arg8: memref<1x32xf32, #tpu.memory_space<vmem>>) attributes {dimension_semantics = [#tpu.dimension_semantics<arbitrary>, #tpu.dimension_semantics<arbitrary>], iteration_bounds = array<i64: 1, 1>, scalar_prefetch = 0 : i64, scratch_operands = 1 : i64, tpu.core_type = #tpu.core_type<tc>, window_params = [{pipeline_mode = #tpu.pipeline_mode<synchronous>, transform_indices = @transform_0, window_bounds = array<i64: 1, 32>}, {transform_indices = @transform_1, window_bounds = array<i64: 128, 32>}, {transform_indices = @transform_2, window_bounds = array<i64: 128, 32>}, {transform_indices = @transform_3, window_bounds = array<i64: 1, 1, 128>}, {transform_indices = @transform_4, window_bounds = array<i64: 1, 1, 128>}, {transform_indices = @transform_5, window_bounds = array<i64: 1, 1, 128>}]} {
    %c0_i32 = arith.constant 0 : i32
    %0 = arith.cmpi eq, %arg1, %c0_i32 : i32
    %1 = arith.extui %0 : i1 to i32
    %c0_i32_0 = arith.constant 0 : i32
    %2 = arith.cmpi ne, %1, %c0_i32_0 : i32
    scf.if %2 {
      %cst_36 = arith.constant 0.000000e+00 : f32
      %81 = vector.broadcast %cst_36 : f32 to vector<1x1x128xf32>
      %c0_37 = arith.constant 0 : index
      %c0_38 = arith.constant 0 : index
      %c0_39 = arith.constant 0 : index
      %82 = vector.load %arg6[%c0_37, %c0_38, %c0_39] : memref<1x1x128xf32, #tpu.memory_space<vmem>>, vector<1x1x128xf32>
      tpu.vector_store %arg6[%c0_37, %c0_38, %c0_39], %81 {strides = array<i32>} : memref<1x1x128xf32, #tpu.memory_space<vmem>>, vector<1x1x128xf32>,
      %cst_40 = arith.constant 0.000000e+00 : f32
      %83 = vector.broadcast %cst_40 : f32 to vector<1x1x128xf32>
      %c0_41 = arith.constant 0 : index
      %c0_42 = arith.constant 0 : index
      %c0_43 = arith.constant 0 : index
      %84 = vector.load %arg7[%c0_41, %c0_42, %c0_43] : memref<1x1x128xf32, #tpu.memory_space<vmem>>, vector<1x1x128xf32>
      tpu.vector_store %arg7[%c0_41, %c0_42, %c0_43], %83 {strides = array<i32>} : memref<1x1x128xf32, #tpu.memory_space<vmem>>, vector<1x1x128xf32>,
      %c0_44 = arith.constant 0 : index
      %c0_45 = arith.constant 0 : index
      %85 = vector.load %arg2[%c0_44, %c0_45] : memref<1x32xf32, #tpu.memory_space<vmem>>, vector<1x32xf32>
      %c0_46 = arith.constant 0 : index
      %c0_47 = arith.constant 0 : index
      %86 = vector.load %arg8[%c0_46, %c0_47] : memref<1x32xf32, #tpu.memory_space<vmem>>, vector<1x32xf32>
      tpu.vector_store %arg8[%c0_46, %c0_47], %85 {strides = array<i32>} : memref<1x32xf32, #tpu.memory_space<vmem>>, vector<1x32xf32>,
    } else {
    }
    %c0 = arith.constant 0 : index
    %c0_1 = arith.constant 0 : index
    %3 = vector.load %arg3[%c0, %c0_1] : memref<128x32xf32, #tpu.memory_space<vmem>>, vector<128x32xf32>
    %c0_2 = arith.constant 0 : index
    %c0_3 = arith.constant 0 : index
    %4 = vector.load %arg4[%c0_2, %c0_3] : memref<128x32xf32, #tpu.memory_space<vmem>>, vector<128x32xf32>
    %c0_4 = arith.constant 0 : index
    %c0_5 = arith.constant 0 : index
    %5 = vector.load %arg8[%c0_4, %c0_5] : memref<1x32xf32, #tpu.memory_space<vmem>>, vector<1x32xf32>
    %6 = vector.extract_strided_slice %4 {offsets = [0, 0], sizes = [127, 32], strides = [1, 1]} : vector<128x32xf32> to vector<127x32xf32>
    %7 = tpu.concatenate %5, %6 in 0 : vector<1x32xf32>, vector<127x32xf32> -> vector<128x32xf32>
    %8 = vector.extract_strided_slice %4 {offsets = [127, 0], sizes = [1, 32], strides = [1, 1]} : vector<128x32xf32> to vector<1x32xf32>
    %c0_6 = arith.constant 0 : index
    %c0_7 = arith.constant 0 : index
    %9 = vector.load %arg8[%c0_6, %c0_7] : memref<1x32xf32, #tpu.memory_space<vmem>>, vector<1x32xf32>
    tpu.vector_store %arg8[%c0_6, %c0_7], %8 {strides = array<i32>} : memref<1x32xf32, #tpu.memory_space<vmem>>, vector<1x32xf32>,
    %cst = arith.constant 1.000000e+00 : f32
    %10 = vector.broadcast %cst : f32 to vector<32x1xf32>
    %11 = arith.mulf %3, %4 : vector<128x32xf32>
    %cst_8 = arith.constant dense<0.000000e+00> : vector<128x1xf32>
    %12 = tpu.matmul %11, %10, %cst_8 {dimension_numbers = #tpu.dot_dimension_numbers<[1], [0], [0], [1], [0, 0, 1, 1], [], []>, precision = #tpu.contract_precision<fp32>} : vector<128x32xf32>, vector<32x1xf32>, vector<128x1xf32> -> vector<128x1xf32>
    %13 = arith.mulf %3, %7 : vector<128x32xf32>
    %cst_9 = arith.constant dense<0.000000e+00> : vector<128x1xf32>
    %14 = tpu.matmul %13, %10, %cst_9 {dimension_numbers = #tpu.dot_dimension_numbers<[1], [0], [0], [1], [0, 0, 1, 1], [], []>, precision = #tpu.contract_precision<fp32>} : vector<128x32xf32>, vector<32x1xf32>, vector<128x1xf32> -> vector<128x1xf32>
    %15 = vector.shape_cast %12 : vector<128x1xf32> to vector<1x128xf32>
    %cst_10 = arith.constant 2.000000e+01 : f32
    %16 = vector.broadcast %cst_10 : f32 to vector<1x128xf32>
    %17 = arith.mulf %15, %16 : vector<1x128xf32>
    %18 = vector.shape_cast %14 : vector<128x1xf32> to vector<1x128xf32>
    %cst_11 = arith.constant 2.000000e+01 : f32
    %19 = vector.broadcast %cst_11 : f32 to vector<1x128xf32>
    %20 = arith.mulf %18, %19 : vector<1x128xf32>
    %21 = tpu.iota {dimensions = array<i32: 0>} : vector<1x128xi32>
    %c128_i32 = arith.constant 128 : i32
    %22 = vector.broadcast %c128_i32 : i32 to vector<1x128xi32>
    %23 = arith.muli %21, %22 : vector<1x128xi32>
    %24 = tpu.iota {dimensions = array<i32: 1>} : vector<1x128xi32>
    %25 = arith.addi %23, %24 : vector<1x128xi32>
    %c1_i32 = arith.constant 1 : i32
    %26 = arith.muli %arg0, %c1_i32 : i32
    %27 = arith.addi %26, %arg1 : i32
    %c128_i32_12 = arith.constant 128 : i32
    %28 = arith.muli %27, %c128_i32_12 : i32
    %29 = vector.broadcast %28 : i32 to vector<1x128xi32>
    %30 = arith.addi %29, %25 : vector<1x128xi32>
    %c16_i32 = arith.constant 16 : i32
    %31 = vector.broadcast %c16_i32 : i32 to vector<1x128xi32>
    %32 = arith.cmpi slt, %30, %31 : vector<1x128xi32>
    %c0_13 = arith.constant 0 : index
    %c0_14 = arith.constant 0 : index
    %c0_15 = arith.constant 0 : index
    %33 = vector.load %arg5[%c0_13, %c0_14, %c0_15] : memref<1x1x128xf32, #tpu.memory_space<vmem>>, vector<1x1x128xf32>
    %34 = vector.shape_cast %33 : vector<1x1x128xf32> to vector<1x128xf32>
    %cst_16 = arith.constant 0.000000e+00 : f32
    %35 = vector.broadcast %cst_16 : f32 to vector<1x128xf32>
    %36 = arith.select %32, %34, %35 : vector<1x128xi1>, vector<1x128xf32>
    %cst_17 = arith.constant 0.000000e+00 : f32
    %37 = vector.broadcast %cst_17 : f32 to vector<1x128xf32>
    %38 = arith.subf %37, %17 : vector<1x128xf32>
    %cst_18 = arith.constant 0.000000e+00 : f32
    %39 = vector.broadcast %cst_18 : f32 to vector<1x128xf32>
    %40 = arith.maximumf %38, %39 : vector<1x128xf32>
    %41 = vector.broadcast %cst_18 : f32 to vector<1x128xf32>
    %42 = arith.subf %38, %41 : vector<1x128xf32>
    %43 = arith.cmpf one, %42, %42 : vector<1x128xf32>
    %44 = vector.broadcast %cst_18 : f32 to vector<1x128xf32>
    %45 = arith.addf %38, %44 : vector<1x128xf32>
    %46 = math.absf %42 : vector<1x128xf32>
    %cst_19 = arith.constant 0.000000e+00 : f32
    %47 = vector.broadcast %cst_19 : f32 to vector<1x128xf32>
    %48 = arith.subf %47, %46 : vector<1x128xf32>
    %49 = math.exp %48 : vector<1x128xf32>
    %50 = math.log1p %49 : vector<1x128xf32>
    %51 = arith.addf %40, %50 : vector<1x128xf32>
    %52 = arith.select %43, %45, %51 : vector<1x128xi1>, vector<1x128xf32>
    %cst_20 = arith.constant 0.000000e+00 : f32
    %53 = vector.broadcast %cst_20 : f32 to vector<1x128xf32>
    %54 = arith.maximumf %20, %53 : vector<1x128xf32>
    %55 = vector.broadcast %cst_20 : f32 to vector<1x128xf32>
    %56 = arith.subf %20, %55 : vector<1x128xf32>
    %57 = arith.cmpf one, %56, %56 : vector<1x128xf32>
    %58 = vector.broadcast %cst_20 : f32 to vector<1x128xf32>
    %59 = arith.addf %20, %58 : vector<1x128xf32>
    %60 = math.absf %56 : vector<1x128xf32>
    %cst_21 = arith.constant 0.000000e+00 : f32
    %61 = vector.broadcast %cst_21 : f32 to vector<1x128xf32>
    %62 = arith.subf %61, %60 : vector<1x128xf32>
    %63 = math.exp %62 : vector<1x128xf32>
    %64 = math.log1p %63 : vector<1x128xf32>
    %65 = arith.addf %54, %64 : vector<1x128xf32>
    %66 = arith.select %57, %59, %65 : vector<1x128xi1>, vector<1x128xf32>
    %67 = arith.addf %52, %66 : vector<1x128xf32>
    %68 = arith.mulf %67, %36 : vector<1x128xf32>
    %cst_22 = arith.constant 5.000000e-01 : f32
    %69 = vector.broadcast %cst_22 : f32 to vector<1x128xf32>
    %70 = arith.mulf %68, %69 : vector<1x128xf32>
    %cst_23 = arith.constant 0.000000e+00 : f32
    %71 = vector.broadcast %cst_23 : f32 to vector<1x128xf32>
    %72 = arith.select %32, %70, %71 : vector<1x128xi1>, vector<1x128xf32>
    %c0_24 = arith.constant 0 : index
    %c0_25 = arith.constant 0 : index
    %c0_26 = arith.constant 0 : index
    %73 = vector.load %arg6[%c0_24, %c0_25, %c0_26] : memref<1x1x128xf32, #tpu.memory_space<vmem>>, vector<1x1x128xf32>
    %74 = vector.shape_cast %72 : vector<1x128xf32> to vector<1x1x128xf32>
    %75 = arith.addf %73, %74 : vector<1x1x128xf32>
    %c0_27 = arith.constant 0 : index
    %c0_28 = arith.constant 0 : index
    %c0_29 = arith.constant 0 : index
    %76 = vector.load %arg6[%c0_27, %c0_28, %c0_29] : memref<1x1x128xf32, #tpu.memory_space<vmem>>, vector<1x1x128xf32>
    tpu.vector_store %arg6[%c0_27, %c0_28, %c0_29], %75 {strides = array<i32>} : memref<1x1x128xf32, #tpu.memory_space<vmem>>, vector<1x1x128xf32>,
    %c0_30 = arith.constant 0 : index
    %c0_31 = arith.constant 0 : index
    %c0_32 = arith.constant 0 : index
    %77 = vector.load %arg7[%c0_30, %c0_31, %c0_32] : memref<1x1x128xf32, #tpu.memory_space<vmem>>, vector<1x1x128xf32>
    %78 = vector.shape_cast %36 : vector<1x128xf32> to vector<1x1x128xf32>
    %79 = arith.addf %77, %78 : vector<1x1x128xf32>
    %c0_33 = arith.constant 0 : index
    %c0_34 = arith.constant 0 : index
    %c0_35 = arith.constant 0 : index
    %80 = vector.load %arg7[%c0_33, %c0_34, %c0_35] : memref<1x1x128xf32, #tpu.memory_space<vmem>>, vector<1x1x128xf32>
    tpu.vector_store %arg7[%c0_33, %c0_34, %c0_35], %79 {strides = array<i32>} : memref<1x1x128xf32, #tpu.memory_space<vmem>>, vector<1x1x128xf32>,
    return
  }
  func.func @transform_0(%arg0: i32, %arg1: i32) -> (i32, i32) {
    %c0_i32 = arith.constant 0 : i32
    %c0_i32_0 = arith.constant 0 : i32
    %c0_i32_1 = arith.constant 0 : i32
    return %c0_i32, %c0_i32_0 : i32, i32
  }
  func.func @transform_1(%arg0: i32, %arg1: i32) -> (i32, i32) {
    %c1_i32 = arith.constant 1 : i32
    %0 = arith.muli %arg0, %c1_i32 : i32
    %1 = arith.addi %0, %arg1 : i32
    %c0_i32 = arith.constant 0 : i32
    %2 = arith.minsi %1, %c0_i32 : i32
    %c0_i32_0 = arith.constant 0 : i32
    %c0_i32_1 = arith.constant 0 : i32
    return %2, %c0_i32_0 : i32, i32
  }
  func.func @transform_2(%arg0: i32, %arg1: i32) -> (i32, i32) {
    %c1_i32 = arith.constant 1 : i32
    %0 = arith.muli %arg0, %c1_i32 : i32
    %1 = arith.addi %0, %arg1 : i32
    %c0_i32 = arith.constant 0 : i32
    %2 = arith.minsi %1, %c0_i32 : i32
    %c0_i32_0 = arith.constant 0 : i32
    %c0_i32_1 = arith.constant 0 : i32
    return %2, %c0_i32_0 : i32, i32
  }
  func.func @transform_3(%arg0: i32, %arg1: i32) -> (i32, i32, i32) {
    %c1_i32 = arith.constant 1 : i32
    %0 = arith.muli %arg0, %c1_i32 : i32
    %1 = arith.addi %0, %arg1 : i32
    %c0_i32 = arith.constant 0 : i32
    %2 = arith.minsi %1, %c0_i32 : i32
    %c0_i32_0 = arith.constant 0 : i32
    %c0_i32_1 = arith.constant 0 : i32
    %c0_i32_2 = arith.constant 0 : i32
    return %2, %c0_i32_0, %c0_i32_1 : i32, i32, i32
  }
  func.func @transform_4(%arg0: i32, %arg1: i32) -> (i32, i32, i32) {
    %c0_i32 = arith.constant 0 : i32
    %c0_i32_0 = arith.constant 0 : i32
    %c0_i32_1 = arith.constant 0 : i32
    return %arg0, %c0_i32, %c0_i32_0 : i32, i32, i32
  }
  func.func @transform_5(%arg0: i32, %arg1: i32) -> (i32, i32, i32) {
    %c0_i32 = arith.constant 0 : i32
    %c0_i32_0 = arith.constant 0 : i32
    %c0_i32_1 = arith.constant 0 : i32
    return %arg0, %c0_i32, %c0_i32_0 : i32, i32, i32
  }
}

</mosaic_0001>

<llo_original>
// kernel: tpu_custom_call.1
$region0: #{tpu_custom_call.1}
  #allocation0 [shape = 'u32[]', space=smem, size = 0x4, offset = 0x4, fixed_abs, tag = 'smem constant byte address 0x4 - core index']
  #allocation1 [shape = 'u32[144,128]{1,0:T(1,128)}', space=vmem, size = 0x12000, scoped, tag = 'internal scratch']
  #allocation2 [shape = 'f32[1,32]{1,0:T(1,128)}', space=vmem, size = 0x200, scoped, tag = 'scratch operand']
  %s0 = inlined_call_operand.hbm [shape: f32[1,32], index: 0, kind: input, shape index: {}]
  %s1 = inlined_call_operand.hbm [shape: f32[128,32], index: 1, kind: input, shape index: {}]
  %s2 = inlined_call_operand.hbm [shape: f32[128,32], index: 2, kind: input, shape index: {}]
  %s3 = inlined_call_operand.hbm [shape: f32[1,1,128], index: 3, kind: input, shape index: {}]
  %s4 = inlined_call_operand.hbm [shape: f32[1,1,128], index: 4, kind: output, shape index: {0}]
  %s5 = inlined_call_operand.hbm [shape: f32[1,1,128], index: 5, kind: output, shape index: {1}]
  %6 = xla_tuple %s4, %s5
  %s7 = sld [smem:[#allocation0]]
  $region54: #{tpu_custom_call.1} parent=0
    _
  %s9 = ssub.s32 1, %s7
  %s10 = scalar_select 0, %s9, %s7
  $region1: #{tpu_custom_call.1} parent=0
    #allocation3 [shape = 'u8[512]{0}', space=vmem, size = 0x400, scoped, tag = 'input window, operand 0, single buffered']
    #allocation4 [shape = 's32[1]{0}', space=sflag, size = 0x4, scoped, tag = 'scoped memory for tpu_custom_call.1']
    #allocation5 [shape = 's32[1]{0}', space=sflag, size = 0x4, scoped, tag = 'scoped memory for tpu_custom_call.1']
    #allocation6 [shape = 'u8[65536]{0}', space=vmem, size = 0x10000, scoped, tag = 'input window, operand 1, single buffered']
    #allocation7 [shape = 's32[1]{0}', space=sflag, size = 0x4, scoped, tag = 'scoped memory for tpu_custom_call.1']
    #allocation8 [shape = 'u8[65536]{0}', space=vmem, size = 0x10000, scoped, tag = 'input window, operand 2, single buffered']
    #allocation9 [shape = 'u8[512]{0}', space=vmem, size = 0x400, scoped, tag = 'input window, operand 3, single buffered']
    #allocation10 [shape = 's32[1]{0}', space=sflag, size = 0x4, scoped, tag = 'scoped memory for tpu_custom_call.1']
    #allocation11 [shape = 'u8[512]{0}', space=vmem, size = 0x400, scoped, tag = 'output window, operand 0, single buffered']
    #allocation12 [shape = 'u8[512]{0}', space=vmem, size = 0x400, scoped, tag = 'output window, operand 1, single buffered']
    #allocation13 [shape = 's32[1]{0}', space=sflag, size = 0x4, scoped, tag = 'scoped memory for tpu_custom_call.1']
    %11 = vsyncpa [#allocation4], 0
    %12 = vsyncpa [#allocation7], 0
    %13 = vsyncpa [#allocation10], 0
    %14 = vsyncpa [#allocation5], 0
    %15 = vsyncpa [#allocation13], 0
    // Predicated region
    $region2: #{tpu_custom_call.1} parent=1 // pred_check
      _
    $region3: #{tpu_custom_call.1} parent=1 // pred_check_branch
      %17 = sbr.rel (0) target = $region5
    $region4: #{tpu_custom_call.1} parent=1 // pred_region
      %s19 = ssub.s32 16, 16
      %20 = vsyncadd [#allocation4], %s19
      %s22 = sshll.u32 [#allocation3], 4
      %s23 = int_to_ptr.vmem [resolvable:$true] %s22
      %25 = dma.hbm_to_vmem [thread:$0]  %s0, 16, %s23, [#allocation4]
    $region5: #{tpu_custom_call.1} parent=1 // pred_fallthru
      _
    // Predicated region
    $region6: #{tpu_custom_call.1} parent=1 // pred_check
      _
    $region7: #{tpu_custom_call.1} parent=1 // pred_check_branch
      %27 = sbr.rel (0) target = $region9
    $region8: #{tpu_custom_call.1} parent=1 // pred_region
      %s28 = sadd.s32 0, 0
      %p29 = scmp.lt.s32.totalorder %s28, 0
      %s30 = scalar_select %p29, %s28, 0
      %s31 = smul.u32 16, %s30
      %s33 = ssub.s32 2048, 2048
      %34 = vsyncadd [#allocation7], %s33
      %s35 = smul.addr %s31, 128
      %s36 = scalar_lea.hbm %s1, %s35
      %s37 = sshll.u32 [#allocation6], 4
      %s38 = int_to_ptr.vmem [resolvable:$true] %s37
      %43 = dma.hbm_to_vmem [thread:$0]  %s36, 2048, %s38, [#allocation7], 128, 128, 8
    $region9: #{tpu_custom_call.1} parent=1 // pred_fallthru
      _
    // Predicated region
    $region10: #{tpu_custom_call.1} parent=1 // pred_check
      _
    $region11: #{tpu_custom_call.1} parent=1 // pred_check_branch
      %45 = sbr.rel (0) target = $region13
    $region12: #{tpu_custom_call.1} parent=1 // pred_region
      %s46 = sadd.s32 0, 0
      %p47 = scmp.lt.s32.totalorder %s46, 0
      %s48 = scalar_select %p47, %s46, 0
      %s49 = smul.u32 16, %s48
      %s51 = ssub.s32 2048, 2048
      %52 = vsyncadd [#allocation7], %s51
      %s53 = smul.addr %s49, 128
      %s54 = scalar_lea.hbm %s2, %s53
      %s55 = sshll.u32 [#allocation8], 4
      %s56 = int_to_ptr.vmem [resolvable:$true] %s55
      %61 = dma.hbm_to_vmem [thread:$0]  %s54, 2048, %s56, [#allocation7], 128, 128, 8
    $region13: #{tpu_custom_call.1} parent=1 // pred_fallthru
      _
    // Predicated region
    $region14: #{tpu_custom_call.1} parent=1 // pred_check
      _
    $region15: #{tpu_custom_call.1} parent=1 // pred_check_branch
      %63 = sbr.rel (0) target = $region17
    $region16: #{tpu_custom_call.1} parent=1 // pred_region
      %s64 = sadd.s32 0, 0
      %p65 = scmp.lt.s32.totalorder %s64, 0
      %s66 = scalar_select %p65, %s64, 0
      %s68 = ssub.s32 16, 16
      %69 = vsyncadd [#allocation10], %s68
      %s70 = smul.addr %s66, 16
      %s71 = scalar_lea.hbm %s3, %s70
      %s73 = sshll.u32 [#allocation9], 4
      %s74 = int_to_ptr.vmem [resolvable:$true] %s73
      %76 = dma.hbm_to_vmem [thread:$0]  %s71, 16, %s74, [#allocation10]
    $region17: #{tpu_custom_call.1} parent=1 // pred_fallthru
      _
    // Predicated region
    $region18: #{tpu_custom_call.1} parent=1 // pred_check
      _
    $region19: #{tpu_custom_call.1} parent=1 // pred_check_branch
      %78 = sbr.rel (0) target = $region21
    $region20: #{tpu_custom_call.1} parent=1 // pred_region
      %79 = dma.done [#allocation4], 16
    $region21: #{tpu_custom_call.1} parent=1 // pred_fallthru
      _
    // Predicated region
    $region22: #{tpu_custom_call.1} parent=1 // pred_check
      _
    $region23: #{tpu_custom_call.1} parent=1 // pred_check_branch
      %81 = sbr.rel (0) target = $region25
    $region24: #{tpu_custom_call.1} parent=1 // pred_region
      %82 = dma.done [#allocation7], 2048
    $region25: #{tpu_custom_call.1} parent=1 // pred_fallthru
      _
    // Predicated region
    $region26: #{tpu_custom_call.1} parent=1 // pred_check
      _
    $region27: #{tpu_custom_call.1} parent=1 // pred_check_branch
      %84 = sbr.rel (0) target = $region29
    $region28: #{tpu_custom_call.1} parent=1 // pred_region
      %85 = dma.done [#allocation7], 2048
    $region29: #{tpu_custom_call.1} parent=1 // pred_fallthru
      _
    // Predicated region
    $region30: #{tpu_custom_call.1} parent=1 // pred_check
      _
    $region31: #{tpu_custom_call.1} parent=1 // pred_check_branch
      %87 = sbr.rel (0) target = $region33
    $region32: #{tpu_custom_call.1} parent=1 // pred_region
      %88 = dma.done [#allocation10], 16
    $region33: #{tpu_custom_call.1} parent=1 // pred_fallthru
      _
    %s89 = sadd.s32 0, 0
    %p90 = scmp.lt.s32.totalorder %s89, 0
    %s91 = scalar_select %p90, %s89, 0
    %s92 = smul.u32 16, %s91
    %s93 = sadd.s32 0, 0
    %p94 = scmp.lt.s32.totalorder %s93, 0
    %s95 = scalar_select %p94, %s93, 0
    %s96 = smul.u32 16, %s95
    %s97 = sadd.s32 0, 0
    %p98 = scmp.lt.s32.totalorder %s97, 0
    %s99 = scalar_select %p98, %s97, 0
    %p100 = scmp.eq.s32.totalorder 0, 0
    // Predicated region
    $region34: #{tpu_custom_call.1} parent=1 // pred_check
      %p101 = pneg %p100
    $region35: #{tpu_custom_call.1} parent=1 // pred_check_branch
      %103 = sbr.rel (%p101) target = $region37
    $region36: #{tpu_custom_call.1} parent=1 // pred_region
      %104 = vst [vmem:[#allocation11] sm:$0x1] 0.0
      %105 = vst [vmem:[#allocation12] sm:$0x1] 0.0
      %v106 = vld [vmem:[#allocation3] sm:$0x1]
      %vm107 = vcmask 253952
      %108 = vst.msk [vmem:[#allocation2] sm:$0x1] %vm107, %v106
    $region37: #{tpu_custom_call.1} parent=1 // pred_fallthru
      _
    %v109 = vld [vmem:[#allocation6] sm:$0xff]
    %v110 = vld [vmem:[#allocation6 + $0x8] sm:$0xff]
    %v111 = vld [vmem:[#allocation6 + $0x10] sm:$0xff]
    %v112 = vld [vmem:[#allocation6 + $0x18] sm:$0xff]
    %v113 = vld [vmem:[#allocation6 + $0x20] sm:$0xff]
    %v114 = vld [vmem:[#allocation6 + $0x28] sm:$0xff]
    %v115 = vld [vmem:[#allocation6 + $0x30] sm:$0xff]
    %v116 = vld [vmem:[#allocation6 + $0x38] sm:$0xff]
    %v117 = vld [vmem:[#allocation6 + $0x40] sm:$0xff]
    %v118 = vld [vmem:[#allocation6 + $0x48] sm:$0xff]
    %v119 = vld [vmem:[#allocation6 + $0x50] sm:$0xff]
    %v120 = vld [vmem:[#allocation6 + $0x58] sm:$0xff]
    %v121 = vld [vmem:[#allocation6 + $0x60] sm:$0xff]
    %v122 = vld [vmem:[#allocation6 + $0x68] sm:$0xff]
    %v123 = vld [vmem:[#allocation6 + $0x70] sm:$0xff]
    %v124 = vld [vmem:[#allocation6 + $0x78] sm:$0xff]
    %v125 = vld [vmem:[#allocation8] sm:$0xff]
    %v126 = vld [vmem:[#allocation8 + $0x8] sm:$0xff]
    %v127 = vld [vmem:[#allocation8 + $0x10] sm:$0xff]
    %v128 = vld [vmem:[#allocation8 + $0x18] sm:$0xff]
    %v129 = vld [vmem:[#allocation8 + $0x20] sm:$0xff]
    %v130 = vld [vmem:[#allocation8 + $0x28] sm:$0xff]
    %v131 = vld [vmem:[#allocation8 + $0x30] sm:$0xff]
    %v132 = vld [vmem:[#allocation8 + $0x38] sm:$0xff]
    %v133 = vld [vmem:[#allocation8 + $0x40] sm:$0xff]
    %v134 = vld [vmem:[#allocation8 + $0x48] sm:$0xff]
    %v135 = vld [vmem:[#allocation8 + $0x50] sm:$0xff]
    %v136 = vld [vmem:[#allocation8 + $0x58] sm:$0xff]
    %v137 = vld [vmem:[#allocation8 + $0x60] sm:$0xff]
    %v138 = vld [vmem:[#allocation8 + $0x68] sm:$0xff]
    %v139 = vld [vmem:[#allocation8 + $0x70] sm:$0xff]
    %v140 = vld [vmem:[#allocation8 + $0x78] sm:$0xff]
    %v141 = vld [vmem:[#allocation2] sm:$0x1]
    %vm158 = vcmask 1040384
    %v159 = vrot.slane %v125, 7
    %v160 = vrot.slane %v126, 7
    %v161 = vsel %vm158, %v159, %v160
    %v162 = vrot.slane %v127, 7
    %v163 = vsel %vm158, %v160, %v162
    %v164 = vrot.slane %v128, 7
    %v165 = vsel %vm158, %v162, %v164
    %v166 = vrot.slane %v129, 7
    %v167 = vsel %vm158, %v164, %v166
    %v168 = vrot.slane %v130, 7
    %v169 = vsel %vm158, %v166, %v168
    %v170 = vrot.slane %v131, 7
    %v171 = vsel %vm158, %v168, %v170
    %v172 = vrot.slane %v132, 7
    %v173 = vsel %vm158, %v170, %v172
    %v174 = vrot.slane %v133, 7
    %v175 = vsel %vm158, %v172, %v174
    %v176 = vrot.slane %v134, 7
    %v177 = vsel %vm158, %v174, %v176
    %v178 = vrot.slane %v135, 7
    %v179 = vsel %vm158, %v176, %v178
    %v180 = vrot.slane %v136, 7
    %v181 = vsel %vm158, %v178, %v180
    %v182 = vrot.slane %v137, 7
    %v183 = vsel %vm158, %v180, %v182
    %v184 = vrot.slane %v138, 7
    %v185 = vsel %vm158, %v182, %v184
    %v186 = vrot.slane %v139, 7
    %v187 = vsel %vm158, %v184, %v186
    %v188 = vrot.slane %v140, 7
    %v189 = vsel %vm158, %v186, %v188
    %v206 = vsel %vm158, %v141, %v159
    %vm207 = vcmask 261127
    %208 = vst.msk [vmem:[#allocation2 - $0x7] sm:$0x80] %vm207, %v140
    %v209 = vmul.f32 %v109, %v125
    %v210 = vmul.f32 %v110, %v126
    %v211 = vmul.f32 %v111, %v127
    %v212 = vmul.f32 %v112, %v128
    %v213 = vmul.f32 %v113, %v129
    %v214 = vmul.f32 %v114, %v130
    %v215 = vmul.f32 %v115, %v131
    %v216 = vmul.f32 %v116, %v132
    %v217 = vmul.f32 %v117, %v133
    %v218 = vmul.f32 %v118, %v134
    %v219 = vmul.f32 %v119, %v135
    %v220 = vmul.f32 %v120, %v136
    %v221 = vmul.f32 %v121, %v137
    %v222 = vmul.f32 %v122, %v138
    %v223 = vmul.f32 %v123, %v139
    %v224 = vmul.f32 %v124, %v140
    %vm225 = vcmask 261120
    %v227 = vsel %vm225, %v209, 0
    %v230 = vsel %vm225, %v210, 0
    %v233 = vsel %vm225, %v211, 0
    %v236 = vsel %vm225, %v212, 0
    %v239 = vsel %vm225, %v213, 0
    %v242 = vsel %vm225, %v214, 0
    %v245 = vsel %vm225, %v215, 0
    %v248 = vsel %vm225, %v216, 0
    %v251 = vsel %vm225, %v217, 0
    %v254 = vsel %vm225, %v218, 0
    %v257 = vsel %vm225, %v219, 0
    %v260 = vsel %vm225, %v220, 0
    %v263 = vsel %vm225, %v221, 0
    %v266 = vsel %vm225, %v222, 0
    %v269 = vsel %vm225, %v223, 0
    %v272 = vsel %vm225, %v224, 0
    %274 = vmatprep.subr.mxu0 0.0
    %275 = vmatpush1.msra.mxu0 1.0
    %276 = vmatprep.subr.mxu0 0.0
    %277 = vmatpush1.msra.mxu0 1.0
    %278 = vmatprep.subr.mxu0 0.0
    %279 = vmatpush1.msra.mxu0 1.0
    %280 = vmatprep.subr.mxu0 0.0
    %281 = vmatpush1.msra.mxu0 1.0
    %282 = vmatprep.subr.mxu0 0.0
    %283 = vmatpush1.msra.mxu0 0.0
    %284 = vmatprep.subr.mxu0 0.0
    %285 = vmatpush1.msra.mxu0 0.0
    %286 = vmatprep.subr.mxu0 0.0
    %287 = vmatpush1.msra.mxu0 0.0
    %288 = vmatprep.subr.mxu0 0.0
    %289 = vmatpush1.msra.mxu0 0.0
    %290 = vmatprep.subr.mxu0 0.0
    %291 = vmatpush1.msra.mxu0 0.0
    %292 = vmatprep.subr.mxu0 0.0
    %293 = vmatpush1.msra.mxu0 0.0
    %294 = vmatprep.subr.mxu0 0.0
    %295 = vmatpush1.msra.mxu0 0.0
    %296 = vmatprep.subr.mxu0 0.0
    %297 = vmatpush1.msra.mxu0 0.0
    %298 = vmatprep.subr.mxu0 0.0
    %299 = vmatpush1.msra.mxu0 0.0
    %300 = vmatprep.subr.mxu0 0.0
    %301 = vmatpush1.msra.mxu0 0.0
    %302 = vmatprep.subr.mxu0 0.0
    %303 = vmatpush1.msra.mxu0 0.0
    %304 = vmatprep.subr.mxu0 0.0
    %305 = vmatpush1.msra.mxu0 0.0
    %306 = vmatprep.subr.mxu0 0.0
    %307 = vmatpush1.msra.mxu0 0.0
    %308 = vmatprep.subr.mxu0 0.0
    %309 = vmatpush1.msra.mxu0 0.0
    %310 = vmatprep.subr.mxu0 0.0
    %311 = vmatpush1.msra.mxu0 0.0
    %312 = vmatprep.subr.mxu0 0.0
    %313 = vmatpush1.msra.mxu0 0.0
    %314 = vmatprep.subr.mxu0 0.0
    %315 = vmatpush1.msra.mxu0 0.0
    %316 = vmatprep.subr.mxu0 0.0
    %317 = vmatpush1.msra.mxu0 0.0
    %318 = vmatprep.subr.mxu0 0.0
    %319 = vmatpush1.msra.mxu0 0.0
    %320 = vmatprep.subr.mxu0 0.0
    %321 = vmatpush1.msra.mxu0 0.0
    %322 = vmatprep.subr.mxu0 0.0
    %323 = vmatpush1.msra.mxu0 0.0
    %324 = vmatprep.subr.mxu0 0.0
    %325 = vmatpush1.msra.mxu0 0.0
    %326 = vmatprep.subr.mxu0 0.0
    %327 = vmatpush1.msra.mxu0 0.0
    %328 = vmatprep.subr.mxu0 0.0
    %329 = vmatpush1.msra.mxu0 0.0
    %330 = vmatprep.subr.mxu0 0.0
    %331 = vmatpush1.msra.mxu0 0.0
    %332 = vmatprep.subr.mxu0 0.0
    %333 = vmatpush1.msra.mxu0 0.0
    %334 = vmatprep.subr.mxu0 0.0
    %335 = vmatpush1.msra.mxu0 0.0
    %336 = vmatprep.subr.mxu0 0.0
    %337 = vmatpush1.msra.mxu0 0.0
    %338 = vmatprep.mubr.f32.mxu0 0.0
    %v339 = vand.u32 %v227, 4294901760
    %v340 = vsub.f32 %v227, %v339
    %v341 = vand.u32 %v340, 4294901760
    %v342 = vsub.f32 %v340, %v341
    %v343 = vand.u32 %v342, 4294901760
    %344 = vmatmul.mubr.f32.gmra.mrb[0].mxu0 %v343
    %v345 = vpop.f32.mrb[0].mxu0
    %v346 = vadd.f32 0.0, %v345
    %v347 = vpop.f32.mrb[0].mxu0
    %348 = vmatprep.mubr.f32.mxu0 0.0
    %v349 = vand.u32 %v230, 4294901760
    %v350 = vsub.f32 %v230, %v349
    %v351 = vand.u32 %v350, 4294901760
    %v352 = vsub.f32 %v350, %v351
    %v353 = vand.u32 %v352, 4294901760
    %354 = vmatmul.mubr.f32.gmra.mrb[0].mxu0 %v353
    %v355 = vpop.f32.mrb[0].mxu0
    %v356 = vadd.f32 0.0, %v355
    %v357 = vpop.f32.mrb[0].mxu0
    %358 = vmatprep.mubr.f32.mxu0 0.0
    %v359 = vand.u32 %v233, 4294901760
    %v360 = vsub.f32 %v233, %v359
    %v361 = vand.u32 %v360, 4294901760
    %v362 = vsub.f32 %v360, %v361
    %v363 = vand.u32 %v362, 4294901760
    %364 = vmatmul.mubr.f32.gmra.mrb[0].mxu0 %v363
    %v365 = vpop.f32.mrb[0].mxu0
    %v366 = vadd.f32 0.0, %v365
    %v367 = vpop.f32.mrb[0].mxu0
    %368 = vmatprep.mubr.f32.mxu0 0.0
    %v369 = vand.u32 %v236, 4294901760
    %v370 = vsub.f32 %v236, %v369
    %v371 = vand.u32 %v370, 4294901760
    %v372 = vsub.f32 %v370, %v371
    %v373 = vand.u32 %v372, 4294901760
    %374 = vmatmul.mubr.f32.gmra.mrb[0].mxu0 %v373
    %v375 = vpop.f32.mrb[0].mxu0
    %v376 = vadd.f32 0.0, %v375
    %v377 = vpop.f32.mrb[0].mxu0
    %378 = vmatprep.mubr.f32.mxu0 0.0
    %v379 = vand.u32 %v239, 4294901760
    %v380 = vsub.f32 %v239, %v379
    %v381 = vand.u32 %v380, 4294901760
    %v382 = vsub.f32 %v380, %v381
    %v383 = vand.u32 %v382, 4294901760
    %384 = vmatmul.mubr.f32.gmra.mrb[0].mxu0 %v383
    %v385 = vpop.f32.mrb[0].mxu0
    %v386 = vadd.f32 0.0, %v385
    %v387 = vpop.f32.mrb[0].mxu0
    %388 = vmatprep.mubr.f32.mxu0 0.0
    %v389 = vand.u32 %v242, 4294901760
    %v390 = vsub.f32 %v242, %v389
    %v391 = vand.u32 %v390, 4294901760
    %v392 = vsub.f32 %v390, %v391
    %v393 = vand.u32 %v392, 4294901760
    %394 = vmatmul.mubr.f32.gmra.mrb[0].mxu0 %v393
    %v395 = vpop.f32.mrb[0].mxu0
    %v396 = vadd.f32 0.0, %v395
    %v397 = vpop.f32.mrb[0].mxu0
    %398 = vmatprep.mubr.f32.mxu0 0.0
    %v399 = vand.u32 %v245, 4294901760
    %v400 = vsub.f32 %v245, %v399
    %v401 = vand.u32 %v400, 4294901760
    %v402 = vsub.f32 %v400, %v401
    %v403 = vand.u32 %v402, 4294901760
    %404 = vmatmul.mubr.f32.gmra.mrb[0].mxu0 %v403
    %v405 = vpop.f32.mrb[0].mxu0
    %v406 = vadd.f32 0.0, %v405
    %v407 = vpop.f32.mrb[0].mxu0
    %408 = vmatprep.mubr.f32.mxu0 0.0
    %v409 = vand.u32 %v248, 4294901760
    %v410 = vsub.f32 %v248, %v409
    %v411 = vand.u32 %v410, 4294901760
    %v412 = vsub.f32 %v410, %v411
    %v413 = vand.u32 %v412, 4294901760
    %414 = vmatmul.mubr.f32.gmra.mrb[0].mxu0 %v413
    %v415 = vpop.f32.mrb[0].mxu0
    %v416 = vadd.f32 0.0, %v415
    %v417 = vpop.f32.mrb[0].mxu0
    %418 = vmatprep.mubr.f32.mxu0 0.0
    %v419 = vand.u32 %v251, 4294901760
    %v420 = vsub.f32 %v251, %v419
    %v421 = vand.u32 %v420, 4294901760
    %v422 = vsub.f32 %v420, %v421
    %v423 = vand.u32 %v422, 4294901760
    %424 = vmatmul.mubr.f32.gmra.mrb[0].mxu0 %v423
    %v425 = vpop.f32.mrb[0].mxu0
    %v426 = vadd.f32 0.0, %v425
    %v427 = vpop.f32.mrb[0].mxu0
    %428 = vmatprep.mubr.f32.mxu0 0.0
    %v429 = vand.u32 %v254, 4294901760
    %v430 = vsub.f32 %v254, %v429
    %v431 = vand.u32 %v430, 4294901760
    %v432 = vsub.f32 %v430, %v431
    %v433 = vand.u32 %v432, 4294901760
    %434 = vmatmul.mubr.f32.gmra.mrb[0].mxu0 %v433
    %v435 = vpop.f32.mrb[0].mxu0
    %v436 = vadd.f32 0.0, %v435
    %v437 = vpop.f32.mrb[0].mxu0
    %438 = vmatprep.mubr.f32.mxu0 0.0
    %v439 = vand.u32 %v257, 4294901760
    %v440 = vsub.f32 %v257, %v439
    %v441 = vand.u32 %v440, 4294901760
    %v442 = vsub.f32 %v440, %v441
    %v443 = vand.u32 %v442, 4294901760
    %444 = vmatmul.mubr.f32.gmra.mrb[0].mxu0 %v443
    %v445 = vpop.f32.mrb[0].mxu0
    %v446 = vadd.f32 0.0, %v445
    %v447 = vpop.f32.mrb[0].mxu0
    %448 = vmatprep.mubr.f32.mxu0 0.0
    %v449 = vand.u32 %v260, 4294901760
    %v450 = vsub.f32 %v260, %v449
    %v451 = vand.u32 %v450, 4294901760
    %v452 = vsub.f32 %v450, %v451
    %v453 = vand.u32 %v452, 4294901760
    %454 = vmatmul.mubr.f32.gmra.mrb[0].mxu0 %v453
    %v455 = vpop.f32.mrb[0].mxu0
    %v456 = vadd.f32 0.0, %v455
    %v457 = vpop.f32.mrb[0].mxu0
    %458 = vmatprep.mubr.f32.mxu0 0.0
    %v459 = vand.u32 %v263, 4294901760
    %v460 = vsub.f32 %v263, %v459
    %v461 = vand.u32 %v460, 4294901760
    %v462 = vsub.f32 %v460, %v461
    %v463 = vand.u32 %v462, 4294901760
    %464 = vmatmul.mubr.f32.gmra.mrb[0].mxu0 %v463
    %v465 = vpop.f32.mrb[0].mxu0
    %v466 = vadd.f32 0.0, %v465
    %v467 = vpop.f32.mrb[0].mxu0
    %468 = vmatprep.mubr.f32.mxu0 0.0
    %v469 = vand.u32 %v266, 4294901760
    %v470 = vsub.f32 %v266, %v469
    %v471 = vand.u32 %v470, 4294901760
    %v472 = vsub.f32 %v470, %v471
    %v473 = vand.u32 %v472, 4294901760
    %474 = vmatmul.mubr.f32.gmra.mrb[0].mxu0 %v473
    %v475 = vpop.f32.mrb[0].mxu0
    %v476 = vadd.f32 0.0, %v475
    %v477 = vpop.f32.mrb[0].mxu0
    %478 = vmatprep.mubr.f32.mxu0 0.0
    %v479 = vand.u32 %v269, 4294901760
    %v480 = vsub.f32 %v269, %v479
    %v481 = vand.u32 %v480, 4294901760
    %v482 = vsub.f32 %v480, %v481
    %v483 = vand.u32 %v482, 4294901760
    %484 = vmatmul.mubr.f32.gmra.mrb[0].mxu0 %v483
    %v485 = vpop.f32.mrb[0].mxu0
    %v486 = vadd.f32 0.0, %v485
    %v487 = vpop.f32.mrb[0].mxu0
    %488 = vmatprep.mubr.f32.mxu0 0.0
    %v489 = vand.u32 %v272, 4294901760
    %v490 = vsub.f32 %v272, %v489
    %v491 = vand.u32 %v490, 4294901760
    %v492 = vsub.f32 %v490, %v491
    %v493 = vand.u32 %v492, 4294901760
    %494 = vmatmul.mubr.f32.gmra.mrb[0].mxu0 %v493
    %v495 = vpop.f32.mrb[0].mxu0
    %v496 = vadd.f32 0.0, %v495
    %v497 = vpop.f32.mrb[0].mxu0
    %498 = vdwg.mxu0
    %499 = vmatprep.subr.mxu0 0.0
    %500 = vmatpush1.msra.mxu0 0.0
    %501 = vmatprep.subr.mxu0 0.0
    %502 = vmatpush1.msra.mxu0 0.0
    %503 = vmatprep.subr.mxu0 0.0
    %504 = vmatpush1.msra.mxu0 0.0
    %505 = vmatprep.subr.mxu0 0.0
    %506 = vmatpush1.msra.mxu0 0.0
    %507 = vmatprep.subr.mxu0 0.0
    %508 = vmatpush1.msra.mxu0 0.0
    %509 = vmatprep.subr.mxu0 0.0
    %510 = vmatpush1.msra.mxu0 0.0
    %511 = vmatprep.subr.mxu0 0.0
    %512 = vmatpush1.msra.mxu0 0.0
    %513 = vmatprep.subr.mxu0 0.0
    %514 = vmatpush1.msra.mxu0 0.0
    %515 = vmatprep.subr.mxu0 0.0
    %516 = vmatpush1.msra.mxu0 0.0
    %517 = vmatprep.subr.mxu0 0.0
    %518 = vmatpush1.msra.mxu0 0.0
    %519 = vmatprep.subr.mxu0 0.0
    %520 = vmatpush1.msra.mxu0 0.0
    %521 = vmatprep.subr.mxu0 0.0
    %522 = vmatpush1.msra.mxu0 0.0
    %523 = vmatprep.subr.mxu0 0.0
    %524 = vmatpush1.msra.mxu0 0.0
    %525 = vmatprep.subr.mxu0 0.0
    %526 = vmatpush1.msra.mxu0 0.0
    %527 = vmatprep.subr.mxu0 0.0
    %528 = vmatpush1.msra.mxu0 0.0
    %529 = vmatprep.subr.mxu0 0.0
    %530 = vmatpush1.msra.mxu0 0.0
    %531 = vmatprep.subr.mxu0 0.0
    %532 = vmatpush1.msra.mxu0 0.0
    %533 = vmatprep.subr.mxu0 0.0
    %534 = vmatpush1.msra.mxu0 0.0
    %535 = vmatprep.subr.mxu0 0.0
    %536 = vmatpush1.msra.mxu0 0.0
    %537 = vmatprep.subr.mxu0 0.0
    %538 = vmatpush1.msra.mxu0 0.0
    %539 = vmatprep.subr.mxu0 0.0
    %540 = vmatpush1.msra.mxu0 0.0
    %541 = vmatprep.subr.mxu0 0.0
    %542 = vmatpush1.msra.mxu0 0.0
    %543 = vmatprep.subr.mxu0 0.0
    %544 = vmatpush1.msra.mxu0 0.0
    %545 = vmatprep.subr.mxu0 0.0
    %546 = vmatpush1.msra.mxu0 0.0
    %547 = vmatprep.subr.mxu0 0.0
    %548 = vmatpush1.msra.mxu0 0.0
    %549 = vmatprep.subr.mxu0 0.0
    %550 = vmatpush1.msra.mxu0 0.0
    %551 = vmatprep.subr.mxu0 0.0
    %552 = vmatpush1.msra.mxu0 0.0
    %553 = vmatprep.subr.mxu0 0.0
    %554 = vmatpush1.msra.mxu0 0.0
    %555 = vmatprep.subr.mxu0 0.0
    %556 = vmatpush1.msra.mxu0 0.0
    %557 = vmatprep.subr.mxu0 0.0
    %558 = vmatpush1.msra.mxu0 0.0
    %559 = vmatprep.subr.mxu0 0.0
    %560 = vmatpush1.msra.mxu0 0.0
    %561 = vmatprep.subr.mxu0 0.0
    %562 = vmatpush1.msra.mxu0 0.0
    %563 = vmatprep.mubr.f32.mxu0 0.0
    %v564 = vand.u32 %v227, 4294901760
    %565 = vmatmul.mubr.f32.gmra.mrb[0].mxu0 %v564
    %v566 = vpop.f32.mrb[0].mxu0
    %v567 = vadd.f32 %v346, %v566
    %v568 = vpop.f32.mrb[0].mxu0
    %569 = vmatprep.mubr.f32.mxu0 0.0
    %v570 = vand.u32 %v230, 4294901760
    %571 = vmatmul.mubr.f32.gmra.mrb[0].mxu0 %v570
    %v572 = vpop.f32.mrb[0].mxu0
    %v573 = vadd.f32 %v356, %v572
    %v574 = vpop.f32.mrb[0].mxu0
    %575 = vmatprep.mubr.f32.mxu0 0.0
    %v576 = vand.u32 %v233, 4294901760
    %577 = vmatmul.mubr.f32.gmra.mrb[0].mxu0 %v576
    %v578 = vpop.f32.mrb[0].mxu0
    %v579 = vadd.f32 %v366, %v578
    %v580 = vpop.f32.mrb[0].mxu0
    %581 = vmatprep.mubr.f32.mxu0 0.0
    %v582 = vand.u32 %v236, 4294901760
    %583 = vmatmul.mubr.f32.gmra.mrb[0].mxu0 %v582
    %v584 = vpop.f32.mrb[0].mxu0
    %v585 = vadd.f32 %v376, %v584
    %v586 = vpop.f32.mrb[0].mxu0
    %587 = vmatprep.mubr.f32.mxu0 0.0
    %v588 = vand.u32 %v239, 4294901760
    %589 = vmatmul.mubr.f32.gmra.mrb[0].mxu0 %v588
    %v590 = vpop.f32.mrb[0].mxu0
    %v591 = vadd.f32 %v386, %v590
    %v592 = vpop.f32.mrb[0].mxu0
    %593 = vmatprep.mubr.f32.mxu0 0.0
    %v594 = vand.u32 %v242, 4294901760
    %595 = vmatmul.mubr.f32.gmra.mrb[0].mxu0 %v594
    %v596 = vpop.f32.mrb[0].mxu0
    %v597 = vadd.f32 %v396, %v596
    %v598 = vpop.f32.mrb[0].mxu0
    %599 = vmatprep.mubr.f32.mxu0 0.0
    %v600 = vand.u32 %v245, 4294901760
    %601 = vmatmul.mubr.f32.gmra.mrb[0].mxu0 %v600
    %v602 = vpop.f32.mrb[0].mxu0
    %v603 = vadd.f32 %v406, %v602
    %v604 = vpop.f32.mrb[0].mxu0
    %605 = vmatprep.mubr.f32.mxu0 0.0
    %v606 = vand.u32 %v248, 4294901760
    %607 = vmatmul.mubr.f32.gmra.mrb[0].mxu0 %v606
    %v608 = vpop.f32.mrb[0].mxu0
    %v609 = vadd.f32 %v416, %v608
    %v610 = vpop.f32.mrb[0].mxu0
    %611 = vmatprep.mubr.f32.mxu0 0.0
    %v612 = vand.u32 %v251, 4294901760
    %613 = vmatmul.mubr.f32.gmra.mrb[0].mxu0 %v612
    %v614 = vpop.f32.mrb[0].mxu0
    %v615 = vadd.f32 %v426, %v614
    %v616 = vpop.f32.mrb[0].mxu0
    %617 = vmatprep.mubr.f32.mxu0 0.0
    %v618 = vand.u32 %v254, 4294901760
    %619 = vmatmul.mubr.f32.gmra.mrb[0].mxu0 %v618
    %v620 = vpop.f32.mrb[0].mxu0
    %v621 = vadd.f32 %v436, %v620
    %v622 = vpop.f32.mrb[0].mxu0
    %623 = vmatprep.mubr.f32.mxu0 0.0
    %v624 = vand.u32 %v257, 4294901760
    %625 = vmatmul.mubr.f32.gmra.mrb[0].mxu0 %v624
    %v626 = vpop.f32.mrb[0].mxu0
    %v627 = vadd.f32 %v446, %v626
    %v628 = vpop.f32.mrb[0].mxu0
    %629 = vmatprep.mubr.f32.mxu0 0.0
    %v630 = vand.u32 %v260, 4294901760
    %631 = vmatmul.mubr.f32.gmra.mrb[0].mxu0 %v630
    %v632 = vpop.f32.mrb[0].mxu0
    %v633 = vadd.f32 %v456, %v632
    %v634 = vpop.f32.mrb[0].mxu0
    %635 = vmatprep.mubr.f32.mxu0 0.0
    %v636 = vand.u32 %v263, 4294901760
    %637 = vmatmul.mubr.f32.gmra.mrb[0].mxu0 %v636
    %v638 = vpop.f32.mrb[0].mxu0
    %v639 = vadd.f32 %v466, %v638
    %v640 = vpop.f32.mrb[0].mxu0
    %641 = vmatprep.mubr.f32.mxu0 0.0
    %v642 = vand.u32 %v266, 4294901760
    %643 = vmatmul.mubr.f32.gmra.mrb[0].mxu0 %v642
    %v644 = vpop.f32.mrb[0].mxu0
    %v645 = vadd.f32 %v476, %v644
    %v646 = vpop.f32.mrb[0].mxu0
    %647 = vmatprep.mubr.f32.mxu0 0.0
    %v648 = vand.u32 %v269, 4294901760
    %649 = vmatmul.mubr.f32.gmra.mrb[0].mxu0 %v648
    %v650 = vpop.f32.mrb[0].mxu0
    %v651 = vadd.f32 %v486, %v650
    %v652 = vpop.f32.mrb[0].mxu0
    %653 = vmatprep.mubr.f32.mxu0 0.0
    %v654 = vand.u32 %v272, 4294901760
    %655 = vmatmul.mubr.f32.gmra.mrb[0].mxu0 %v654
    %v656 = vpop.f32.mrb[0].mxu0
    %v657 = vadd.f32 %v496, %v656
    %v658 = vpop.f32.mrb[0].mxu0
    %659 = vdwg.mxu0
    %660 = vmatprep.subr.mxu0 0.0
    %661 = vmatpush1.msra.mxu0 0.0
    %662 = vmatprep.subr.mxu0 0.0
    %663 = vmatpush1.msra.mxu0 0.0
    %664 = vmatprep.subr.mxu0 0.0
    %665 = vmatpush1.msra.mxu0 0.0
    %666 = vmatprep.subr.mxu0 0.0
    %667 = vmatpush1.msra.mxu0 0.0
    %668 = vmatprep.subr.mxu0 0.0
    %669 = vmatpush1.msra.mxu0 0.0
    %670 = vmatprep.subr.mxu0 0.0
    %671 = vmatpush1.msra.mxu0 0.0
    %672 = vmatprep.subr.mxu0 0.0
    %673 = vmatpush1.msra.mxu0 0.0
    %674 = vmatprep.subr.mxu0 0.0
    %675 = vmatpush1.msra.mxu0 0.0
    %676 = vmatprep.subr.mxu0 0.0
    %677 = vmatpush1.msra.mxu0 0.0
    %678 = vmatprep.subr.mxu0 0.0
    %679 = vmatpush1.msra.mxu0 0.0
    %680 = vmatprep.subr.mxu0 0.0
    %681 = vmatpush1.msra.mxu0 0.0
    %682 = vmatprep.subr.mxu0 0.0
    %683 = vmatpush1.msra.mxu0 0.0
    %684 = vmatprep.subr.mxu0 0.0
    %685 = vmatpush1.msra.mxu0 0.0
    %686 = vmatprep.subr.mxu0 0.0
    %687 = vmatpush1.msra.mxu0 0.0
    %688 = vmatprep.subr.mxu0 0.0
    %689 = vmatpush1.msra.mxu0 0.0
    %690 = vmatprep.subr.mxu0 0.0
    %691 = vmatpush1.msra.mxu0 0.0
    %692 = vmatprep.subr.mxu0 0.0
    %693 = vmatpush1.msra.mxu0 0.0
    %694 = vmatprep.subr.mxu0 0.0
    %695 = vmatpush1.msra.mxu0 0.0
    %696 = vmatprep.subr.mxu0 0.0
    %697 = vmatpush1.msra.mxu0 0.0
    %698 = vmatprep.subr.mxu0 0.0
    %699 = vmatpush1.msra.mxu0 0.0
    %700 = vmatprep.subr.mxu0 0.0
    %701 = vmatpush1.msra.mxu0 0.0
    %702 = vmatprep.subr.mxu0 0.0
    %703 = vmatpush1.msra.mxu0 0.0
    %704 = vmatprep.subr.mxu0 0.0
    %705 = vmatpush1.msra.mxu0 0.0
    %706 = vmatprep.subr.mxu0 0.0
    %707 = vmatpush1.msra.mxu0 0.0
    %708 = vmatprep.subr.mxu0 0.0
    %709 = vmatpush1.msra.mxu0 0.0
    %710 = vmatprep.subr.mxu0 0.0
    %711 = vmatpush1.msra.mxu0 0.0
    %712 = vmatprep.subr.mxu0 0.0
    %713 = vmatpush1.msra.mxu0 0.0
    %714 = vmatprep.subr.mxu0 0.0
    %715 = vmatpush1.msra.mxu0 0.0
    %716 = vmatprep.subr.mxu0 0.0
    %717 = vmatpush1.msra.mxu0 0.0
    %718 = vmatprep.subr.mxu0 0.0
    %719 = vmatpush1.msra.mxu0 0.0
    %720 = vmatprep.subr.mxu0 0.0
    %721 = vmatpush1.msra.mxu0 0.0
    %722 = vmatprep.subr.mxu0 0.0
    %723 = vmatpush1.msra.mxu0 0.0
    %724 = vmatprep.mubr.f32.mxu0 0.0
    %v725 = vand.u32 %v227, 4294901760
    %v726 = vsub.f32 %v227, %v725
    %727 = vmatmul.mubr.f32.gmra.mrb[0].mxu0 %v726
    %v728 = vpop.f32.mrb[0].mxu0
    %v729 = vadd.f32 %v567, %v728
    %v730 = vpop.f32.mrb[0].mxu0
    %731 = vmatprep.mubr.f32.mxu0 0.0
    %v732 = vand.u32 %v230, 4294901760
    %v733 = vsub.f32 %v230, %v732
    %734 = vmatmul.mubr.f32.gmra.mrb[0].mxu0 %v733
    %v735 = vpop.f32.mrb[0].mxu0
    %v736 = vadd.f32 %v573, %v735
    %v737 = vpop.f32.mrb[0].mxu0
    %738 = vmatprep.mubr.f32.mxu0 0.0
    %v739 = vand.u32 %v233, 4294901760
    %v740 = vsub.f32 %v233, %v739
    %741 = vmatmul.mubr.f32.gmra.mrb[0].mxu0 %v740
    %v742 = vpop.f32.mrb[0].mxu0
    %v743 = vadd.f32 %v579, %v742
    %v744 = vpop.f32.mrb[0].mxu0
    %745 = vmatprep.mubr.f32.mxu0 0.0
    %v746 = vand.u32 %v236, 4294901760
    %v747 = vsub.f32 %v236, %v746
    %748 = vmatmul.mubr.f32.gmra.mrb[0].mxu0 %v747
    %v749 = vpop.f32.mrb[0].mxu0
    %v750 = vadd.f32 %v585, %v749
    %v751 = vpop.f32.mrb[0].mxu0
    %752 = vmatprep.mubr.f32.mxu0 0.0
    %v753 = vand.u32 %v239, 4294901760
    %v754 = vsub.f32 %v239, %v753
    %755 = vmatmul.mubr.f32.gmra.mrb[0].mxu0 %v754
    %v756 = vpop.f32.mrb[0].mxu0
    %v757 = vadd.f32 %v591, %v756
    %v758 = vpop.f32.mrb[0].mxu0
    %759 = vmatprep.mubr.f32.mxu0 0.0
    %v760 = vand.u32 %v242, 4294901760
    %v761 = vsub.f32 %v242, %v760
    %762 = vmatmul.mubr.f32.gmra.mrb[0].mxu0 %v761
    %v763 = vpop.f32.mrb[0].mxu0
    %v764 = vadd.f32 %v597, %v763
    %v765 = vpop.f32.mrb[0].mxu0
    %766 = vmatprep.mubr.f32.mxu0 0.0
    %v767 = vand.u32 %v245, 4294901760
    %v768 = vsub.f32 %v245, %v767
    %769 = vmatmul.mubr.f32.gmra.mrb[0].mxu0 %v768
    %v770 = vpop.f32.mrb[0].mxu0
    %v771 = vadd.f32 %v603, %v770
    %v772 = vpop.f32.mrb[0].mxu0
    %773 = vmatprep.mubr.f32.mxu0 0.0
    %v774 = vand.u32 %v248, 4294901760
    %v775 = vsub.f32 %v248, %v774
    %776 = vmatmul.mubr.f32.gmra.mrb[0].mxu0 %v775
    %v777 = vpop.f32.mrb[0].mxu0
    %v778 = vadd.f32 %v609, %v777
    %v779 = vpop.f32.mrb[0].mxu0
    %780 = vmatprep.mubr.f32.mxu0 0.0
    %v781 = vand.u32 %v251, 4294901760
    %v782 = vsub.f32 %v251, %v781
    %783 = vmatmul.mubr.f32.gmra.mrb[0].mxu0 %v782
    %v784 = vpop.f32.mrb[0].mxu0
    %v785 = vadd.f32 %v615, %v784
    %v786 = vpop.f32.mrb[0].mxu0
    %787 = vmatprep.mubr.f32.mxu0 0.0
    %v788 = vand.u32 %v254, 4294901760
    %v789 = vsub.f32 %v254, %v788
    %790 = vmatmul.mubr.f32.gmra.mrb[0].mxu0 %v789
    %v791 = vpop.f32.mrb[0].mxu0
    %v792 = vadd.f32 %v621, %v791
    %v793 = vpop.f32.mrb[0].mxu0
    %794 = vmatprep.mubr.f32.mxu0 0.0
    %v795 = vand.u32 %v257, 4294901760
    %v796 = vsub.f32 %v257, %v795
    %797 = vmatmul.mubr.f32.gmra.mrb[0].mxu0 %v796
    %v798 = vpop.f32.mrb[0].mxu0
    %v799 = vadd.f32 %v627, %v798
    %v800 = vpop.f32.mrb[0].mxu0
    %801 = vmatprep.mubr.f32.mxu0 0.0
    %v802 = vand.u32 %v260, 4294901760
    %v803 = vsub.f32 %v260, %v802
    %804 = vmatmul.mubr.f32.gmra.mrb[0].mxu0 %v803
    %v805 = vpop.f32.mrb[0].mxu0
    %v806 = vadd.f32 %v633, %v805
    %v807 = vpop.f32.mrb[0].mxu0
    %808 = vmatprep.mubr.f32.mxu0 0.0
    %v809 = vand.u32 %v263, 4294901760
    %v810 = vsub.f32 %v263, %v809
    %811 = vmatmul.mubr.f32.gmra.mrb[0].mxu0 %v810
    %v812 = vpop.f32.mrb[0].mxu0
    %v813 = vadd.f32 %v639, %v812
    %v814 = vpop.f32.mrb[0].mxu0
    %815 = vmatprep.mubr.f32.mxu0 0.0
    %v816 = vand.u32 %v266, 4294901760
    %v817 = vsub.f32 %v266, %v816
    %818 = vmatmul.mubr.f32.gmra.mrb[0].mxu0 %v817
    %v819 = vpop.f32.mrb[0].mxu0
    %v820 = vadd.f32 %v645, %v819
    %v821 = vpop.f32.mrb[0].mxu0
    %822 = vmatprep.mubr.f32.mxu0 0.0
    %v823 = vand.u32 %v269, 4294901760
    %v824 = vsub.f32 %v269, %v823
    %825 = vmatmul.mubr.f32.gmra.mrb[0].mxu0 %v824
    %v826 = vpop.f32.mrb[0].mxu0
    %v827 = vadd.f32 %v651, %v826
    %v828 = vpop.f32.mrb[0].mxu0
    %829 = vmatprep.mubr.f32.mxu0 0.0
    %v830 = vand.u32 %v272, 4294901760
    %v831 = vsub.f32 %v272, %v830
    %832 = vmatmul.mubr.f32.gmra.mrb[0].mxu0 %v831
    %v833 = vpop.f32.mrb[0].mxu0
    %v834 = vadd.f32 %v657, %v833
    %v835 = vpop.f32.mrb[0].mxu0
    %836 = vdwg.mxu0
    %837 = vmatprep.subr.mxu0 0.0
    %838 = vmatpush1.msra.mxu0 1.0
    %839 = vmatprep.subr.mxu0 0.0
    %840 = vmatpush1.msra.mxu0 1.0
    %841 = vmatprep.subr.mxu0 0.0
    %842 = vmatpush1.msra.mxu0 1.0
    %843 = vmatprep.subr.mxu0 0.0
    %844 = vmatpush1.msra.mxu0 1.0
    %845 = vmatprep.subr.mxu0 0.0
    %846 = vmatpush1.msra.mxu0 0.0
    %847 = vmatprep.subr.mxu0 0.0
    %848 = vmatpush1.msra.mxu0 0.0
    %849 = vmatprep.subr.mxu0 0.0
    %850 = vmatpush1.msra.mxu0 0.0
    %851 = vmatprep.subr.mxu0 0.0
    %852 = vmatpush1.msra.mxu0 0.0
    %853 = vmatprep.subr.mxu0 0.0
    %854 = vmatpush1.msra.mxu0 0.0
    %855 = vmatprep.subr.mxu0 0.0
    %856 = vmatpush1.msra.mxu0 0.0
    %857 = vmatprep.subr.mxu0 0.0
    %858 = vmatpush1.msra.mxu0 0.0
    %859 = vmatprep.subr.mxu0 0.0
    %860 = vmatpush1.msra.mxu0 0.0
    %861 = vmatprep.subr.mxu0 0.0
    %862 = vmatpush1.msra.mxu0 0.0
    %863 = vmatprep.subr.mxu0 0.0
    %864 = vmatpush1.msra.mxu0 0.0
    %865 = vmatprep.subr.mxu0 0.0
    %866 = vmatpush1.msra.mxu0 0.0
    %867 = vmatprep.subr.mxu0 0.0
    %868 = vmatpush1.msra.mxu0 0.0
    %869 = vmatprep.subr.mxu0 0.0
    %870 = vmatpush1.msra.mxu0 0.0
    %871 = vmatprep.subr.mxu0 0.0
    %872 = vmatpush1.msra.mxu0 0.0
    %873 = vmatprep.subr.mxu0 0.0
    %874 = vmatpush1.msra.mxu0 0.0
    %875 = vmatprep.subr.mxu0 0.0
    %876 = vmatpush1.msra.mxu0 0.0
    %877 = vmatprep.subr.mxu0 0.0
    %878 = vmatpush1.msra.mxu0 0.0
    %879 = vmatprep.subr.mxu0 0.0
    %880 = vmatpush1.msra.mxu0 0.0
    %881 = vmatprep.subr.mxu0 0.0
    %882 = vmatpush1.msra.mxu0 0.0
    %883 = vmatprep.subr.mxu0 0.0
    %884 = vmatpush1.msra.mxu0 0.0
    %885 = vmatprep.subr.mxu0 0.0
    %886 = vmatpush1.msra.mxu0 0.0
    %887 = vmatprep.subr.mxu0 0.0
    %888 = vmatpush1.msra.mxu0 0.0
    %889 = vmatprep.subr.mxu0 0.0
    %890 = vmatpush1.msra.mxu0 0.0
    %891 = vmatprep.subr.mxu0 0.0
    %892 = vmatpush1.msra.mxu0 0.0
    %893 = vmatprep.subr.mxu0 0.0
    %894 = vmatpush1.msra.mxu0 0.0
    %895 = vmatprep.subr.mxu0 0.0
    %896 = vmatpush1.msra.mxu0 0.0
    %897 = vmatprep.subr.mxu0 0.0
    %898 = vmatpush1.msra.mxu0 0.0
    %899 = vmatprep.subr.mxu0 0.0
    %900 = vmatpush1.msra.mxu0 0.0
    %901 = vmatprep.mubr.f32.mxu0 0.0
    %v902 = vand.u32 %v227, 4294901760
    %v903 = vsub.f32 %v227, %v902
    %v904 = vand.u32 %v903, 4294901760
    %905 = vmatmul.mubr.f32.gmra.mrb[0].mxu0 %v904
    %v906 = vpop.f32.mrb[0].mxu0
    %v907 = vadd.f32 %v729, %v906
    %v908 = vpop.f32.mrb[0].mxu0
    %909 = vmatprep.mubr.f32.mxu0 0.0
    %v910 = vand.u32 %v230, 4294901760
    %v911 = vsub.f32 %v230, %v910
    %v912 = vand.u32 %v911, 4294901760
    %913 = vmatmul.mubr.f32.gmra.mrb[0].mxu0 %v912
    %v914 = vpop.f32.mrb[0].mxu0
    %v915 = vadd.f32 %v736, %v914
    %v916 = vpop.f32.mrb[0].mxu0
    %917 = vmatprep.mubr.f32.mxu0 0.0
    %v918 = vand.u32 %v233, 4294901760
    %v919 = vsub.f32 %v233, %v918
    %v920 = vand.u32 %v919, 4294901760
    %921 = vmatmul.mubr.f32.gmra.mrb[0].mxu0 %v920
    %v922 = vpop.f32.mrb[0].mxu0
    %v923 = vadd.f32 %v743, %v922
    %v924 = vpop.f32.mrb[0].mxu0
    %925 = vmatprep.mubr.f32.mxu0 0.0
    %v926 = vand.u32 %v236, 4294901760
    %v927 = vsub.f32 %v236, %v926
    %v928 = vand.u32 %v927, 4294901760
    %929 = vmatmul.mubr.f32.gmra.mrb[0].mxu0 %v928
    %v930 = vpop.f32.mrb[0].mxu0
    %v931 = vadd.f32 %v750, %v930
    %v932 = vpop.f32.mrb[0].mxu0
    %933 = vmatprep.mubr.f32.mxu0 0.0
    %v934 = vand.u32 %v239, 4294901760
    %v935 = vsub.f32 %v239, %v934
    %v936 = vand.u32 %v935, 4294901760
    %937 = vmatmul.mubr.f32.gmra.mrb[0].mxu0 %v936
    %v938 = vpop.f32.mrb[0].mxu0
    %v939 = vadd.f32 %v757, %v938
    %v940 = vpop.f32.mrb[0].mxu0
    %941 = vmatprep.mubr.f32.mxu0 0.0
    %v942 = vand.u32 %v242, 4294901760
    %v943 = vsub.f32 %v242, %v942
    %v944 = vand.u32 %v943, 4294901760
    %945 = vmatmul.mubr.f32.gmra.mrb[0].mxu0 %v944
    %v946 = vpop.f32.mrb[0].mxu0
    %v947 = vadd.f32 %v764, %v946
    %v948 = vpop.f32.mrb[0].mxu0
    %949 = vmatprep.mubr.f32.mxu0 0.0
    %v950 = vand.u32 %v245, 4294901760
    %v951 = vsub.f32 %v245, %v950
    %v952 = vand.u32 %v951, 4294901760
    %953 = vmatmul.mubr.f32.gmra.mrb[0].mxu0 %v952
    %v954 = vpop.f32.mrb[0].mxu0
    %v955 = vadd.f32 %v771, %v954
    %v956 = vpop.f32.mrb[0].mxu0
    %957 = vmatprep.mubr.f32.mxu0 0.0
    %v958 = vand.u32 %v248, 4294901760
    %v959 = vsub.f32 %v248, %v958
    %v960 = vand.u32 %v959, 4294901760
    %961 = vmatmul.mubr.f32.gmra.mrb[0].mxu0 %v960
    %v962 = vpop.f32.mrb[0].mxu0
    %v963 = vadd.f32 %v778, %v962
    %v964 = vpop.f32.mrb[0].mxu0
    %965 = vmatprep.mubr.f32.mxu0 0.0
    %v966 = vand.u32 %v251, 4294901760
    %v967 = vsub.f32 %v251, %v966
    %v968 = vand.u32 %v967, 4294901760
    %969 = vmatmul.mubr.f32.gmra.mrb[0].mxu0 %v968
    %v970 = vpop.f32.mrb[0].mxu0
    %v971 = vadd.f32 %v785, %v970
    %v972 = vpop.f32.mrb[0].mxu0
    %973 = vmatprep.mubr.f32.mxu0 0.0
    %v974 = vand.u32 %v254, 4294901760
    %v975 = vsub.f32 %v254, %v974
    %v976 = vand.u32 %v975, 4294901760
    %977 = vmatmul.mubr.f32.gmra.mrb[0].mxu0 %v976
    %v978 = vpop.f32.mrb[0].mxu0
    %v979 = vadd.f32 %v792, %v978
    %v980 = vpop.f32.mrb[0].mxu0
    %981 = vmatprep.mubr.f32.mxu0 0.0
    %v982 = vand.u32 %v257, 4294901760
    %v983 = vsub.f32 %v257, %v982
    %v984 = vand.u32 %v983, 4294901760
    %985 = vmatmul.mubr.f32.gmra.mrb[0].mxu0 %v984
    %v986 = vpop.f32.mrb[0].mxu0
    %v987 = vadd.f32 %v799, %v986
    %v988 = vpop.f32.mrb[0].mxu0
    %989 = vmatprep.mubr.f32.mxu0 0.0
    %v990 = vand.u32 %v260, 4294901760
    %v991 = vsub.f32 %v260, %v990
    %v992 = vand.u32 %v991, 4294901760
    %993 = vmatmul.mubr.f32.gmra.mrb[0].mxu0 %v992
    %v994 = vpop.f32.mrb[0].mxu0
    %v995 = vadd.f32 %v806, %v994
    %v996 = vpop.f32.mrb[0].mxu0
    %997 = vmatprep.mubr.f32.mxu0 0.0
    %v998 = vand.u32 %v263, 4294901760
    %v999 = vsub.f32 %v263, %v998
    %v1000 = vand.u32 %v999, 4294901760
    %1001 = vmatmul.mubr.f32.gmra.mrb[0].mxu0 %v1000
    %v1002 = vpop.f32.mrb[0].mxu0
    %v1003 = vadd.f32 %v813, %v1002
    %v1004 = vpop.f32.mrb[0].mxu0
    %1005 = vmatprep.mubr.f32.mxu0 0.0
    %v1006 = vand.u32 %v266, 4294901760
    %v1007 = vsub.f32 %v266, %v1006
    %v1008 = vand.u32 %v1007, 4294901760
    %1009 = vmatmul.mubr.f32.gmra.mrb[0].mxu0 %v1008
    %v1010 = vpop.f32.mrb[0].mxu0
    %v1011 = vadd.f32 %v820, %v1010
    %v1012 = vpop.f32.mrb[0].mxu0
    %1013 = vmatprep.mubr.f32.mxu0 0.0
    %v1014 = vand.u32 %v269, 4294901760
    %v1015 = vsub.f32 %v269, %v1014
    %v1016 = vand.u32 %v1015, 4294901760
    %1017 = vmatmul.mubr.f32.gmra.mrb[0].mxu0 %v1016
    %v1018 = vpop.f32.mrb[0].mxu0
    %v1019 = vadd.f32 %v827, %v1018
    %v1020 = vpop.f32.mrb[0].mxu0
    %1021 = vmatprep.mubr.f32.mxu0 0.0
    %v1022 = vand.u32 %v272, 4294901760
    %v1023 = vsub.f32 %v272, %v1022
    %v1024 = vand.u32 %v1023, 4294901760
    %1025 = vmatmul.mubr.f32.gmra.mrb[0].mxu0 %v1024
    %v1026 = vpop.f32.mrb[0].mxu0
    %v1027 = vadd.f32 %v834, %v1026
    %v1028 = vpop.f32.mrb[0].mxu0
    %1029 = vdwg.mxu0
    %1030 = vmatprep.subr.mxu0 0.0
    %1031 = vmatpush1.msra.mxu0 0.0
    %1032 = vmatprep.subr.mxu0 0.0
    %1033 = vmatpush1.msra.mxu0 0.0
    %1034 = vmatprep.subr.mxu0 0.0
    %1035 = vmatpush1.msra.mxu0 0.0
    %1036 = vmatprep.subr.mxu0 0.0
    %1037 = vmatpush1.msra.mxu0 0.0
    %1038 = vmatprep.subr.mxu0 0.0
    %1039 = vmatpush1.msra.mxu0 0.0
    %1040 = vmatprep.subr.mxu0 0.0
    %1041 = vmatpush1.msra.mxu0 0.0
    %1042 = vmatprep.subr.mxu0 0.0
    %1043 = vmatpush1.msra.mxu0 0.0
    %1044 = vmatprep.subr.mxu0 0.0
    %1045 = vmatpush1.msra.mxu0 0.0
    %1046 = vmatprep.subr.mxu0 0.0
    %1047 = vmatpush1.msra.mxu0 0.0
    %1048 = vmatprep.subr.mxu0 0.0
    %1049 = vmatpush1.msra.mxu0 0.0
    %1050 = vmatprep.subr.mxu0 0.0
    %1051 = vmatpush1.msra.mxu0 0.0
    %1052 = vmatprep.subr.mxu0 0.0
    %1053 = vmatpush1.msra.mxu0 0.0
    %1054 = vmatprep.subr.mxu0 0.0
    %1055 = vmatpush1.msra.mxu0 0.0
    %1056 = vmatprep.subr.mxu0 0.0
    %1057 = vmatpush1.msra.mxu0 0.0
    %1058 = vmatprep.subr.mxu0 0.0
    %1059 = vmatpush1.msra.mxu0 0.0
    %1060 = vmatprep.subr.mxu0 0.0
    %1061 = vmatpush1.msra.mxu0 0.0
    %1062 = vmatprep.subr.mxu0 0.0
    %1063 = vmatpush1.msra.mxu0 0.0
    %1064 = vmatprep.subr.mxu0 0.0
    %1065 = vmatpush1.msra.mxu0 0.0
    %1066 = vmatprep.subr.mxu0 0.0
    %1067 = vmatpush1.msra.mxu0 0.0
    %1068 = vmatprep.subr.mxu0 0.0
    %1069 = vmatpush1.msra.mxu0 0.0
    %1070 = vmatprep.subr.mxu0 0.0
    %1071 = vmatpush1.msra.mxu0 0.0
    %1072 = vmatprep.subr.mxu0 0.0
    %1073 = vmatpush1.msra.mxu0 0.0
    %1074 = vmatprep.subr.mxu0 0.0
    %1075 = vmatpush1.msra.mxu0 0.0
    %1076 = vmatprep.subr.mxu0 0.0
    %1077 = vmatpush1.msra.mxu0 0.0
    %1078 = vmatprep.subr.mxu0 0.0
    %1079 = vmatpush1.msra.mxu0 0.0
    %1080 = vmatprep.subr.mxu0 0.0
    %1081 = vmatpush1.msra.mxu0 0.0
    %1082 = vmatprep.subr.mxu0 0.0
    %1083 = vmatpush1.msra.mxu0 0.0
    %1084 = vmatprep.subr.mxu0 0.0
    %1085 = vmatpush1.msra.mxu0 0.0
    %1086 = vmatprep.subr.mxu0 0.0
    %1087 = vmatpush1.msra.mxu0 0.0
    %1088 = vmatprep.subr.mxu0 0.0
    %1089 = vmatpush1.msra.mxu0 0.0
    %1090 = vmatprep.subr.mxu0 0.0
    %1091 = vmatpush1.msra.mxu0 0.0
    %1092 = vmatprep.subr.mxu0 0.0
    %1093 = vmatpush1.msra.mxu0 0.0
    %1094 = vmatprep.mubr.f32.mxu0 0.0
    %v1095 = vand.u32 %v227, 4294901760
    %1096 = vmatmul.mubr.f32.gmra.mrb[0].mxu0 %v1095
    %v1097 = vpop.f32.mrb[0].mxu0
    %v1098 = vadd.f32 %v907, %v1097
    %v1099 = vpop.f32.mrb[0].mxu0
    %1100 = vmatprep.mubr.f32.mxu0 0.0
    %v1101 = vand.u32 %v230, 4294901760
    %1102 = vmatmul.mubr.f32.gmra.mrb[0].mxu0 %v1101
    %v1103 = vpop.f32.mrb[0].mxu0
    %v1104 = vadd.f32 %v915, %v1103
    %v1105 = vpop.f32.mrb[0].mxu0
    %1106 = vmatprep.mubr.f32.mxu0 0.0
    %v1107 = vand.u32 %v233, 4294901760
    %1108 = vmatmul.mubr.f32.gmra.mrb[0].mxu0 %v1107
    %v1109 = vpop.f32.mrb[0].mxu0
    %v1110 = vadd.f32 %v923, %v1109
    %v1111 = vpop.f32.mrb[0].mxu0
    %1112 = vmatprep.mubr.f32.mxu0 0.0
    %v1113 = vand.u32 %v236, 4294901760
    %1114 = vmatmul.mubr.f32.gmra.mrb[0].mxu0 %v1113
    %v1115 = vpop.f32.mrb[0].mxu0
    %v1116 = vadd.f32 %v931, %v1115
    %v1117 = vpop.f32.mrb[0].mxu0
    %1118 = vmatprep.mubr.f32.mxu0 0.0
    %v1119 = vand.u32 %v239, 4294901760
    %1120 = vmatmul.mubr.f32.gmra.mrb[0].mxu0 %v1119
    %v1121 = vpop.f32.mrb[0].mxu0
    %v1122 = vadd.f32 %v939, %v1121
    %v1123 = vpop.f32.mrb[0].mxu0
    %1124 = vmatprep.mubr.f32.mxu0 0.0
    %v1125 = vand.u32 %v242, 4294901760
    %1126 = vmatmul.mubr.f32.gmra.mrb[0].mxu0 %v1125
    %v1127 = vpop.f32.mrb[0].mxu0
    %v1128 = vadd.f32 %v947, %v1127
    %v1129 = vpop.f32.mrb[0].mxu0
    %1130 = vmatprep.mubr.f32.mxu0 0.0
    %v1131 = vand.u32 %v245, 4294901760
    %1132 = vmatmul.mubr.f32.gmra.mrb[0].mxu0 %v1131
    %v1133 = vpop.f32.mrb[0].mxu0
    %v1134 = vadd.f32 %v955, %v1133
    %v1135 = vpop.f32.mrb[0].mxu0
    %1136 = vmatprep.mubr.f32.mxu0 0.0
    %v1137 = vand.u32 %v248, 4294901760
    %1138 = vmatmul.mubr.f32.gmra.mrb[0].mxu0 %v1137
    %v1139 = vpop.f32.mrb[0].mxu0
    %v1140 = vadd.f32 %v963, %v1139
    %v1141 = vpop.f32.mrb[0].mxu0
    %1142 = vmatprep.mubr.f32.mxu0 0.0
    %v1143 = vand.u32 %v251, 4294901760
    %1144 = vmatmul.mubr.f32.gmra.mrb[0].mxu0 %v1143
    %v1145 = vpop.f32.mrb[0].mxu0
    %v1146 = vadd.f32 %v971, %v1145
    %v1147 = vpop.f32.mrb[0].mxu0
    %1148 = vmatprep.mubr.f32.mxu0 0.0
    %v1149 = vand.u32 %v254, 4294901760
    %1150 = vmatmul.mubr.f32.gmra.mrb[0].mxu0 %v1149
    %v1151 = vpop.f32.mrb[0].mxu0
    %v1152 = vadd.f32 %v979, %v1151
    %v1153 = vpop.f32.mrb[0].mxu0
    %1154 = vmatprep.mubr.f32.mxu0 0.0
    %v1155 = vand.u32 %v257, 4294901760
    %1156 = vmatmul.mubr.f32.gmra.mrb[0].mxu0 %v1155
    %v1157 = vpop.f32.mrb[0].mxu0
    %v1158 = vadd.f32 %v987, %v1157
    %v1159 = vpop.f32.mrb[0].mxu0
    %1160 = vmatprep.mubr.f32.mxu0 0.0
    %v1161 = vand.u32 %v260, 4294901760
    %1162 = vmatmul.mubr.f32.gmra.mrb[0].mxu0 %v1161
    %v1163 = vpop.f32.mrb[0].mxu0
    %v1164 = vadd.f32 %v995, %v1163
    %v1165 = vpop.f32.mrb[0].mxu0
    %1166 = vmatprep.mubr.f32.mxu0 0.0
    %v1167 = vand.u32 %v263, 4294901760
    %1168 = vmatmul.mubr.f32.gmra.mrb[0].mxu0 %v1167
    %v1169 = vpop.f32.mrb[0].mxu0
    %v1170 = vadd.f32 %v1003, %v1169
    %v1171 = vpop.f32.mrb[0].mxu0
    %1172 = vmatprep.mubr.f32.mxu0 0.0
    %v1173 = vand.u32 %v266, 4294901760
    %1174 = vmatmul.mubr.f32.gmra.mrb[0].mxu0 %v1173
    %v1175 = vpop.f32.mrb[0].mxu0
    %v1176 = vadd.f32 %v1011, %v1175
    %v1177 = vpop.f32.mrb[0].mxu0
    %1178 = vmatprep.mubr.f32.mxu0 0.0
    %v1179 = vand.u32 %v269, 4294901760
    %1180 = vmatmul.mubr.f32.gmra.mrb[0].mxu0 %v1179
    %v1181 = vpop.f32.mrb[0].mxu0
    %v1182 = vadd.f32 %v1019, %v1181
    %v1183 = vpop.f32.mrb[0].mxu0
    %1184 = vmatprep.mubr.f32.mxu0 0.0
    %v1185 = vand.u32 %v272, 4294901760
    %1186 = vmatmul.mubr.f32.gmra.mrb[0].mxu0 %v1185
    %v1187 = vpop.f32.mrb[0].mxu0
    %v1188 = vadd.f32 %v1027, %v1187
    %v1189 = vpop.f32.mrb[0].mxu0
    %1190 = vdwg.mxu0
    %1191 = vmatprep.subr.mxu0 0.0
    %1192 = vmatpush1.msra.mxu0 1.0
    %1193 = vmatprep.subr.mxu0 0.0
    %1194 = vmatpush1.msra.mxu0 1.0
    %1195 = vmatprep.subr.mxu0 0.0
    %1196 = vmatpush1.msra.mxu0 1.0
    %1197 = vmatprep.subr.mxu0 0.0
    %1198 = vmatpush1.msra.mxu0 1.0
    %1199 = vmatprep.subr.mxu0 0.0
    %1200 = vmatpush1.msra.mxu0 0.0
    %1201 = vmatprep.subr.mxu0 0.0
    %1202 = vmatpush1.msra.mxu0 0.0
    %1203 = vmatprep.subr.mxu0 0.0
    %1204 = vmatpush1.msra.mxu0 0.0
    %1205 = vmatprep.subr.mxu0 0.0
    %1206 = vmatpush1.msra.mxu0 0.0
    %1207 = vmatprep.subr.mxu0 0.0
    %1208 = vmatpush1.msra.mxu0 0.0
    %1209 = vmatprep.subr.mxu0 0.0
    %1210 = vmatpush1.msra.mxu0 0.0
    %1211 = vmatprep.subr.mxu0 0.0
    %1212 = vmatpush1.msra.mxu0 0.0
    %1213 = vmatprep.subr.mxu0 0.0
    %1214 = vmatpush1.msra.mxu0 0.0
    %1215 = vmatprep.subr.mxu0 0.0
    %1216 = vmatpush1.msra.mxu0 0.0
    %1217 = vmatprep.subr.mxu0 0.0
    %1218 = vmatpush1.msra.mxu0 0.0
    %1219 = vmatprep.subr.mxu0 0.0
    %1220 = vmatpush1.msra.mxu0 0.0
    %1221 = vmatprep.subr.mxu0 0.0
    %1222 = vmatpush1.msra.mxu0 0.0
    %1223 = vmatprep.subr.mxu0 0.0
    %1224 = vmatpush1.msra.mxu0 0.0
    %1225 = vmatprep.subr.mxu0 0.0
    %1226 = vmatpush1.msra.mxu0 0.0
    %1227 = vmatprep.subr.mxu0 0.0
    %1228 = vmatpush1.msra.mxu0 0.0
    %1229 = vmatprep.subr.mxu0 0.0
    %1230 = vmatpush1.msra.mxu0 0.0
    %1231 = vmatprep.subr.mxu0 0.0
    %1232 = vmatpush1.msra.mxu0 0.0
    %1233 = vmatprep.subr.mxu0 0.0
    %1234 = vmatpush1.msra.mxu0 0.0
    %1235 = vmatprep.subr.mxu0 0.0
    %1236 = vmatpush1.msra.mxu0 0.0
    %1237 = vmatprep.subr.mxu0 0.0
    %1238 = vmatpush1.msra.mxu0 0.0
    %1239 = vmatprep.subr.mxu0 0.0
    %1240 = vmatpush1.msra.mxu0 0.0
    %1241 = vmatprep.subr.mxu0 0.0
    %1242 = vmatpush1.msra.mxu0 0.0
    %1243 = vmatprep.subr.mxu0 0.0
    %1244 = vmatpush1.msra.mxu0 0.0
    %1245 = vmatprep.subr.mxu0 0.0
    %1246 = vmatpush1.msra.mxu0 0.0
    %1247 = vmatprep.subr.mxu0 0.0
    %1248 = vmatpush1.msra.mxu0 0.0
    %1249 = vmatprep.subr.mxu0 0.0
    %1250 = vmatpush1.msra.mxu0 0.0
    %1251 = vmatprep.subr.mxu0 0.0
    %1252 = vmatpush1.msra.mxu0 0.0
    %1253 = vmatprep.subr.mxu0 0.0
    %1254 = vmatpush1.msra.mxu0 0.0
    %1255 = vmatprep.mubr.f32.mxu0 0.0
    %v1256 = vand.u32 %v227, 4294901760
    %1257 = vmatmul.mubr.f32.gmra.mrb[0].mxu0 %v1256
    %v1258 = vpop.f32.mrb[0].mxu0
    %v1259 = vadd.f32 %v1098, %v1258
    %v1260 = vpop.f32.mrb[0].mxu0
    %1261 = vmatprep.mubr.f32.mxu0 0.0
    %v1262 = vand.u32 %v230, 4294901760
    %1263 = vmatmul.mubr.f32.gmra.mrb[0].mxu0 %v1262
    %v1264 = vpop.f32.mrb[0].mxu0
    %v1265 = vadd.f32 %v1104, %v1264
    %v1266 = vpop.f32.mrb[0].mxu0
    %1267 = vmatprep.mubr.f32.mxu0 0.0
    %v1268 = vand.u32 %v233, 4294901760
    %1269 = vmatmul.mubr.f32.gmra.mrb[0].mxu0 %v1268
    %v1270 = vpop.f32.mrb[0].mxu0
    %v1271 = vadd.f32 %v1110, %v1270
    %v1272 = vpop.f32.mrb[0].mxu0
    %1273 = vmatprep.mubr.f32.mxu0 0.0
    %v1274 = vand.u32 %v236, 4294901760
    %1275 = vmatmul.mubr.f32.gmra.mrb[0].mxu0 %v1274
    %v1276 = vpop.f32.mrb[0].mxu0
    %v1277 = vadd.f32 %v1116, %v1276
    %v1278 = vpop.f32.mrb[0].mxu0
    %1279 = vmatprep.mubr.f32.mxu0 0.0
    %v1280 = vand.u32 %v239, 4294901760
    %1281 = vmatmul.mubr.f32.gmra.mrb[0].mxu0 %v1280
    %v1282 = vpop.f32.mrb[0].mxu0
    %v1283 = vadd.f32 %v1122, %v1282
    %v1284 = vpop.f32.mrb[0].mxu0
    %1285 = vmatprep.mubr.f32.mxu0 0.0
    %v1286 = vand.u32 %v242, 4294901760
    %1287 = vmatmul.mubr.f32.gmra.mrb[0].mxu0 %v1286
    %v1288 = vpop.f32.mrb[0].mxu0
    %v1289 = vadd.f32 %v1128, %v1288
    %v1290 = vpop.f32.mrb[0].mxu0
    %1291 = vmatprep.mubr.f32.mxu0 0.0
    %v1292 = vand.u32 %v245, 4294901760
    %1293 = vmatmul.mubr.f32.gmra.mrb[0].mxu0 %v1292
    %v1294 = vpop.f32.mrb[0].mxu0
    %v1295 = vadd.f32 %v1134, %v1294
    %v1296 = vpop.f32.mrb[0].mxu0
    %1297 = vmatprep.mubr.f32.mxu0 0.0
    %v1298 = vand.u32 %v248, 4294901760
    %1299 = vmatmul.mubr.f32.gmra.mrb[0].mxu0 %v1298
    %v1300 = vpop.f32.mrb[0].mxu0
    %v1301 = vadd.f32 %v1140, %v1300
    %v1302 = vpop.f32.mrb[0].mxu0
    %1303 = vmatprep.mubr.f32.mxu0 0.0
    %v1304 = vand.u32 %v251, 4294901760
    %1305 = vmatmul.mubr.f32.gmra.mrb[0].mxu0 %v1304
    %v1306 = vpop.f32.mrb[0].mxu0
    %v1307 = vadd.f32 %v1146, %v1306
    %v1308 = vpop.f32.mrb[0].mxu0
    %1309 = vmatprep.mubr.f32.mxu0 0.0
    %v1310 = vand.u32 %v254, 4294901760
    %1311 = vmatmul.mubr.f32.gmra.mrb[0].mxu0 %v1310
    %v1312 = vpop.f32.mrb[0].mxu0
    %v1313 = vadd.f32 %v1152, %v1312
    %v1314 = vpop.f32.mrb[0].mxu0
    %1315 = vmatprep.mubr.f32.mxu0 0.0
    %v1316 = vand.u32 %v257, 4294901760
    %1317 = vmatmul.mubr.f32.gmra.mrb[0].mxu0 %v1316
    %v1318 = vpop.f32.mrb[0].mxu0
    %v1319 = vadd.f32 %v1158, %v1318
    %v1320 = vpop.f32.mrb[0].mxu0
    %1321 = vmatprep.mubr.f32.mxu0 0.0
    %v1322 = vand.u32 %v260, 4294901760
    %1323 = vmatmul.mubr.f32.gmra.mrb[0].mxu0 %v1322
    %v1324 = vpop.f32.mrb[0].mxu0
    %v1325 = vadd.f32 %v1164, %v1324
    %v1326 = vpop.f32.mrb[0].mxu0
    %1327 = vmatprep.mubr.f32.mxu0 0.0
    %v1328 = vand.u32 %v263, 4294901760
    %1329 = vmatmul.mubr.f32.gmra.mrb[0].mxu0 %v1328
    %v1330 = vpop.f32.mrb[0].mxu0
    %v1331 = vadd.f32 %v1170, %v1330
    %v1332 = vpop.f32.mrb[0].mxu0
    %1333 = vmatprep.mubr.f32.mxu0 0.0
    %v1334 = vand.u32 %v266, 4294901760
    %1335 = vmatmul.mubr.f32.gmra.mrb[0].mxu0 %v1334
    %v1336 = vpop.f32.mrb[0].mxu0
    %v1337 = vadd.f32 %v1176, %v1336
    %v1338 = vpop.f32.mrb[0].mxu0
    %1339 = vmatprep.mubr.f32.mxu0 0.0
    %v1340 = vand.u32 %v269, 4294901760
    %1341 = vmatmul.mubr.f32.gmra.mrb[0].mxu0 %v1340
    %v1342 = vpop.f32.mrb[0].mxu0
    %v1343 = vadd.f32 %v1182, %v1342
    %v1344 = vpop.f32.mrb[0].mxu0
    %1345 = vmatprep.mubr.f32.mxu0 0.0
    %v1346 = vand.u32 %v272, 4294901760
    %1347 = vmatmul.mubr.f32.gmra.mrb[0].mxu0 %v1346
    %v1348 = vpop.f32.mrb[0].mxu0
    %v1349 = vadd.f32 %v1188, %v1348
    %v1350 = vpop.f32.mrb[0].mxu0
    %1351 = vdwg.mxu0
    %v1352 = vmul.f32 %v109, %v206
    %v1353 = vmul.f32 %v110, %v161
    %v1354 = vmul.f32 %v111, %v163
    %v1355 = vmul.f32 %v112, %v165
    %v1356 = vmul.f32 %v113, %v167
    %v1357 = vmul.f32 %v114, %v169
    %v1358 = vmul.f32 %v115, %v171
    %v1359 = vmul.f32 %v116, %v173
    %v1360 = vmul.f32 %v117, %v175
    %v1361 = vmul.f32 %v118, %v177
    %v1362 = vmul.f32 %v119, %v179
    %v1363 = vmul.f32 %v120, %v181
    %v1364 = vmul.f32 %v121, %v183
    %v1365 = vmul.f32 %v122, %v185
    %v1366 = vmul.f32 %v123, %v187
    %v1367 = vmul.f32 %v124, %v189
    %v1369 = vsel %vm225, %v1352, 0
    %v1372 = vsel %vm225, %v1353, 0
    %v1375 = vsel %vm225, %v1354, 0
    %v1378 = vsel %vm225, %v1355, 0
    %v1381 = vsel %vm225, %v1356, 0
    %v1384 = vsel %vm225, %v1357, 0
    %v1387 = vsel %vm225, %v1358, 0
    %v1390 = vsel %vm225, %v1359, 0
    %v1393 = vsel %vm225, %v1360, 0
    %v1396 = vsel %vm225, %v1361, 0
    %v1399 = vsel %vm225, %v1362, 0
    %v1402 = vsel %vm225, %v1363, 0
    %v1405 = vsel %vm225, %v1364, 0
    %v1408 = vsel %vm225, %v1365, 0
    %v1411 = vsel %vm225, %v1366, 0
    %v1414 = vsel %vm225, %v1367, 0
    %1416 = vmatprep.subr.mxu0 0.0
    %1417 = vmatpush1.msra.mxu0 1.0
    %1418 = vmatprep.subr.mxu0 0.0
    %1419 = vmatpush1.msra.mxu0 1.0
    %1420 = vmatprep.subr.mxu0 0.0
    %1421 = vmatpush1.msra.mxu0 1.0
    %1422 = vmatprep.subr.mxu0 0.0
    %1423 = vmatpush1.msra.mxu0 1.0
    %1424 = vmatprep.subr.mxu0 0.0
    %1425 = vmatpush1.msra.mxu0 0.0
    %1426 = vmatprep.subr.mxu0 0.0
    %1427 = vmatpush1.msra.mxu0 0.0
    %1428 = vmatprep.subr.mxu0 0.0
    %1429 = vmatpush1.msra.mxu0 0.0
    %1430 = vmatprep.subr.mxu0 0.0
    %1431 = vmatpush1.msra.mxu0 0.0
    %1432 = vmatprep.subr.mxu0 0.0
    %1433 = vmatpush1.msra.mxu0 0.0
    %1434 = vmatprep.subr.mxu0 0.0
    %1435 = vmatpush1.msra.mxu0 0.0
    %1436 = vmatprep.subr.mxu0 0.0
    %1437 = vmatpush1.msra.mxu0 0.0
    %1438 = vmatprep.subr.mxu0 0.0
    %1439 = vmatpush1.msra.mxu0 0.0
    %1440 = vmatprep.subr.mxu0 0.0
    %1441 = vmatpush1.msra.mxu0 0.0
    %1442 = vmatprep.subr.mxu0 0.0
    %1443 = vmatpush1.msra.mxu0 0.0
    %1444 = vmatprep.subr.mxu0 0.0
    %1445 = vmatpush1.msra.mxu0 0.0
    %1446 = vmatprep.subr.mxu0 0.0
    %1447 = vmatpush1.msra.mxu0 0.0
    %1448 = vmatprep.subr.mxu0 0.0
    %1449 = vmatpush1.msra.mxu0 0.0
    %1450 = vmatprep.subr.mxu0 0.0
    %1451 = vmatpush1.msra.mxu0 0.0
    %1452 = vmatprep.subr.mxu0 0.0
    %1453 = vmatpush1.msra.mxu0 0.0
    %1454 = vmatprep.subr.mxu0 0.0
    %1455 = vmatpush1.msra.mxu0 0.0
    %1456 = vmatprep.subr.mxu0 0.0
    %1457 = vmatpush1.msra.mxu0 0.0
    %1458 = vmatprep.subr.mxu0 0.0
    %1459 = vmatpush1.msra.mxu0 0.0
    %1460 = vmatprep.subr.mxu0 0.0
    %1461 = vmatpush1.msra.mxu0 0.0
    %1462 = vmatprep.subr.mxu0 0.0
    %1463 = vmatpush1.msra.mxu0 0.0
    %1464 = vmatprep.subr.mxu0 0.0
    %1465 = vmatpush1.msra.mxu0 0.0
    %1466 = vmatprep.subr.mxu0 0.0
    %1467 = vmatpush1.msra.mxu0 0.0
    %1468 = vmatprep.subr.mxu0 0.0
    %1469 = vmatpush1.msra.mxu0 0.0
    %1470 = vmatprep.subr.mxu0 0.0
    %1471 = vmatpush1.msra.mxu0 0.0
    %1472 = vmatprep.subr.mxu0 0.0
    %1473 = vmatpush1.msra.mxu0 0.0
    %1474 = vmatprep.subr.mxu0 0.0
    %1475 = vmatpush1.msra.mxu0 0.0
    %1476 = vmatprep.subr.mxu0 0.0
    %1477 = vmatpush1.msra.mxu0 0.0
    %1478 = vmatprep.subr.mxu0 0.0
    %1479 = vmatpush1.msra.mxu0 0.0
    %1480 = vmatprep.mubr.f32.mxu0 0.0
    %v1481 = vand.u32 %v1369, 4294901760
    %v1482 = vsub.f32 %v1369, %v1481
    %v1483 = vand.u32 %v1482, 4294901760
    %v1484 = vsub.f32 %v1482, %v1483
    %v1485 = vand.u32 %v1484, 4294901760
    %1486 = vmatmul.mubr.f32.gmra.mrb[0].mxu0 %v1485
    %v1487 = vpop.f32.mrb[0].mxu0
    %v1488 = vadd.f32 0.0, %v1487
    %v1489 = vpop.f32.mrb[0].mxu0
    %1490 = vmatprep.mubr.f32.mxu0 0.0
    %v1491 = vand.u32 %v1372, 4294901760
    %v1492 = vsub.f32 %v1372, %v1491
    %v1493 = vand.u32 %v1492, 4294901760
    %v1494 = vsub.f32 %v1492, %v1493
    %v1495 = vand.u32 %v1494, 4294901760
    %1496 = vmatmul.mubr.f32.gmra.mrb[0].mxu0 %v1495
    %v1497 = vpop.f32.mrb[0].mxu0
    %v1498 = vadd.f32 0.0, %v1497
    %v1499 = vpop.f32.mrb[0].mxu0
    %1500 = vmatprep.mubr.f32.mxu0 0.0
    %v1501 = vand.u32 %v1375, 4294901760
    %v1502 = vsub.f32 %v1375, %v1501
    %v1503 = vand.u32 %v1502, 4294901760
    %v1504 = vsub.f32 %v1502, %v1503
    %v1505 = vand.u32 %v1504, 4294901760
    %1506 = vmatmul.mubr.f32.gmra.mrb[0].mxu0 %v1505
    %v1507 = vpop.f32.mrb[0].mxu0
    %v1508 = vadd.f32 0.0, %v1507
    %v1509 = vpop.f32.mrb[0].mxu0
    %1510 = vmatprep.mubr.f32.mxu0 0.0
    %v1511 = vand.u32 %v1378, 4294901760
    %v1512 = vsub.f32 %v1378, %v1511
    %v1513 = vand.u32 %v1512, 4294901760
    %v1514 = vsub.f32 %v1512, %v1513
    %v1515 = vand.u32 %v1514, 4294901760
    %1516 = vmatmul.mubr.f32.gmra.mrb[0].mxu0 %v1515
    %v1517 = vpop.f32.mrb[0].mxu0
    %v1518 = vadd.f32 0.0, %v1517
    %v1519 = vpop.f32.mrb[0].mxu0
    %1520 = vmatprep.mubr.f32.mxu0 0.0
    %v1521 = vand.u32 %v1381, 4294901760
    %v1522 = vsub.f32 %v1381, %v1521
    %v1523 = vand.u32 %v1522, 4294901760
    %v1524 = vsub.f32 %v1522, %v1523
    %v1525 = vand.u32 %v1524, 4294901760
    %1526 = vmatmul.mubr.f32.gmra.mrb[0].mxu0 %v1525
    %v1527 = vpop.f32.mrb[0].mxu0
    %v1528 = vadd.f32 0.0, %v1527
    %v1529 = vpop.f32.mrb[0].mxu0
    %1530 = vmatprep.mubr.f32.mxu0 0.0
    %v1531 = vand.u32 %v1384, 4294901760
    %v1532 = vsub.f32 %v1384, %v1531
    %v1533 = vand.u32 %v1532, 4294901760
    %v1534 = vsub.f32 %v1532, %v1533
    %v1535 = vand.u32 %v1534, 4294901760
    %1536 = vmatmul.mubr.f32.gmra.mrb[0].mxu0 %v1535
    %v1537 = vpop.f32.mrb[0].mxu0
    %v1538 = vadd.f32 0.0, %v1537
    %v1539 = vpop.f32.mrb[0].mxu0
    %1540 = vmatprep.mubr.f32.mxu0 0.0
    %v1541 = vand.u32 %v1387, 4294901760
    %v1542 = vsub.f32 %v1387, %v1541
    %v1543 = vand.u32 %v1542, 4294901760
    %v1544 = vsub.f32 %v1542, %v1543
    %v1545 = vand.u32 %v1544, 4294901760
    %1546 = vmatmul.mubr.f32.gmra.mrb[0].mxu0 %v1545
    %v1547 = vpop.f32.mrb[0].mxu0
    %v1548 = vadd.f32 0.0, %v1547
    %v1549 = vpop.f32.mrb[0].mxu0
    %1550 = vmatprep.mubr.f32.mxu0 0.0
    %v1551 = vand.u32 %v1390, 4294901760
    %v1552 = vsub.f32 %v1390, %v1551
    %v1553 = vand.u32 %v1552, 4294901760
    %v1554 = vsub.f32 %v1552, %v1553
    %v1555 = vand.u32 %v1554, 4294901760
    %1556 = vmatmul.mubr.f32.gmra.mrb[0].mxu0 %v1555
    %v1557 = vpop.f32.mrb[0].mxu0
    %v1558 = vadd.f32 0.0, %v1557
    %v1559 = vpop.f32.mrb[0].mxu0
    %1560 = vmatprep.mubr.f32.mxu0 0.0
    %v1561 = vand.u32 %v1393, 4294901760
    %v1562 = vsub.f32 %v1393, %v1561
    %v1563 = vand.u32 %v1562, 4294901760
    %v1564 = vsub.f32 %v1562, %v1563
    %v1565 = vand.u32 %v1564, 4294901760
    %1566 = vmatmul.mubr.f32.gmra.mrb[0].mxu0 %v1565
    %v1567 = vpop.f32.mrb[0].mxu0
    %v1568 = vadd.f32 0.0, %v1567
    %v1569 = vpop.f32.mrb[0].mxu0
    %1570 = vmatprep.mubr.f32.mxu0 0.0
    %v1571 = vand.u32 %v1396, 4294901760
    %v1572 = vsub.f32 %v1396, %v1571
    %v1573 = vand.u32 %v1572, 4294901760
    %v1574 = vsub.f32 %v1572, %v1573
    %v1575 = vand.u32 %v1574, 4294901760
    %1576 = vmatmul.mubr.f32.gmra.mrb[0].mxu0 %v1575
    %v1577 = vpop.f32.mrb[0].mxu0
    %v1578 = vadd.f32 0.0, %v1577
    %v1579 = vpop.f32.mrb[0].mxu0
    %1580 = vmatprep.mubr.f32.mxu0 0.0
    %v1581 = vand.u32 %v1399, 4294901760
    %v1582 = vsub.f32 %v1399, %v1581
    %v1583 = vand.u32 %v1582, 4294901760
    %v1584 = vsub.f32 %v1582, %v1583
    %v1585 = vand.u32 %v1584, 4294901760
    %1586 = vmatmul.mubr.f32.gmra.mrb[0].mxu0 %v1585
    %v1587 = vpop.f32.mrb[0].mxu0
    %v1588 = vadd.f32 0.0, %v1587
    %v1589 = vpop.f32.mrb[0].mxu0
    %1590 = vmatprep.mubr.f32.mxu0 0.0
    %v1591 = vand.u32 %v1402, 4294901760
    %v1592 = vsub.f32 %v1402, %v1591
    %v1593 = vand.u32 %v1592, 4294901760
    %v1594 = vsub.f32 %v1592, %v1593
    %v1595 = vand.u32 %v1594, 4294901760
    %1596 = vmatmul.mubr.f32.gmra.mrb[0].mxu0 %v1595
    %v1597 = vpop.f32.mrb[0].mxu0
    %v1598 = vadd.f32 0.0, %v1597
    %v1599 = vpop.f32.mrb[0].mxu0
    %1600 = vmatprep.mubr.f32.mxu0 0.0
    %v1601 = vand.u32 %v1405, 4294901760
    %v1602 = vsub.f32 %v1405, %v1601
    %v1603 = vand.u32 %v1602, 4294901760
    %v1604 = vsub.f32 %v1602, %v1603
    %v1605 = vand.u32 %v1604, 4294901760
    %1606 = vmatmul.mubr.f32.gmra.mrb[0].mxu0 %v1605
    %v1607 = vpop.f32.mrb[0].mxu0
    %v1608 = vadd.f32 0.0, %v1607
    %v1609 = vpop.f32.mrb[0].mxu0
    %1610 = vmatprep.mubr.f32.mxu0 0.0
    %v1611 = vand.u32 %v1408, 4294901760
    %v1612 = vsub.f32 %v1408, %v1611
    %v1613 = vand.u32 %v1612, 4294901760
    %v1614 = vsub.f32 %v1612, %v1613
    %v1615 = vand.u32 %v1614, 4294901760
    %1616 = vmatmul.mubr.f32.gmra.mrb[0].mxu0 %v1615
    %v1617 = vpop.f32.mrb[0].mxu0
    %v1618 = vadd.f32 0.0, %v1617
    %v1619 = vpop.f32.mrb[0].mxu0
    %1620 = vmatprep.mubr.f32.mxu0 0.0
    %v1621 = vand.u32 %v1411, 4294901760
    %v1622 = vsub.f32 %v1411, %v1621
    %v1623 = vand.u32 %v1622, 4294901760
    %v1624 = vsub.f32 %v1622, %v1623
    %v1625 = vand.u32 %v1624, 4294901760
    %1626 = vmatmul.mubr.f32.gmra.mrb[0].mxu0 %v1625
    %v1627 = vpop.f32.mrb[0].mxu0
    %v1628 = vadd.f32 0.0, %v1627
    %v1629 = vpop.f32.mrb[0].mxu0
    %1630 = vmatprep.mubr.f32.mxu0 0.0
    %v1631 = vand.u32 %v1414, 4294901760
    %v1632 = vsub.f32 %v1414, %v1631
    %v1633 = vand.u32 %v1632, 4294901760
    %v1634 = vsub.f32 %v1632, %v1633
    %v1635 = vand.u32 %v1634, 4294901760
    %1636 = vmatmul.mubr.f32.gmra.mrb[0].mxu0 %v1635
    %v1637 = vpop.f32.mrb[0].mxu0
    %v1638 = vadd.f32 0.0, %v1637
    %v1639 = vpop.f32.mrb[0].mxu0
    %1640 = vdwg.mxu0
    %1641 = vmatprep.subr.mxu0 0.0
    %1642 = vmatpush1.msra.mxu0 0.0
    %1643 = vmatprep.subr.mxu0 0.0
    %1644 = vmatpush1.msra.mxu0 0.0
    %1645 = vmatprep.subr.mxu0 0.0
    %1646 = vmatpush1.msra.mxu0 0.0
    %1647 = vmatprep.subr.mxu0 0.0
    %1648 = vmatpush1.msra.mxu0 0.0
    %1649 = vmatprep.subr.mxu0 0.0
    %1650 = vmatpush1.msra.mxu0 0.0
    %1651 = vmatprep.subr.mxu0 0.0
    %1652 = vmatpush1.msra.mxu0 0.0
    %1653 = vmatprep.subr.mxu0 0.0
    %1654 = vmatpush1.msra.mxu0 0.0
    %1655 = vmatprep.subr.mxu0 0.0
    %1656 = vmatpush1.msra.mxu0 0.0
    %1657 = vmatprep.subr.mxu0 0.0
    %1658 = vmatpush1.msra.mxu0 0.0
    %1659 = vmatprep.subr.mxu0 0.0
    %1660 = vmatpush1.msra.mxu0 0.0
    %1661 = vmatprep.subr.mxu0 0.0
    %1662 = vmatpush1.msra.mxu0 0.0
    %1663 = vmatprep.subr.mxu0 0.0
    %1664 = vmatpush1.msra.mxu0 0.0
    %1665 = vmatprep.subr.mxu0 0.0
    %1666 = vmatpush1.msra.mxu0 0.0
    %1667 = vmatprep.subr.mxu0 0.0
    %1668 = vmatpush1.msra.mxu0 0.0
    %1669 = vmatprep.subr.mxu0 0.0
    %1670 = vmatpush1.msra.mxu0 0.0
    %1671 = vmatprep.subr.mxu0 0.0
    %1672 = vmatpush1.msra.mxu0 0.0
    %1673 = vmatprep.subr.mxu0 0.0
    %1674 = vmatpush1.msra.mxu0 0.0
    %1675 = vmatprep.subr.mxu0 0.0
    %1676 = vmatpush1.msra.mxu0 0.0
    %1677 = vmatprep.subr.mxu0 0.0
    %1678 = vmatpush1.msra.mxu0 0.0
    %1679 = vmatprep.subr.mxu0 0.0
    %1680 = vmatpush1.msra.mxu0 0.0
    %1681 = vmatprep.subr.mxu0 0.0
    %1682 = vmatpush1.msra.mxu0 0.0
    %1683 = vmatprep.subr.mxu0 0.0
    %1684 = vmatpush1.msra.mxu0 0.0
    %1685 = vmatprep.subr.mxu0 0.0
    %1686 = vmatpush1.msra.mxu0 0.0
    %1687 = vmatprep.subr.mxu0 0.0
    %1688 = vmatpush1.msra.mxu0 0.0
    %1689 = vmatprep.subr.mxu0 0.0
    %1690 = vmatpush1.msra.mxu0 0.0
    %1691 = vmatprep.subr.mxu0 0.0
    %1692 = vmatpush1.msra.mxu0 0.0
    %1693 = vmatprep.subr.mxu0 0.0
    %1694 = vmatpush1.msra.mxu0 0.0
    %1695 = vmatprep.subr.mxu0 0.0
    %1696 = vmatpush1.msra.mxu0 0.0
    %1697 = vmatprep.subr.mxu0 0.0
    %1698 = vmatpush1.msra.mxu0 0.0
    %1699 = vmatprep.subr.mxu0 0.0
    %1700 = vmatpush1.msra.mxu0 0.0
    %1701 = vmatprep.subr.mxu0 0.0
    %1702 = vmatpush1.msra.mxu0 0.0
    %1703 = vmatprep.subr.mxu0 0.0
    %1704 = vmatpush1.msra.mxu0 0.0
    %1705 = vmatprep.mubr.f32.mxu0 0.0
    %v1706 = vand.u32 %v1369, 4294901760
    %1707 = vmatmul.mubr.f32.gmra.mrb[0].mxu0 %v1706
    %v1708 = vpop.f32.mrb[0].mxu0
    %v1709 = vadd.f32 %v1488, %v1708
    %v1710 = vpop.f32.mrb[0].mxu0
    %1711 = vmatprep.mubr.f32.mxu0 0.0
    %v1712 = vand.u32 %v1372, 4294901760
    %1713 = vmatmul.mubr.f32.gmra.mrb[0].mxu0 %v1712
    %v1714 = vpop.f32.mrb[0].mxu0
    %v1715 = vadd.f32 %v1498, %v1714
    %v1716 = vpop.f32.mrb[0].mxu0
    %1717 = vmatprep.mubr.f32.mxu0 0.0
    %v1718 = vand.u32 %v1375, 4294901760
    %1719 = vmatmul.mubr.f32.gmra.mrb[0].mxu0 %v1718
    %v1720 = vpop.f32.mrb[0].mxu0
    %v1721 = vadd.f32 %v1508, %v1720
    %v1722 = vpop.f32.mrb[0].mxu0
    %1723 = vmatprep.mubr.f32.mxu0 0.0
    %v1724 = vand.u32 %v1378, 4294901760
    %1725 = vmatmul.mubr.f32.gmra.mrb[0].mxu0 %v1724
    %v1726 = vpop.f32.mrb[0].mxu0
    %v1727 = vadd.f32 %v1518, %v1726
    %v1728 = vpop.f32.mrb[0].mxu0
    %1729 = vmatprep.mubr.f32.mxu0 0.0
    %v1730 = vand.u32 %v1381, 4294901760
    %1731 = vmatmul.mubr.f32.gmra.mrb[0].mxu0 %v1730
    %v1732 = vpop.f32.mrb[0].mxu0
    %v1733 = vadd.f32 %v1528, %v1732
    %v1734 = vpop.f32.mrb[0].mxu0
    %1735 = vmatprep.mubr.f32.mxu0 0.0
    %v1736 = vand.u32 %v1384, 4294901760
    %1737 = vmatmul.mubr.f32.gmra.mrb[0].mxu0 %v1736
    %v1738 = vpop.f32.mrb[0].mxu0
    %v1739 = vadd.f32 %v1538, %v1738
    %v1740 = vpop.f32.mrb[0].mxu0
    %1741 = vmatprep.mubr.f32.mxu0 0.0
    %v1742 = vand.u32 %v1387, 4294901760
    %1743 = vmatmul.mubr.f32.gmra.mrb[0].mxu0 %v1742
    %v1744 = vpop.f32.mrb[0].mxu0
    %v1745 = vadd.f32 %v1548, %v1744
    %v1746 = vpop.f32.mrb[0].mxu0
    %1747 = vmatprep.mubr.f32.mxu0 0.0
    %v1748 = vand.u32 %v1390, 4294901760
    %1749 = vmatmul.mubr.f32.gmra.mrb[0].mxu0 %v1748
    %v1750 = vpop.f32.mrb[0].mxu0
    %v1751 = vadd.f32 %v1558, %v1750
    %v1752 = vpop.f32.mrb[0].mxu0
    %1753 = vmatprep.mubr.f32.mxu0 0.0
    %v1754 = vand.u32 %v1393, 4294901760
    %1755 = vmatmul.mubr.f32.gmra.mrb[0].mxu0 %v1754
    %v1756 = vpop.f32.mrb[0].mxu0
    %v1757 = vadd.f32 %v1568, %v1756
    %v1758 = vpop.f32.mrb[0].mxu0
    %1759 = vmatprep.mubr.f32.mxu0 0.0
    %v1760 = vand.u32 %v1396, 4294901760
    %1761 = vmatmul.mubr.f32.gmra.mrb[0].mxu0 %v1760
    %v1762 = vpop.f32.mrb[0].mxu0
    %v1763 = vadd.f32 %v1578, %v1762
    %v1764 = vpop.f32.mrb[0].mxu0
    %1765 = vmatprep.mubr.f32.mxu0 0.0
    %v1766 = vand.u32 %v1399, 4294901760
    %1767 = vmatmul.mubr.f32.gmra.mrb[0].mxu0 %v1766
    %v1768 = vpop.f32.mrb[0].mxu0
    %v1769 = vadd.f32 %v1588, %v1768
    %v1770 = vpop.f32.mrb[0].mxu0
    %1771 = vmatprep.mubr.f32.mxu0 0.0
    %v1772 = vand.u32 %v1402, 4294901760
    %1773 = vmatmul.mubr.f32.gmra.mrb[0].mxu0 %v1772
    %v1774 = vpop.f32.mrb[0].mxu0
    %v1775 = vadd.f32 %v1598, %v1774
    %v1776 = vpop.f32.mrb[0].mxu0
    %1777 = vmatprep.mubr.f32.mxu0 0.0
    %v1778 = vand.u32 %v1405, 4294901760
    %1779 = vmatmul.mubr.f32.gmra.mrb[0].mxu0 %v1778
    %v1780 = vpop.f32.mrb[0].mxu0
    %v1781 = vadd.f32 %v1608, %v1780
    %v1782 = vpop.f32.mrb[0].mxu0
    %1783 = vmatprep.mubr.f32.mxu0 0.0
    %v1784 = vand.u32 %v1408, 4294901760
    %1785 = vmatmul.mubr.f32.gmra.mrb[0].mxu0 %v1784
    %v1786 = vpop.f32.mrb[0].mxu0
    %v1787 = vadd.f32 %v1618, %v1786
    %v1788 = vpop.f32.mrb[0].mxu0
    %1789 = vmatprep.mubr.f32.mxu0 0.0
    %v1790 = vand.u32 %v1411, 4294901760
    %1791 = vmatmul.mubr.f32.gmra.mrb[0].mxu0 %v1790
    %v1792 = vpop.f32.mrb[0].mxu0
    %v1793 = vadd.f32 %v1628, %v1792
    %v1794 = vpop.f32.mrb[0].mxu0
    %1795 = vmatprep.mubr.f32.mxu0 0.0
    %v1796 = vand.u32 %v1414, 4294901760
    %1797 = vmatmul.mubr.f32.gmra.mrb[0].mxu0 %v1796
    %v1798 = vpop.f32.mrb[0].mxu0
    %v1799 = vadd.f32 %v1638, %v1798
    %v1800 = vpop.f32.mrb[0].mxu0
    %1801 = vdwg.mxu0
    %1802 = vmatprep.subr.mxu0 0.0
    %1803 = vmatpush1.msra.mxu0 0.0
    %1804 = vmatprep.subr.mxu0 0.0
    %1805 = vmatpush1.msra.mxu0 0.0
    %1806 = vmatprep.subr.mxu0 0.0
    %1807 = vmatpush1.msra.mxu0 0.0
    %1808 = vmatprep.subr.mxu0 0.0
    %1809 = vmatpush1.msra.mxu0 0.0
    %1810 = vmatprep.subr.mxu0 0.0
    %1811 = vmatpush1.msra.mxu0 0.0
    %1812 = vmatprep.subr.mxu0 0.0
    %1813 = vmatpush1.msra.mxu0 0.0
    %1814 = vmatprep.subr.mxu0 0.0
    %1815 = vmatpush1.msra.mxu0 0.0
    %1816 = vmatprep.subr.mxu0 0.0
    %1817 = vmatpush1.msra.mxu0 0.0
    %1818 = vmatprep.subr.mxu0 0.0
    %1819 = vmatpush1.msra.mxu0 0.0
    %1820 = vmatprep.subr.mxu0 0.0
    %1821 = vmatpush1.msra.mxu0 0.0
    %1822 = vmatprep.subr.mxu0 0.0
    %1823 = vmatpush1.msra.mxu0 0.0
    %1824 = vmatprep.subr.mxu0 0.0
    %1825 = vmatpush1.msra.mxu0 0.0
    %1826 = vmatprep.subr.mxu0 0.0
    %1827 = vmatpush1.msra.mxu0 0.0
    %1828 = vmatprep.subr.mxu0 0.0
    %1829 = vmatpush1.msra.mxu0 0.0
    %1830 = vmatprep.subr.mxu0 0.0
    %1831 = vmatpush1.msra.mxu0 0.0
    %1832 = vmatprep.subr.mxu0 0.0
    %1833 = vmatpush1.msra.mxu0 0.0
    %1834 = vmatprep.subr.mxu0 0.0
    %1835 = vmatpush1.msra.mxu0 0.0
    %1836 = vmatprep.subr.mxu0 0.0
    %1837 = vmatpush1.msra.mxu0 0.0
    %1838 = vmatprep.subr.mxu0 0.0
    %1839 = vmatpush1.msra.mxu0 0.0
    %1840 = vmatprep.subr.mxu0 0.0
    %1841 = vmatpush1.msra.mxu0 0.0
    %1842 = vmatprep.subr.mxu0 0.0
    %1843 = vmatpush1.msra.mxu0 0.0
    %1844 = vmatprep.subr.mxu0 0.0
    %1845 = vmatpush1.msra.mxu0 0.0
    %1846 = vmatprep.subr.mxu0 0.0
    %1847 = vmatpush1.msra.mxu0 0.0
    %1848 = vmatprep.subr.mxu0 0.0
    %1849 = vmatpush1.msra.mxu0 0.0
    %1850 = vmatprep.subr.mxu0 0.0
    %1851 = vmatpush1.msra.mxu0 0.0
    %1852 = vmatprep.subr.mxu0 0.0
    %1853 = vmatpush1.msra.mxu0 0.0
    %1854 = vmatprep.subr.mxu0 0.0
    %1855 = vmatpush1.msra.mxu0 0.0
    %1856 = vmatprep.subr.mxu0 0.0
    %1857 = vmatpush1.msra.mxu0 0.0
    %1858 = vmatprep.subr.mxu0 0.0
    %1859 = vmatpush1.msra.mxu0 0.0
    %1860 = vmatprep.subr.mxu0 0.0
    %1861 = vmatpush1.msra.mxu0 0.0
    %1862 = vmatprep.subr.mxu0 0.0
    %1863 = vmatpush1.msra.mxu0 0.0
    %1864 = vmatprep.subr.mxu0 0.0
    %1865 = vmatpush1.msra.mxu0 0.0
    %1866 = vmatprep.mubr.f32.mxu0 0.0
    %v1867 = vand.u32 %v1369, 4294901760
    %v1868 = vsub.f32 %v1369, %v1867
    %1869 = vmatmul.mubr.f32.gmra.mrb[0].mxu0 %v1868
    %v1870 = vpop.f32.mrb[0].mxu0
    %v1871 = vadd.f32 %v1709, %v1870
    %v1872 = vpop.f32.mrb[0].mxu0
    %1873 = vmatprep.mubr.f32.mxu0 0.0
    %v1874 = vand.u32 %v1372, 4294901760
    %v1875 = vsub.f32 %v1372, %v1874
    %1876 = vmatmul.mubr.f32.gmra.mrb[0].mxu0 %v1875
    %v1877 = vpop.f32.mrb[0].mxu0
    %v1878 = vadd.f32 %v1715, %v1877
    %v1879 = vpop.f32.mrb[0].mxu0
    %1880 = vmatprep.mubr.f32.mxu0 0.0
    %v1881 = vand.u32 %v1375, 4294901760
    %v1882 = vsub.f32 %v1375, %v1881
    %1883 = vmatmul.mubr.f32.gmra.mrb[0].mxu0 %v1882
    %v1884 = vpop.f32.mrb[0].mxu0
    %v1885 = vadd.f32 %v1721, %v1884
    %v1886 = vpop.f32.mrb[0].mxu0
    %1887 = vmatprep.mubr.f32.mxu0 0.0
    %v1888 = vand.u32 %v1378, 4294901760
    %v1889 = vsub.f32 %v1378, %v1888
    %1890 = vmatmul.mubr.f32.gmra.mrb[0].mxu0 %v1889
    %v1891 = vpop.f32.mrb[0].mxu0
    %v1892 = vadd.f32 %v1727, %v1891
    %v1893 = vpop.f32.mrb[0].mxu0
    %1894 = vmatprep.mubr.f32.mxu0 0.0
    %v1895 = vand.u32 %v1381, 4294901760
    %v1896 = vsub.f32 %v1381, %v1895
    %1897 = vmatmul.mubr.f32.gmra.mrb[0].mxu0 %v1896
    %v1898 = vpop.f32.mrb[0].mxu0
    %v1899 = vadd.f32 %v1733, %v1898
    %v1900 = vpop.f32.mrb[0].mxu0
    %1901 = vmatprep.mubr.f32.mxu0 0.0
    %v1902 = vand.u32 %v1384, 4294901760
    %v1903 = vsub.f32 %v1384, %v1902
    %1904 = vmatmul.mubr.f32.gmra.mrb[0].mxu0 %v1903
    %v1905 = vpop.f32.mrb[0].mxu0
    %v1906 = vadd.f32 %v1739, %v1905
    %v1907 = vpop.f32.mrb[0].mxu0
    %1908 = vmatprep.mubr.f32.mxu0 0.0
    %v1909 = vand.u32 %v1387, 4294901760
    %v1910 = vsub.f32 %v1387, %v1909
    %1911 = vmatmul.mubr.f32.gmra.mrb[0].mxu0 %v1910
    %v1912 = vpop.f32.mrb[0].mxu0
    %v1913 = vadd.f32 %v1745, %v1912
    %v1914 = vpop.f32.mrb[0].mxu0
    %1915 = vmatprep.mubr.f32.mxu0 0.0
    %v1916 = vand.u32 %v1390, 4294901760
    %v1917 = vsub.f32 %v1390, %v1916
    %1918 = vmatmul.mubr.f32.gmra.mrb[0].mxu0 %v1917
    %v1919 = vpop.f32.mrb[0].mxu0
    %v1920 = vadd.f32 %v1751, %v1919
    %v1921 = vpop.f32.mrb[0].mxu0
    %1922 = vmatprep.mubr.f32.mxu0 0.0
    %v1923 = vand.u32 %v1393, 4294901760
    %v1924 = vsub.f32 %v1393, %v1923
    %1925 = vmatmul.mubr.f32.gmra.mrb[0].mxu0 %v1924
    %v1926 = vpop.f32.mrb[0].mxu0
    %v1927 = vadd.f32 %v1757, %v1926
    %v1928 = vpop.f32.mrb[0].mxu0
    %1929 = vmatprep.mubr.f32.mxu0 0.0
    %v1930 = vand.u32 %v1396, 4294901760
    %v1931 = vsub.f32 %v1396, %v1930
    %1932 = vmatmul.mubr.f32.gmra.mrb[0].mxu0 %v1931
    %v1933 = vpop.f32.mrb[0].mxu0
    %v1934 = vadd.f32 %v1763, %v1933
    %v1935 = vpop.f32.mrb[0].mxu0
    %1936 = vmatprep.mubr.f32.mxu0 0.0
    %v1937 = vand.u32 %v1399, 4294901760
    %v1938 = vsub.f32 %v1399, %v1937
    %1939 = vmatmul.mubr.f32.gmra.mrb[0].mxu0 %v1938
    %v1940 = vpop.f32.mrb[0].mxu0
    %v1941 = vadd.f32 %v1769, %v1940
    %v1942 = vpop.f32.mrb[0].mxu0
    %1943 = vmatprep.mubr.f32.mxu0 0.0
    %v1944 = vand.u32 %v1402, 4294901760
    %v1945 = vsub.f32 %v1402, %v1944
    %1946 = vmatmul.mubr.f32.gmra.mrb[0].mxu0 %v1945
    %v1947 = vpop.f32.mrb[0].mxu0
    %v1948 = vadd.f32 %v1775, %v1947
    %v1949 = vpop.f32.mrb[0].mxu0
    %1950 = vmatprep.mubr.f32.mxu0 0.0
    %v1951 = vand.u32 %v1405, 4294901760
    %v1952 = vsub.f32 %v1405, %v1951
    %1953 = vmatmul.mubr.f32.gmra.mrb[0].mxu0 %v1952
    %v1954 = vpop.f32.mrb[0].mxu0
    %v1955 = vadd.f32 %v1781, %v1954
    %v1956 = vpop.f32.mrb[0].mxu0
    %1957 = vmatprep.mubr.f32.mxu0 0.0
    %v1958 = vand.u32 %v1408, 4294901760
    %v1959 = vsub.f32 %v1408, %v1958
    %1960 = vmatmul.mubr.f32.gmra.mrb[0].mxu0 %v1959
    %v1961 = vpop.f32.mrb[0].mxu0
    %v1962 = vadd.f32 %v1787, %v1961
    %v1963 = vpop.f32.mrb[0].mxu0
    %1964 = vmatprep.mubr.f32.mxu0 0.0
    %v1965 = vand.u32 %v1411, 4294901760
    %v1966 = vsub.f32 %v1411, %v1965
    %1967 = vmatmul.mubr.f32.gmra.mrb[0].mxu0 %v1966
    %v1968 = vpop.f32.mrb[0].mxu0
    %v1969 = vadd.f32 %v1793, %v1968
    %v1970 = vpop.f32.mrb[0].mxu0
    %1971 = vmatprep.mubr.f32.mxu0 0.0
    %v1972 = vand.u32 %v1414, 4294901760
    %v1973 = vsub.f32 %v1414, %v1972
    %1974 = vmatmul.mubr.f32.gmra.mrb[0].mxu0 %v1973
    %v1975 = vpop.f32.mrb[0].mxu0
    %v1976 = vadd.f32 %v1799, %v1975
    %v1977 = vpop.f32.mrb[0].mxu0
    %1978 = vdwg.mxu0
    %1979 = vmatprep.subr.mxu0 0.0
    %1980 = vmatpush1.msra.mxu0 1.0
    %1981 = vmatprep.subr.mxu0 0.0
    %1982 = vmatpush1.msra.mxu0 1.0
    %1983 = vmatprep.subr.mxu0 0.0
    %1984 = vmatpush1.msra.mxu0 1.0
    %1985 = vmatprep.subr.mxu0 0.0
    %1986 = vmatpush1.msra.mxu0 1.0
    %1987 = vmatprep.subr.mxu0 0.0
    %1988 = vmatpush1.msra.mxu0 0.0
    %1989 = vmatprep.subr.mxu0 0.0
    %1990 = vmatpush1.msra.mxu0 0.0
    %1991 = vmatprep.subr.mxu0 0.0
    %1992 = vmatpush1.msra.mxu0 0.0
    %1993 = vmatprep.subr.mxu0 0.0
    %1994 = vmatpush1.msra.mxu0 0.0
    %1995 = vmatprep.subr.mxu0 0.0
    %1996 = vmatpush1.msra.mxu0 0.0
    %1997 = vmatprep.subr.mxu0 0.0
    %1998 = vmatpush1.msra.mxu0 0.0
    %1999 = vmatprep.subr.mxu0 0.0
    %2000 = vmatpush1.msra.mxu0 0.0
    %2001 = vmatprep.subr.mxu0 0.0
    %2002 = vmatpush1.msra.mxu0 0.0
    %2003 = vmatprep.subr.mxu0 0.0
    %2004 = vmatpush1.msra.mxu0 0.0
    %2005 = vmatprep.subr.mxu0 0.0
    %2006 = vmatpush1.msra.mxu0 0.0
    %2007 = vmatprep.subr.mxu0 0.0
    %2008 = vmatpush1.msra.mxu0 0.0
    %2009 = vmatprep.subr.mxu0 0.0
    %2010 = vmatpush1.msra.mxu0 0.0
    %2011 = vmatprep.subr.mxu0 0.0
    %2012 = vmatpush1.msra.mxu0 0.0
    %2013 = vmatprep.subr.mxu0 0.0
    %2014 = vmatpush1.msra.mxu0 0.0
    %2015 = vmatprep.subr.mxu0 0.0
    %2016 = vmatpush1.msra.mxu0 0.0
    %2017 = vmatprep.subr.mxu0 0.0
    %2018 = vmatpush1.msra.mxu0 0.0
    %2019 = vmatprep.subr.mxu0 0.0
    %2020 = vmatpush1.msra.mxu0 0.0
    %2021 = vmatprep.subr.mxu0 0.0
    %2022 = vmatpush1.msra.mxu0 0.0
    %2023 = vmatprep.subr.mxu0 0.0
    %2024 = vmatpush1.msra.mxu0 0.0
    %2025 = vmatprep.subr.mxu0 0.0
    %2026 = vmatpush1.msra.mxu0 0.0
    %2027 = vmatprep.subr.mxu0 0.0
    %2028 = vmatpush1.msra.mxu0 0.0
    %2029 = vmatprep.subr.mxu0 0.0
    %2030 = vmatpush1.msra.mxu0 0.0
    %2031 = vmatprep.subr.mxu0 0.0
    %2032 = vmatpush1.msra.mxu0 0.0
    %2033 = vmatprep.subr.mxu0 0.0
    %2034 = vmatpush1.msra.mxu0 0.0
    %2035 = vmatprep.subr.mxu0 0.0
    %2036 = vmatpush1.msra.mxu0 0.0
    %2037 = vmatprep.subr.mxu0 0.0
    %2038 = vmatpush1.msra.mxu0 0.0
    %2039 = vmatprep.subr.mxu0 0.0
    %2040 = vmatpush1.msra.mxu0 0.0
    %2041 = vmatprep.subr.mxu0 0.0
    %2042 = vmatpush1.msra.mxu0 0.0
    %2043 = vmatprep.mubr.f32.mxu0 0.0
    %v2044 = vand.u32 %v1369, 4294901760
    %v2045 = vsub.f32 %v1369, %v2044
    %v2046 = vand.u32 %v2045, 4294901760
    %2047 = vmatmul.mubr.f32.gmra.mrb[0].mxu0 %v2046
    %v2048 = vpop.f32.mrb[0].mxu0
    %v2049 = vadd.f32 %v1871, %v2048
    %v2050 = vpop.f32.mrb[0].mxu0
    %2051 = vmatprep.mubr.f32.mxu0 0.0
    %v2052 = vand.u32 %v1372, 4294901760
    %v2053 = vsub.f32 %v1372, %v2052
    %v2054 = vand.u32 %v2053, 4294901760
    %2055 = vmatmul.mubr.f32.gmra.mrb[0].mxu0 %v2054
    %v2056 = vpop.f32.mrb[0].mxu0
    %v2057 = vadd.f32 %v1878, %v2056
    %v2058 = vpop.f32.mrb[0].mxu0
    %2059 = vmatprep.mubr.f32.mxu0 0.0
    %v2060 = vand.u32 %v1375, 4294901760
    %v2061 = vsub.f32 %v1375, %v2060
    %v2062 = vand.u32 %v2061, 4294901760
    %2063 = vmatmul.mubr.f32.gmra.mrb[0].mxu0 %v2062
    %v2064 = vpop.f32.mrb[0].mxu0
    %v2065 = vadd.f32 %v1885, %v2064
    %v2066 = vpop.f32.mrb[0].mxu0
    %2067 = vmatprep.mubr.f32.mxu0 0.0
    %v2068 = vand.u32 %v1378, 4294901760
    %v2069 = vsub.f32 %v1378, %v2068
    %v2070 = vand.u32 %v2069, 4294901760
    %2071 = vmatmul.mubr.f32.gmra.mrb[0].mxu0 %v2070
    %v2072 = vpop.f32.mrb[0].mxu0
    %v2073 = vadd.f32 %v1892, %v2072
    %v2074 = vpop.f32.mrb[0].mxu0
    %2075 = vmatprep.mubr.f32.mxu0 0.0
    %v2076 = vand.u32 %v1381, 4294901760
    %v2077 = vsub.f32 %v1381, %v2076
    %v2078 = vand.u32 %v2077, 4294901760
    %2079 = vmatmul.mubr.f32.gmra.mrb[0].mxu0 %v2078
    %v2080 = vpop.f32.mrb[0].mxu0
    %v2081 = vadd.f32 %v1899, %v2080
    %v2082 = vpop.f32.mrb[0].mxu0
    %2083 = vmatprep.mubr.f32.mxu0 0.0
    %v2084 = vand.u32 %v1384, 4294901760
    %v2085 = vsub.f32 %v1384, %v2084
    %v2086 = vand.u32 %v2085, 4294901760
    %2087 = vmatmul.mubr.f32.gmra.mrb[0].mxu0 %v2086
    %v2088 = vpop.f32.mrb[0].mxu0
    %v2089 = vadd.f32 %v1906, %v2088
    %v2090 = vpop.f32.mrb[0].mxu0
    %2091 = vmatprep.mubr.f32.mxu0 0.0
    %v2092 = vand.u32 %v1387, 4294901760
    %v2093 = vsub.f32 %v1387, %v2092
    %v2094 = vand.u32 %v2093, 4294901760
    %2095 = vmatmul.mubr.f32.gmra.mrb[0].mxu0 %v2094
    %v2096 = vpop.f32.mrb[0].mxu0
    %v2097 = vadd.f32 %v1913, %v2096
    %v2098 = vpop.f32.mrb[0].mxu0
    %2099 = vmatprep.mubr.f32.mxu0 0.0
    %v2100 = vand.u32 %v1390, 4294901760
    %v2101 = vsub.f32 %v1390, %v2100
    %v2102 = vand.u32 %v2101, 4294901760
    %2103 = vmatmul.mubr.f32.gmra.mrb[0].mxu0 %v2102
    %v2104 = vpop.f32.mrb[0].mxu0
    %v2105 = vadd.f32 %v1920, %v2104
    %v2106 = vpop.f32.mrb[0].mxu0
    %2107 = vmatprep.mubr.f32.mxu0 0.0
    %v2108 = vand.u32 %v1393, 4294901760
    %v2109 = vsub.f32 %v1393, %v2108
    %v2110 = vand.u32 %v2109, 4294901760
    %2111 = vmatmul.mubr.f32.gmra.mrb[0].mxu0 %v2110
    %v2112 = vpop.f32.mrb[0].mxu0
    %v2113 = vadd.f32 %v1927, %v2112
    %v2114 = vpop.f32.mrb[0].mxu0
    %2115 = vmatprep.mubr.f32.mxu0 0.0
    %v2116 = vand.u32 %v1396, 4294901760
    %v2117 = vsub.f32 %v1396, %v2116
    %v2118 = vand.u32 %v2117, 4294901760
    %2119 = vmatmul.mubr.f32.gmra.mrb[0].mxu0 %v2118
    %v2120 = vpop.f32.mrb[0].mxu0
    %v2121 = vadd.f32 %v1934, %v2120
    %v2122 = vpop.f32.mrb[0].mxu0
    %2123 = vmatprep.mubr.f32.mxu0 0.0
    %v2124 = vand.u32 %v1399, 4294901760
    %v2125 = vsub.f32 %v1399, %v2124
    %v2126 = vand.u32 %v2125, 4294901760
    %2127 = vmatmul.mubr.f32.gmra.mrb[0].mxu0 %v2126
    %v2128 = vpop.f32.mrb[0].mxu0
    %v2129 = vadd.f32 %v1941, %v2128
    %v2130 = vpop.f32.mrb[0].mxu0
    %2131 = vmatprep.mubr.f32.mxu0 0.0
    %v2132 = vand.u32 %v1402, 4294901760
    %v2133 = vsub.f32 %v1402, %v2132
    %v2134 = vand.u32 %v2133, 4294901760
    %2135 = vmatmul.mubr.f32.gmra.mrb[0].mxu0 %v2134
    %v2136 = vpop.f32.mrb[0].mxu0
    %v2137 = vadd.f32 %v1948, %v2136
    %v2138 = vpop.f32.mrb[0].mxu0
    %2139 = vmatprep.mubr.f32.mxu0 0.0
    %v2140 = vand.u32 %v1405, 4294901760
    %v2141 = vsub.f32 %v1405, %v2140
    %v2142 = vand.u32 %v2141, 4294901760
    %2143 = vmatmul.mubr.f32.gmra.mrb[0].mxu0 %v2142
    %v2144 = vpop.f32.mrb[0].mxu0
    %v2145 = vadd.f32 %v1955, %v2144
    %v2146 = vpop.f32.mrb[0].mxu0
    %2147 = vmatprep.mubr.f32.mxu0 0.0
    %v2148 = vand.u32 %v1408, 4294901760
    %v2149 = vsub.f32 %v1408, %v2148
    %v2150 = vand.u32 %v2149, 4294901760
    %2151 = vmatmul.mubr.f32.gmra.mrb[0].mxu0 %v2150
    %v2152 = vpop.f32.mrb[0].mxu0
    %v2153 = vadd.f32 %v1962, %v2152
    %v2154 = vpop.f32.mrb[0].mxu0
    %2155 = vmatprep.mubr.f32.mxu0 0.0
    %v2156 = vand.u32 %v1411, 4294901760
    %v2157 = vsub.f32 %v1411, %v2156
    %v2158 = vand.u32 %v2157, 4294901760
    %2159 = vmatmul.mubr.f32.gmra.mrb[0].mxu0 %v2158
    %v2160 = vpop.f32.mrb[0].mxu0
    %v2161 = vadd.f32 %v1969, %v2160
    %v2162 = vpop.f32.mrb[0].mxu0
    %2163 = vmatprep.mubr.f32.mxu0 0.0
    %v2164 = vand.u32 %v1414, 4294901760
    %v2165 = vsub.f32 %v1414, %v2164
    %v2166 = vand.u32 %v2165, 4294901760
    %2167 = vmatmul.mubr.f32.gmra.mrb[0].mxu0 %v2166
    %v2168 = vpop.f32.mrb[0].mxu0
    %v2169 = vadd.f32 %v1976, %v2168
    %v2170 = vpop.f32.mrb[0].mxu0
    %2171 = vdwg.mxu0
    %2172 = vmatprep.subr.mxu0 0.0
    %2173 = vmatpush1.msra.mxu0 0.0
    %2174 = vmatprep.subr.mxu0 0.0
    %2175 = vmatpush1.msra.mxu0 0.0
    %2176 = vmatprep.subr.mxu0 0.0
    %2177 = vmatpush1.msra.mxu0 0.0
    %2178 = vmatprep.subr.mxu0 0.0
    %2179 = vmatpush1.msra.mxu0 0.0
    %2180 = vmatprep.subr.mxu0 0.0
    %2181 = vmatpush1.msra.mxu0 0.0
    %2182 = vmatprep.subr.mxu0 0.0
    %2183 = vmatpush1.msra.mxu0 0.0
    %2184 = vmatprep.subr.mxu0 0.0
    %2185 = vmatpush1.msra.mxu0 0.0
    %2186 = vmatprep.subr.mxu0 0.0
    %2187 = vmatpush1.msra.mxu0 0.0
    %2188 = vmatprep.subr.mxu0 0.0
    %2189 = vmatpush1.msra.mxu0 0.0
    %2190 = vmatprep.subr.mxu0 0.0
    %2191 = vmatpush1.msra.mxu0 0.0
    %2192 = vmatprep.subr.mxu0 0.0
    %2193 = vmatpush1.msra.mxu0 0.0
    %2194 = vmatprep.subr.mxu0 0.0
    %2195 = vmatpush1.msra.mxu0 0.0
    %2196 = vmatprep.subr.mxu0 0.0
    %2197 = vmatpush1.msra.mxu0 0.0
    %2198 = vmatprep.subr.mxu0 0.0
    %2199 = vmatpush1.msra.mxu0 0.0
    %2200 = vmatprep.subr.mxu0 0.0
    %2201 = vmatpush1.msra.mxu0 0.0
    %2202 = vmatprep.subr.mxu0 0.0
    %2203 = vmatpush1.msra.mxu0 0.0
    %2204 = vmatprep.subr.mxu0 0.0
    %2205 = vmatpush1.msra.mxu0 0.0
    %2206 = vmatprep.subr.mxu0 0.0
    %2207 = vmatpush1.msra.mxu0 0.0
    %2208 = vmatprep.subr.mxu0 0.0
    %2209 = vmatpush1.msra.mxu0 0.0
    %2210 = vmatprep.subr.mxu0 0.0
    %2211 = vmatpush1.msra.mxu0 0.0
    %2212 = vmatprep.subr.mxu0 0.0
    %2213 = vmatpush1.msra.mxu0 0.0
    %2214 = vmatprep.subr.mxu0 0.0
    %2215 = vmatpush1.msra.mxu0 0.0
    %2216 = vmatprep.subr.mxu0 0.0
    %2217 = vmatpush1.msra.mxu0 0.0
    %2218 = vmatprep.subr.mxu0 0.0
    %2219 = vmatpush1.msra.mxu0 0.0
    %2220 = vmatprep.subr.mxu0 0.0
    %2221 = vmatpush1.msra.mxu0 0.0
    %2222 = vmatprep.subr.mxu0 0.0
    %2223 = vmatpush1.msra.mxu0 0.0
    %2224 = vmatprep.subr.mxu0 0.0
    %2225 = vmatpush1.msra.mxu0 0.0
    %2226 = vmatprep.subr.mxu0 0.0
    %2227 = vmatpush1.msra.mxu0 0.0
    %2228 = vmatprep.subr.mxu0 0.0
    %2229 = vmatpush1.msra.mxu0 0.0
    %2230 = vmatprep.subr.mxu0 0.0
    %2231 = vmatpush1.msra.mxu0 0.0
    %2232 = vmatprep.subr.mxu0 0.0
    %2233 = vmatpush1.msra.mxu0 0.0
    %2234 = vmatprep.subr.mxu0 0.0
    %2235 = vmatpush1.msra.mxu0 0.0
    %2236 = vmatprep.mubr.f32.mxu0 0.0
    %v2237 = vand.u32 %v1369, 4294901760
    %2238 = vmatmul.mubr.f32.gmra.mrb[0].mxu0 %v2237
    %v2239 = vpop.f32.mrb[0].mxu0
    %v2240 = vadd.f32 %v2049, %v2239
    %v2241 = vpop.f32.mrb[0].mxu0
    %2242 = vmatprep.mubr.f32.mxu0 0.0
    %v2243 = vand.u32 %v1372, 4294901760
    %2244 = vmatmul.mubr.f32.gmra.mrb[0].mxu0 %v2243
    %v2245 = vpop.f32.mrb[0].mxu0
    %v2246 = vadd.f32 %v2057, %v2245
    %v2247 = vpop.f32.mrb[0].mxu0
    %2248 = vmatprep.mubr.f32.mxu0 0.0
    %v2249 = vand.u32 %v1375, 4294901760
    %2250 = vmatmul.mubr.f32.gmra.mrb[0].mxu0 %v2249
    %v2251 = vpop.f32.mrb[0].mxu0
    %v2252 = vadd.f32 %v2065, %v2251
    %v2253 = vpop.f32.mrb[0].mxu0
    %2254 = vmatprep.mubr.f32.mxu0 0.0
    %v2255 = vand.u32 %v1378, 4294901760
    %2256 = vmatmul.mubr.f32.gmra.mrb[0].mxu0 %v2255
    %v2257 = vpop.f32.mrb[0].mxu0
    %v2258 = vadd.f32 %v2073, %v2257
    %v2259 = vpop.f32.mrb[0].mxu0
    %2260 = vmatprep.mubr.f32.mxu0 0.0
    %v2261 = vand.u32 %v1381, 4294901760
    %2262 = vmatmul.mubr.f32.gmra.mrb[0].mxu0 %v2261
    %v2263 = vpop.f32.mrb[0].mxu0
    %v2264 = vadd.f32 %v2081, %v2263
    %v2265 = vpop.f32.mrb[0].mxu0
    %2266 = vmatprep.mubr.f32.mxu0 0.0
    %v2267 = vand.u32 %v1384, 4294901760
    %2268 = vmatmul.mubr.f32.gmra.mrb[0].mxu0 %v2267
    %v2269 = vpop.f32.mrb[0].mxu0
    %v2270 = vadd.f32 %v2089, %v2269
    %v2271 = vpop.f32.mrb[0].mxu0
    %2272 = vmatprep.mubr.f32.mxu0 0.0
    %v2273 = vand.u32 %v1387, 4294901760
    %2274 = vmatmul.mubr.f32.gmra.mrb[0].mxu0 %v2273
    %v2275 = vpop.f32.mrb[0].mxu0
    %v2276 = vadd.f32 %v2097, %v2275
    %v2277 = vpop.f32.mrb[0].mxu0
    %2278 = vmatprep.mubr.f32.mxu0 0.0
    %v2279 = vand.u32 %v1390, 4294901760
    %2280 = vmatmul.mubr.f32.gmra.mrb[0].mxu0 %v2279
    %v2281 = vpop.f32.mrb[0].mxu0
    %v2282 = vadd.f32 %v2105, %v2281
    %v2283 = vpop.f32.mrb[0].mxu0
    %2284 = vmatprep.mubr.f32.mxu0 0.0
    %v2285 = vand.u32 %v1393, 4294901760
    %2286 = vmatmul.mubr.f32.gmra.mrb[0].mxu0 %v2285
    %v2287 = vpop.f32.mrb[0].mxu0
    %v2288 = vadd.f32 %v2113, %v2287
    %v2289 = vpop.f32.mrb[0].mxu0
    %2290 = vmatprep.mubr.f32.mxu0 0.0
    %v2291 = vand.u32 %v1396, 4294901760
    %2292 = vmatmul.mubr.f32.gmra.mrb[0].mxu0 %v2291
    %v2293 = vpop.f32.mrb[0].mxu0
    %v2294 = vadd.f32 %v2121, %v2293
    %v2295 = vpop.f32.mrb[0].mxu0
    %2296 = vmatprep.mubr.f32.mxu0 0.0
    %v2297 = vand.u32 %v1399, 4294901760
    %2298 = vmatmul.mubr.f32.gmra.mrb[0].mxu0 %v2297
    %v2299 = vpop.f32.mrb[0].mxu0
    %v2300 = vadd.f32 %v2129, %v2299
    %v2301 = vpop.f32.mrb[0].mxu0
    %2302 = vmatprep.mubr.f32.mxu0 0.0
    %v2303 = vand.u32 %v1402, 4294901760
    %2304 = vmatmul.mubr.f32.gmra.mrb[0].mxu0 %v2303
    %v2305 = vpop.f32.mrb[0].mxu0
    %v2306 = vadd.f32 %v2137, %v2305
    %v2307 = vpop.f32.mrb[0].mxu0
    %2308 = vmatprep.mubr.f32.mxu0 0.0
    %v2309 = vand.u32 %v1405, 4294901760
    %2310 = vmatmul.mubr.f32.gmra.mrb[0].mxu0 %v2309
    %v2311 = vpop.f32.mrb[0].mxu0
    %v2312 = vadd.f32 %v2145, %v2311
    %v2313 = vpop.f32.mrb[0].mxu0
    %2314 = vmatprep.mubr.f32.mxu0 0.0
    %v2315 = vand.u32 %v1408, 4294901760
    %2316 = vmatmul.mubr.f32.gmra.mrb[0].mxu0 %v2315
    %v2317 = vpop.f32.mrb[0].mxu0
    %v2318 = vadd.f32 %v2153, %v2317
    %v2319 = vpop.f32.mrb[0].mxu0
    %2320 = vmatprep.mubr.f32.mxu0 0.0
    %v2321 = vand.u32 %v1411, 4294901760
    %2322 = vmatmul.mubr.f32.gmra.mrb[0].mxu0 %v2321
    %v2323 = vpop.f32.mrb[0].mxu0
    %v2324 = vadd.f32 %v2161, %v2323
    %v2325 = vpop.f32.mrb[0].mxu0
    %2326 = vmatprep.mubr.f32.mxu0 0.0
    %v2327 = vand.u32 %v1414, 4294901760
    %2328 = vmatmul.mubr.f32.gmra.mrb[0].mxu0 %v2327
    %v2329 = vpop.f32.mrb[0].mxu0
    %v2330 = vadd.f32 %v2169, %v2329
    %v2331 = vpop.f32.mrb[0].mxu0
    %2332 = vdwg.mxu0
    %2333 = vmatprep.subr.mxu0 0.0
    %2334 = vmatpush1.msra.mxu0 1.0
    %2335 = vmatprep.subr.mxu0 0.0
    %2336 = vmatpush1.msra.mxu0 1.0
    %2337 = vmatprep.subr.mxu0 0.0
    %2338 = vmatpush1.msra.mxu0 1.0
    %2339 = vmatprep.subr.mxu0 0.0
    %2340 = vmatpush1.msra.mxu0 1.0
    %2341 = vmatprep.subr.mxu0 0.0
    %2342 = vmatpush1.msra.mxu0 0.0
    %2343 = vmatprep.subr.mxu0 0.0
    %2344 = vmatpush1.msra.mxu0 0.0
    %2345 = vmatprep.subr.mxu0 0.0
    %2346 = vmatpush1.msra.mxu0 0.0
    %2347 = vmatprep.subr.mxu0 0.0
    %2348 = vmatpush1.msra.mxu0 0.0
    %2349 = vmatprep.subr.mxu0 0.0
    %2350 = vmatpush1.msra.mxu0 0.0
    %2351 = vmatprep.subr.mxu0 0.0
    %2352 = vmatpush1.msra.mxu0 0.0
    %2353 = vmatprep.subr.mxu0 0.0
    %2354 = vmatpush1.msra.mxu0 0.0
    %2355 = vmatprep.subr.mxu0 0.0
    %2356 = vmatpush1.msra.mxu0 0.0
    %2357 = vmatprep.subr.mxu0 0.0
    %2358 = vmatpush1.msra.mxu0 0.0
    %2359 = vmatprep.subr.mxu0 0.0
    %2360 = vmatpush1.msra.mxu0 0.0
    %2361 = vmatprep.subr.mxu0 0.0
    %2362 = vmatpush1.msra.mxu0 0.0
    %2363 = vmatprep.subr.mxu0 0.0
    %2364 = vmatpush1.msra.mxu0 0.0
    %2365 = vmatprep.subr.mxu0 0.0
    %2366 = vmatpush1.msra.mxu0 0.0
    %2367 = vmatprep.subr.mxu0 0.0
    %2368 = vmatpush1.msra.mxu0 0.0
    %2369 = vmatprep.subr.mxu0 0.0
    %2370 = vmatpush1.msra.mxu0 0.0
    %2371 = vmatprep.subr.mxu0 0.0
    %2372 = vmatpush1.msra.mxu0 0.0
    %2373 = vmatprep.subr.mxu0 0.0
    %2374 = vmatpush1.msra.mxu0 0.0
    %2375 = vmatprep.subr.mxu0 0.0
    %2376 = vmatpush1.msra.mxu0 0.0
    %2377 = vmatprep.subr.mxu0 0.0
    %2378 = vmatpush1.msra.mxu0 0.0
    %2379 = vmatprep.subr.mxu0 0.0
    %2380 = vmatpush1.msra.mxu0 0.0
    %2381 = vmatprep.subr.mxu0 0.0
    %2382 = vmatpush1.msra.mxu0 0.0
    %2383 = vmatprep.subr.mxu0 0.0
    %2384 = vmatpush1.msra.mxu0 0.0
    %2385 = vmatprep.subr.mxu0 0.0
    %2386 = vmatpush1.msra.mxu0 0.0
    %2387 = vmatprep.subr.mxu0 0.0
    %2388 = vmatpush1.msra.mxu0 0.0
    %2389 = vmatprep.subr.mxu0 0.0
    %2390 = vmatpush1.msra.mxu0 0.0
    %2391 = vmatprep.subr.mxu0 0.0
    %2392 = vmatpush1.msra.mxu0 0.0
    %2393 = vmatprep.subr.mxu0 0.0
    %2394 = vmatpush1.msra.mxu0 0.0
    %2395 = vmatprep.subr.mxu0 0.0
    %2396 = vmatpush1.msra.mxu0 0.0
    %2397 = vmatprep.mubr.f32.mxu0 0.0
    %v2398 = vand.u32 %v1369, 4294901760
    %2399 = vmatmul.mubr.f32.gmra.mrb[0].mxu0 %v2398
    %v2400 = vpop.f32.mrb[0].mxu0
    %v2401 = vadd.f32 %v2240, %v2400
    %v2402 = vpop.f32.mrb[0].mxu0
    %2403 = vmatprep.mubr.f32.mxu0 0.0
    %v2404 = vand.u32 %v1372, 4294901760
    %2405 = vmatmul.mubr.f32.gmra.mrb[0].mxu0 %v2404
    %v2406 = vpop.f32.mrb[0].mxu0
    %v2407 = vadd.f32 %v2246, %v2406
    %v2408 = vpop.f32.mrb[0].mxu0
    %2409 = vmatprep.mubr.f32.mxu0 0.0
    %v2410 = vand.u32 %v1375, 4294901760
    %2411 = vmatmul.mubr.f32.gmra.mrb[0].mxu0 %v2410
    %v2412 = vpop.f32.mrb[0].mxu0
    %v2413 = vadd.f32 %v2252, %v2412
    %v2414 = vpop.f32.mrb[0].mxu0
    %2415 = vmatprep.mubr.f32.mxu0 0.0
    %v2416 = vand.u32 %v1378, 4294901760
    %2417 = vmatmul.mubr.f32.gmra.mrb[0].mxu0 %v2416
    %v2418 = vpop.f32.mrb[0].mxu0
    %v2419 = vadd.f32 %v2258, %v2418
    %v2420 = vpop.f32.mrb[0].mxu0
    %2421 = vmatprep.mubr.f32.mxu0 0.0
    %v2422 = vand.u32 %v1381, 4294901760
    %2423 = vmatmul.mubr.f32.gmra.mrb[0].mxu0 %v2422
    %v2424 = vpop.f32.mrb[0].mxu0
    %v2425 = vadd.f32 %v2264, %v2424
    %v2426 = vpop.f32.mrb[0].mxu0
    %2427 = vmatprep.mubr.f32.mxu0 0.0
    %v2428 = vand.u32 %v1384, 4294901760
    %2429 = vmatmul.mubr.f32.gmra.mrb[0].mxu0 %v2428
    %v2430 = vpop.f32.mrb[0].mxu0
    %v2431 = vadd.f32 %v2270, %v2430
    %v2432 = vpop.f32.mrb[0].mxu0
    %2433 = vmatprep.mubr.f32.mxu0 0.0
    %v2434 = vand.u32 %v1387, 4294901760
    %2435 = vmatmul.mubr.f32.gmra.mrb[0].mxu0 %v2434
    %v2436 = vpop.f32.mrb[0].mxu0
    %v2437 = vadd.f32 %v2276, %v2436
    %v2438 = vpop.f32.mrb[0].mxu0
    %2439 = vmatprep.mubr.f32.mxu0 0.0
    %v2440 = vand.u32 %v1390, 4294901760
    %2441 = vmatmul.mubr.f32.gmra.mrb[0].mxu0 %v2440
    %v2442 = vpop.f32.mrb[0].mxu0
    %v2443 = vadd.f32 %v2282, %v2442
    %v2444 = vpop.f32.mrb[0].mxu0
    %2445 = vmatprep.mubr.f32.mxu0 0.0
    %v2446 = vand.u32 %v1393, 4294901760
    %2447 = vmatmul.mubr.f32.gmra.mrb[0].mxu0 %v2446
    %v2448 = vpop.f32.mrb[0].mxu0
    %v2449 = vadd.f32 %v2288, %v2448
    %v2450 = vpop.f32.mrb[0].mxu0
    %2451 = vmatprep.mubr.f32.mxu0 0.0
    %v2452 = vand.u32 %v1396, 4294901760
    %2453 = vmatmul.mubr.f32.gmra.mrb[0].mxu0 %v2452
    %v2454 = vpop.f32.mrb[0].mxu0
    %v2455 = vadd.f32 %v2294, %v2454
    %v2456 = vpop.f32.mrb[0].mxu0
    %2457 = vmatprep.mubr.f32.mxu0 0.0
    %v2458 = vand.u32 %v1399, 4294901760
    %2459 = vmatmul.mubr.f32.gmra.mrb[0].mxu0 %v2458
    %v2460 = vpop.f32.mrb[0].mxu0
    %v2461 = vadd.f32 %v2300, %v2460
    %v2462 = vpop.f32.mrb[0].mxu0
    %2463 = vmatprep.mubr.f32.mxu0 0.0
    %v2464 = vand.u32 %v1402, 4294901760
    %2465 = vmatmul.mubr.f32.gmra.mrb[0].mxu0 %v2464
    %v2466 = vpop.f32.mrb[0].mxu0
    %v2467 = vadd.f32 %v2306, %v2466
    %v2468 = vpop.f32.mrb[0].mxu0
    %2469 = vmatprep.mubr.f32.mxu0 0.0
    %v2470 = vand.u32 %v1405, 4294901760
    %2471 = vmatmul.mubr.f32.gmra.mrb[0].mxu0 %v2470
    %v2472 = vpop.f32.mrb[0].mxu0
    %v2473 = vadd.f32 %v2312, %v2472
    %v2474 = vpop.f32.mrb[0].mxu0
    %2475 = vmatprep.mubr.f32.mxu0 0.0
    %v2476 = vand.u32 %v1408, 4294901760
    %2477 = vmatmul.mubr.f32.gmra.mrb[0].mxu0 %v2476
    %v2478 = vpop.f32.mrb[0].mxu0
    %v2479 = vadd.f32 %v2318, %v2478
    %v2480 = vpop.f32.mrb[0].mxu0
    %2481 = vmatprep.mubr.f32.mxu0 0.0
    %v2482 = vand.u32 %v1411, 4294901760
    %2483 = vmatmul.mubr.f32.gmra.mrb[0].mxu0 %v2482
    %v2484 = vpop.f32.mrb[0].mxu0
    %v2485 = vadd.f32 %v2324, %v2484
    %v2486 = vpop.f32.mrb[0].mxu0
    %2487 = vmatprep.mubr.f32.mxu0 0.0
    %v2488 = vand.u32 %v1414, 4294901760
    %2489 = vmatmul.mubr.f32.gmra.mrb[0].mxu0 %v2488
    %v2490 = vpop.f32.mrb[0].mxu0
    %v2491 = vadd.f32 %v2330, %v2490
    %v2492 = vpop.f32.mrb[0].mxu0
    %2493 = vdwg.mxu0
    %v2494 = vmul.f32 %v1259, 20.0
    %v2495 = vmul.f32 %v1265, 20.0
    %v2496 = vmul.f32 %v1271, 20.0
    %v2497 = vmul.f32 %v1277, 20.0
    %v2498 = vmul.f32 %v1283, 20.0
    %v2499 = vmul.f32 %v1289, 20.0
    %v2500 = vmul.f32 %v1295, 20.0
    %v2501 = vmul.f32 %v1301, 20.0
    %v2502 = vmul.f32 %v1307, 20.0
    %v2503 = vmul.f32 %v1313, 20.0
    %v2504 = vmul.f32 %v1319, 20.0
    %v2505 = vmul.f32 %v1325, 20.0
    %v2506 = vmul.f32 %v1331, 20.0
    %v2507 = vmul.f32 %v1337, 20.0
    %v2508 = vmul.f32 %v1343, 20.0
    %v2509 = vmul.f32 %v1349, 20.0
    %v2510 = vmul.f32 %v2401, 20.0
    %v2511 = vmul.f32 %v2407, 20.0
    %v2512 = vmul.f32 %v2413, 20.0
    %v2513 = vmul.f32 %v2419, 20.0
    %v2514 = vmul.f32 %v2425, 20.0
    %v2515 = vmul.f32 %v2431, 20.0
    %v2516 = vmul.f32 %v2437, 20.0
    %v2517 = vmul.f32 %v2443, 20.0
    %v2518 = vmul.f32 %v2449, 20.0
    %v2519 = vmul.f32 %v2455, 20.0
    %v2520 = vmul.f32 %v2461, 20.0
    %v2521 = vmul.f32 %v2467, 20.0
    %v2522 = vmul.f32 %v2473, 20.0
    %v2523 = vmul.f32 %v2479, 20.0
    %v2524 = vmul.f32 %v2485, 20.0
    %v2525 = vmul.f32 %v2491, 20.0
    %v2526 = vlaneseq
    %v2527 = vshrl.u32 %v2526, 7
    %v2528 = vmul.u32 %v2527, 128
    %v2529 = vlaneseq
    %v2530 = vand.u32 %v2529, 127
    %v2531 = vadd.s32 %v2528, %v2530
    %s2532 = sadd.s32 0, 0
    %s2533 = smul.u32 %s2532, 128
    %v2534 = vstv %s2533
    %v2535 = vadd.s32 %v2534, %v2531
    %vm2536 = vcmp.lt.s32.totalorder %v2535, 16
    %v2537 = vld [vmem:[#allocation9] sm:$0x1]
    %v2538 = vsel %vm2536, %v2537, 0.0
    %v2539 = vsub.f32 0.0, %v2494
    %v2540 = vsub.f32 0.0, %v2495
    %v2541 = vsub.f32 0.0, %v2496
    %v2542 = vsub.f32 0.0, %v2497
    %v2543 = vsub.f32 0.0, %v2498
    %v2544 = vsub.f32 0.0, %v2499
    %v2545 = vsub.f32 0.0, %v2500
    %v2546 = vsub.f32 0.0, %v2501
    %v2547 = vsub.f32 0.0, %v2502
    %v2548 = vsub.f32 0.0, %v2503
    %v2549 = vsub.f32 0.0, %v2504
    %v2550 = vsub.f32 0.0, %v2505
    %v2551 = vsub.f32 0.0, %v2506
    %v2552 = vsub.f32 0.0, %v2507
    %v2553 = vsub.f32 0.0, %v2508
    %v2554 = vsub.f32 0.0, %v2509
    %v2555 = vmax.f32 %v2539, 0.0
    %v2556 = vmax.f32 %v2540, 0.0
    %v2557 = vmax.f32 %v2541, 0.0
    %v2558 = vmax.f32 %v2542, 0.0
    %v2559 = vmax.f32 %v2543, 0.0
    %v2560 = vmax.f32 %v2544, 0.0
    %v2561 = vmax.f32 %v2545, 0.0
    %v2562 = vmax.f32 %v2546, 0.0
    %v2563 = vmax.f32 %v2547, 0.0
    %v2564 = vmax.f32 %v2548, 0.0
    %v2565 = vmax.f32 %v2549, 0.0
    %v2566 = vmax.f32 %v2550, 0.0
    %v2567 = vmax.f32 %v2551, 0.0
    %v2568 = vmax.f32 %v2552, 0.0
    %v2569 = vmax.f32 %v2553, 0.0
    %v2570 = vmax.f32 %v2554, 0.0
    %vm2571 = vcmp.ne.f32.partialorder %v2539, %v2539
    %vm2572 = vcmp.ne.f32.partialorder %v2540, %v2540
    %vm2573 = vcmp.ne.f32.partialorder %v2541, %v2541
    %vm2574 = vcmp.ne.f32.partialorder %v2542, %v2542
    %vm2575 = vcmp.ne.f32.partialorder %v2543, %v2543
    %vm2576 = vcmp.ne.f32.partialorder %v2544, %v2544
    %vm2577 = vcmp.ne.f32.partialorder %v2545, %v2545
    %vm2578 = vcmp.ne.f32.partialorder %v2546, %v2546
    %vm2579 = vcmp.ne.f32.partialorder %v2547, %v2547
    %vm2580 = vcmp.ne.f32.partialorder %v2548, %v2548
    %vm2581 = vcmp.ne.f32.partialorder %v2549, %v2549
    %vm2582 = vcmp.ne.f32.partialorder %v2550, %v2550
    %vm2583 = vcmp.ne.f32.partialorder %v2551, %v2551
    %vm2584 = vcmp.ne.f32.partialorder %v2552, %v2552
    %vm2585 = vcmp.ne.f32.partialorder %v2553, %v2553
    %vm2586 = vcmp.ne.f32.partialorder %v2554, %v2554
    %v2587 = vadd.f32 %v2539, 0.0
    %v2588 = vadd.f32 %v2540, 0.0
    %v2589 = vadd.f32 %v2541, 0.0
    %v2590 = vadd.f32 %v2542, 0.0
    %v2591 = vadd.f32 %v2543, 0.0
    %v2592 = vadd.f32 %v2544, 0.0
    %v2593 = vadd.f32 %v2545, 0.0
    %v2594 = vadd.f32 %v2546, 0.0
    %v2595 = vadd.f32 %v2547, 0.0
    %v2596 = vadd.f32 %v2548, 0.0
    %v2597 = vadd.f32 %v2549, 0.0
    %v2598 = vadd.f32 %v2550, 0.0
    %v2599 = vadd.f32 %v2551, 0.0
    %v2600 = vadd.f32 %v2552, 0.0
    %v2601 = vadd.f32 %v2553, 0.0
    %v2602 = vadd.f32 %v2554, 0.0
    %v2603 = vand.u32 2147483647, %v2539
    %v2604 = vand.u32 2147483647, %v2540
    %v2605 = vand.u32 2147483647, %v2541
    %v2606 = vand.u32 2147483647, %v2542
    %v2607 = vand.u32 2147483647, %v2543
    %v2608 = vand.u32 2147483647, %v2544
    %v2609 = vand.u32 2147483647, %v2545
    %v2610 = vand.u32 2147483647, %v2546
    %v2611 = vand.u32 2147483647, %v2547
    %v2612 = vand.u32 2147483647, %v2548
    %v2613 = vand.u32 2147483647, %v2549
    %v2614 = vand.u32 2147483647, %v2550
    %v2615 = vand.u32 2147483647, %v2551
    %v2616 = vand.u32 2147483647, %v2552
    %v2617 = vand.u32 2147483647, %v2553
    %v2618 = vand.u32 2147483647, %v2554
    %v2619 = vsub.f32 0.0, %v2603
    %v2620 = vsub.f32 0.0, %v2604
    %v2621 = vsub.f32 0.0, %v2605
    %v2622 = vsub.f32 0.0, %v2606
    %v2623 = vsub.f32 0.0, %v2607
    %v2624 = vsub.f32 0.0, %v2608
    %v2625 = vsub.f32 0.0, %v2609
    %v2626 = vsub.f32 0.0, %v2610
    %v2627 = vsub.f32 0.0, %v2611
    %v2628 = vsub.f32 0.0, %v2612
    %v2629 = vsub.f32 0.0, %v2613
    %v2630 = vsub.f32 0.0, %v2614
    %v2631 = vsub.f32 0.0, %v2615
    %v2632 = vsub.f32 0.0, %v2616
    %v2633 = vsub.f32 0.0, %v2617
    %v2634 = vsub.f32 0.0, %v2618
    %v2635 = vmul.f32 %v2619, 1.442695
    %v2636 = vpow.pop %v2635
    %v2637 = vmul.f32 %v2620, 1.442695
    %v2638 = vpow.pop %v2637
    %v2639 = vmul.f32 %v2621, 1.442695
    %v2640 = vpow.pop %v2639
    %v2641 = vmul.f32 %v2622, 1.442695
    %v2642 = vpow.pop %v2641
    %v2643 = vmul.f32 %v2623, 1.442695
    %v2644 = vpow.pop %v2643
    %v2645 = vmul.f32 %v2624, 1.442695
    %v2646 = vpow.pop %v2645
    %v2647 = vmul.f32 %v2625, 1.442695
    %v2648 = vpow.pop %v2647
    %v2649 = vmul.f32 %v2626, 1.442695
    %v2650 = vpow.pop %v2649
    %v2651 = vmul.f32 %v2627, 1.442695
    %v2652 = vpow.pop %v2651
    %v2653 = vmul.f32 %v2628, 1.442695
    %v2654 = vpow.pop %v2653
    %v2655 = vmul.f32 %v2629, 1.442695
    %v2656 = vpow.pop %v2655
    %v2657 = vmul.f32 %v2630, 1.442695
    %v2658 = vpow.pop %v2657
    %v2659 = vmul.f32 %v2631, 1.442695
    %v2660 = vpow.pop %v2659
    %v2661 = vmul.f32 %v2632, 1.442695
    %v2662 = vpow.pop %v2661
    %v2663 = vmul.f32 %v2633, 1.442695
    %v2664 = vpow.pop %v2663
    %v2665 = vmul.f32 %v2634, 1.442695
    %v2666 = vpow.pop %v2665
    %v2667 = vadd.f32 %v2636, 1.0
    %v2668 = vlog2.pop %v2667
    %v2669 = vmul.f32 %v2668, 0.6931472
    %v2670 = vmul.f32 -0.5, %v2636
    %v2671 = vadd.f32 %v2670, 1.0
    %v2672 = vmul.f32 %v2671, %v2636
    %v2673 = vand.u32 2147483647, %v2636
    %vm2674 = vcmp.lt.f32.partialorder %v2673, 0.0004427343
    %v2675 = vsel %vm2674, %v2672, %v2669
    %v2676 = vadd.f32 %v2638, 1.0
    %v2677 = vlog2.pop %v2676
    %v2678 = vmul.f32 %v2677, 0.6931472
    %v2679 = vmul.f32 -0.5, %v2638
    %v2680 = vadd.f32 %v2679, 1.0
    %v2681 = vmul.f32 %v2680, %v2638
    %v2682 = vand.u32 2147483647, %v2638
    %vm2683 = vcmp.lt.f32.partialorder %v2682, 0.0004427343
    %v2684 = vsel %vm2683, %v2681, %v2678
    %v2685 = vadd.f32 %v2640, 1.0
    %v2686 = vlog2.pop %v2685
    %v2687 = vmul.f32 %v2686, 0.6931472
    %v2688 = vmul.f32 -0.5, %v2640
    %v2689 = vadd.f32 %v2688, 1.0
    %v2690 = vmul.f32 %v2689, %v2640
    %v2691 = vand.u32 2147483647, %v2640
    %vm2692 = vcmp.lt.f32.partialorder %v2691, 0.0004427343
    %v2693 = vsel %vm2692, %v2690, %v2687
    %v2694 = vadd.f32 %v2642, 1.0
    %v2695 = vlog2.pop %v2694
    %v2696 = vmul.f32 %v2695, 0.6931472
    %v2697 = vmul.f32 -0.5, %v2642
    %v2698 = vadd.f32 %v2697, 1.0
    %v2699 = vmul.f32 %v2698, %v2642
    %v2700 = vand.u32 2147483647, %v2642
    %vm2701 = vcmp.lt.f32.partialorder %v2700, 0.0004427343
    %v2702 = vsel %vm2701, %v2699, %v2696
    %v2703 = vadd.f32 %v2644, 1.0
    %v2704 = vlog2.pop %v2703
    %v2705 = vmul.f32 %v2704, 0.6931472
    %v2706 = vmul.f32 -0.5, %v2644
    %v2707 = vadd.f32 %v2706, 1.0
    %v2708 = vmul.f32 %v2707, %v2644
    %v2709 = vand.u32 2147483647, %v2644
    %vm2710 = vcmp.lt.f32.partialorder %v2709, 0.0004427343
    %v2711 = vsel %vm2710, %v2708, %v2705
    %v2712 = vadd.f32 %v2646, 1.0
    %v2713 = vlog2.pop %v2712
    %v2714 = vmul.f32 %v2713, 0.6931472
    %v2715 = vmul.f32 -0.5, %v2646
    %v2716 = vadd.f32 %v2715, 1.0
    %v2717 = vmul.f32 %v2716, %v2646
    %v2718 = vand.u32 2147483647, %v2646
    %vm2719 = vcmp.lt.f32.partialorder %v2718, 0.0004427343
    %v2720 = vsel %vm2719, %v2717, %v2714
    %v2721 = vadd.f32 %v2648, 1.0
    %v2722 = vlog2.pop %v2721
    %v2723 = vmul.f32 %v2722, 0.6931472
    %v2724 = vmul.f32 -0.5, %v2648
    %v2725 = vadd.f32 %v2724, 1.0
    %v2726 = vmul.f32 %v2725, %v2648
    %v2727 = vand.u32 2147483647, %v2648
    %vm2728 = vcmp.lt.f32.partialorder %v2727, 0.0004427343
    %v2729 = vsel %vm2728, %v2726, %v2723
    %v2730 = vadd.f32 %v2650, 1.0
    %v2731 = vlog2.pop %v2730
    %v2732 = vmul.f32 %v2731, 0.6931472
    %v2733 = vmul.f32 -0.5, %v2650
    %v2734 = vadd.f32 %v2733, 1.0
    %v2735 = vmul.f32 %v2734, %v2650
    %v2736 = vand.u32 2147483647, %v2650
    %vm2737 = vcmp.lt.f32.partialorder %v2736, 0.0004427343
    %v2738 = vsel %vm2737, %v2735, %v2732
    %v2739 = vadd.f32 %v2652, 1.0
    %v2740 = vlog2.pop %v2739
    %v2741 = vmul.f32 %v2740, 0.6931472
    %v2742 = vmul.f32 -0.5, %v2652
    %v2743 = vadd.f32 %v2742, 1.0
    %v2744 = vmul.f32 %v2743, %v2652
    %v2745 = vand.u32 2147483647, %v2652
    %vm2746 = vcmp.lt.f32.partialorder %v2745, 0.0004427343
    %v2747 = vsel %vm2746, %v2744, %v2741
    %v2748 = vadd.f32 %v2654, 1.0
    %v2749 = vlog2.pop %v2748
    %v2750 = vmul.f32 %v2749, 0.6931472
    %v2751 = vmul.f32 -0.5, %v2654
    %v2752 = vadd.f32 %v2751, 1.0
    %v2753 = vmul.f32 %v2752, %v2654
    %v2754 = vand.u32 2147483647, %v2654
    %vm2755 = vcmp.lt.f32.partialorder %v2754, 0.0004427343
    %v2756 = vsel %vm2755, %v2753, %v2750
    %v2757 = vadd.f32 %v2656, 1.0
    %v2758 = vlog2.pop %v2757
    %v2759 = vmul.f32 %v2758, 0.6931472
    %v2760 = vmul.f32 -0.5, %v2656
    %v2761 = vadd.f32 %v2760, 1.0
    %v2762 = vmul.f32 %v2761, %v2656
    %v2763 = vand.u32 2147483647, %v2656
    %vm2764 = vcmp.lt.f32.partialorder %v2763, 0.0004427343
    %v2765 = vsel %vm2764, %v2762, %v2759
    %v2766 = vadd.f32 %v2658, 1.0
    %v2767 = vlog2.pop %v2766
    %v2768 = vmul.f32 %v2767, 0.6931472
    %v2769 = vmul.f32 -0.5, %v2658
    %v2770 = vadd.f32 %v2769, 1.0
    %v2771 = vmul.f32 %v2770, %v2658
    %v2772 = vand.u32 2147483647, %v2658
    %vm2773 = vcmp.lt.f32.partialorder %v2772, 0.0004427343
    %v2774 = vsel %vm2773, %v2771, %v2768
    %v2775 = vadd.f32 %v2660, 1.0
    %v2776 = vlog2.pop %v2775
    %v2777 = vmul.f32 %v2776, 0.6931472
    %v2778 = vmul.f32 -0.5, %v2660
    %v2779 = vadd.f32 %v2778, 1.0
    %v2780 = vmul.f32 %v2779, %v2660
    %v2781 = vand.u32 2147483647, %v2660
    %vm2782 = vcmp.lt.f32.partialorder %v2781, 0.0004427343
    %v2783 = vsel %vm2782, %v2780, %v2777
    %v2784 = vadd.f32 %v2662, 1.0
    %v2785 = vlog2.pop %v2784
    %v2786 = vmul.f32 %v2785, 0.6931472
    %v2787 = vmul.f32 -0.5, %v2662
    %v2788 = vadd.f32 %v2787, 1.0
    %v2789 = vmul.f32 %v2788, %v2662
    %v2790 = vand.u32 2147483647, %v2662
    %vm2791 = vcmp.lt.f32.partialorder %v2790, 0.0004427343
    %v2792 = vsel %vm2791, %v2789, %v2786
    %v2793 = vadd.f32 %v2664, 1.0
    %v2794 = vlog2.pop %v2793
    %v2795 = vmul.f32 %v2794, 0.6931472
    %v2796 = vmul.f32 -0.5, %v2664
    %v2797 = vadd.f32 %v2796, 1.0
    %v2798 = vmul.f32 %v2797, %v2664
    %v2799 = vand.u32 2147483647, %v2664
    %vm2800 = vcmp.lt.f32.partialorder %v2799, 0.0004427343
    %v2801 = vsel %vm2800, %v2798, %v2795
    %v2802 = vadd.f32 %v2666, 1.0
    %v2803 = vlog2.pop %v2802
    %v2804 = vmul.f32 %v2803, 0.6931472
    %v2805 = vmul.f32 -0.5, %v2666
    %v2806 = vadd.f32 %v2805, 1.0
    %v2807 = vmul.f32 %v2806, %v2666
    %v2808 = vand.u32 2147483647, %v2666
    %vm2809 = vcmp.lt.f32.partialorder %v2808, 0.0004427343
    %v2810 = vsel %vm2809, %v2807, %v2804
    %v2811 = vadd.f32 %v2555, %v2675
    %v2812 = vadd.f32 %v2556, %v2684
    %v2813 = vadd.f32 %v2557, %v2693
    %v2814 = vadd.f32 %v2558, %v2702
    %v2815 = vadd.f32 %v2559, %v2711
    %v2816 = vadd.f32 %v2560, %v2720
    %v2817 = vadd.f32 %v2561, %v2729
    %v2818 = vadd.f32 %v2562, %v2738
    %v2819 = vadd.f32 %v2563, %v2747
    %v2820 = vadd.f32 %v2564, %v2756
    %v2821 = vadd.f32 %v2565, %v2765
    %v2822 = vadd.f32 %v2566, %v2774
    %v2823 = vadd.f32 %v2567, %v2783
    %v2824 = vadd.f32 %v2568, %v2792
    %v2825 = vadd.f32 %v2569, %v2801
    %v2826 = vadd.f32 %v2570, %v2810
    %v2827 = vsel %vm2571, %v2587, %v2811
    %v2828 = vsel %vm2572, %v2588, %v2812
    %v2829 = vsel %vm2573, %v2589, %v2813
    %v2830 = vsel %vm2574, %v2590, %v2814
    %v2831 = vsel %vm2575, %v2591, %v2815
    %v2832 = vsel %vm2576, %v2592, %v2816
    %v2833 = vsel %vm2577, %v2593, %v2817
    %v2834 = vsel %vm2578, %v2594, %v2818
    %v2835 = vsel %vm2579, %v2595, %v2819
    %v2836 = vsel %vm2580, %v2596, %v2820
    %v2837 = vsel %vm2581, %v2597, %v2821
    %v2838 = vsel %vm2582, %v2598, %v2822
    %v2839 = vsel %vm2583, %v2599, %v2823
    %v2840 = vsel %vm2584, %v2600, %v2824
    %v2841 = vsel %vm2585, %v2601, %v2825
    %v2842 = vsel %vm2586, %v2602, %v2826
    %v2843 = vmax.f32 %v2510, 0.0
    %v2844 = vmax.f32 %v2511, 0.0
    %v2845 = vmax.f32 %v2512, 0.0
    %v2846 = vmax.f32 %v2513, 0.0
    %v2847 = vmax.f32 %v2514, 0.0
    %v2848 = vmax.f32 %v2515, 0.0
    %v2849 = vmax.f32 %v2516, 0.0
    %v2850 = vmax.f32 %v2517, 0.0
    %v2851 = vmax.f32 %v2518, 0.0
    %v2852 = vmax.f32 %v2519, 0.0
    %v2853 = vmax.f32 %v2520, 0.0
    %v2854 = vmax.f32 %v2521, 0.0
    %v2855 = vmax.f32 %v2522, 0.0
    %v2856 = vmax.f32 %v2523, 0.0
    %v2857 = vmax.f32 %v2524, 0.0
    %v2858 = vmax.f32 %v2525, 0.0
    %vm2859 = vcmp.ne.f32.partialorder %v2510, %v2510
    %vm2860 = vcmp.ne.f32.partialorder %v2511, %v2511
    %vm2861 = vcmp.ne.f32.partialorder %v2512, %v2512
    %vm2862 = vcmp.ne.f32.partialorder %v2513, %v2513
    %vm2863 = vcmp.ne.f32.partialorder %v2514, %v2514
    %vm2864 = vcmp.ne.f32.partialorder %v2515, %v2515
    %vm2865 = vcmp.ne.f32.partialorder %v2516, %v2516
    %vm2866 = vcmp.ne.f32.partialorder %v2517, %v2517
    %vm2867 = vcmp.ne.f32.partialorder %v2518, %v2518
    %vm2868 = vcmp.ne.f32.partialorder %v2519, %v2519
    %vm2869 = vcmp.ne.f32.partialorder %v2520, %v2520
    %vm2870 = vcmp.ne.f32.partialorder %v2521, %v2521
    %vm2871 = vcmp.ne.f32.partialorder %v2522, %v2522
    %vm2872 = vcmp.ne.f32.partialorder %v2523, %v2523
    %vm2873 = vcmp.ne.f32.partialorder %v2524, %v2524
    %vm2874 = vcmp.ne.f32.partialorder %v2525, %v2525
    %v2875 = vadd.f32 %v2510, 0.0
    %v2876 = vadd.f32 %v2511, 0.0
    %v2877 = vadd.f32 %v2512, 0.0
    %v2878 = vadd.f32 %v2513, 0.0
    %v2879 = vadd.f32 %v2514, 0.0
    %v2880 = vadd.f32 %v2515, 0.0
    %v2881 = vadd.f32 %v2516, 0.0
    %v2882 = vadd.f32 %v2517, 0.0
    %v2883 = vadd.f32 %v2518, 0.0
    %v2884 = vadd.f32 %v2519, 0.0
    %v2885 = vadd.f32 %v2520, 0.0
    %v2886 = vadd.f32 %v2521, 0.0
    %v2887 = vadd.f32 %v2522, 0.0
    %v2888 = vadd.f32 %v2523, 0.0
    %v2889 = vadd.f32 %v2524, 0.0
    %v2890 = vadd.f32 %v2525, 0.0
    %v2891 = vand.u32 2147483647, %v2510
    %v2892 = vand.u32 2147483647, %v2511
    %v2893 = vand.u32 2147483647, %v2512
    %v2894 = vand.u32 2147483647, %v2513
    %v2895 = vand.u32 2147483647, %v2514
    %v2896 = vand.u32 2147483647, %v2515
    %v2897 = vand.u32 2147483647, %v2516
    %v2898 = vand.u32 2147483647, %v2517
    %v2899 = vand.u32 2147483647, %v2518
    %v2900 = vand.u32 2147483647, %v2519
    %v2901 = vand.u32 2147483647, %v2520
    %v2902 = vand.u32 2147483647, %v2521
    %v2903 = vand.u32 2147483647, %v2522
    %v2904 = vand.u32 2147483647, %v2523
    %v2905 = vand.u32 2147483647, %v2524
    %v2906 = vand.u32 2147483647, %v2525
    %v2907 = vsub.f32 0.0, %v2891
    %v2908 = vsub.f32 0.0, %v2892
    %v2909 = vsub.f32 0.0, %v2893
    %v2910 = vsub.f32 0.0, %v2894
    %v2911 = vsub.f32 0.0, %v2895
    %v2912 = vsub.f32 0.0, %v2896
    %v2913 = vsub.f32 0.0, %v2897
    %v2914 = vsub.f32 0.0, %v2898
    %v2915 = vsub.f32 0.0, %v2899
    %v2916 = vsub.f32 0.0, %v2900
    %v2917 = vsub.f32 0.0, %v2901
    %v2918 = vsub.f32 0.0, %v2902
    %v2919 = vsub.f32 0.0, %v2903
    %v2920 = vsub.f32 0.0, %v2904
    %v2921 = vsub.f32 0.0, %v2905
    %v2922 = vsub.f32 0.0, %v2906
    %v2923 = vmul.f32 %v2907, 1.442695
    %v2924 = vpow.pop %v2923
    %v2925 = vmul.f32 %v2908, 1.442695
    %v2926 = vpow.pop %v2925
    %v2927 = vmul.f32 %v2909, 1.442695
    %v2928 = vpow.pop %v2927
    %v2929 = vmul.f32 %v2910, 1.442695
    %v2930 = vpow.pop %v2929
    %v2931 = vmul.f32 %v2911, 1.442695
    %v2932 = vpow.pop %v2931
    %v2933 = vmul.f32 %v2912, 1.442695
    %v2934 = vpow.pop %v2933
    %v2935 = vmul.f32 %v2913, 1.442695
    %v2936 = vpow.pop %v2935
    %v2937 = vmul.f32 %v2914, 1.442695
    %v2938 = vpow.pop %v2937
    %v2939 = vmul.f32 %v2915, 1.442695
    %v2940 = vpow.pop %v2939
    %v2941 = vmul.f32 %v2916, 1.442695
    %v2942 = vpow.pop %v2941
    %v2943 = vmul.f32 %v2917, 1.442695
    %v2944 = vpow.pop %v2943
    %v2945 = vmul.f32 %v2918, 1.442695
    %v2946 = vpow.pop %v2945
    %v2947 = vmul.f32 %v2919, 1.442695
    %v2948 = vpow.pop %v2947
    %v2949 = vmul.f32 %v2920, 1.442695
    %v2950 = vpow.pop %v2949
    %v2951 = vmul.f32 %v2921, 1.442695
    %v2952 = vpow.pop %v2951
    %v2953 = vmul.f32 %v2922, 1.442695
    %v2954 = vpow.pop %v2953
    %v2955 = vadd.f32 %v2924, 1.0
    %v2956 = vlog2.pop %v2955
    %v2957 = vmul.f32 %v2956, 0.6931472
    %v2958 = vmul.f32 -0.5, %v2924
    %v2959 = vadd.f32 %v2958, 1.0
    %v2960 = vmul.f32 %v2959, %v2924
    %v2961 = vand.u32 2147483647, %v2924
    %vm2962 = vcmp.lt.f32.partialorder %v2961, 0.0004427343
    %v2963 = vsel %vm2962, %v2960, %v2957
    %v2964 = vadd.f32 %v2926, 1.0
    %v2965 = vlog2.pop %v2964
    %v2966 = vmul.f32 %v2965, 0.6931472
    %v2967 = vmul.f32 -0.5, %v2926
    %v2968 = vadd.f32 %v2967, 1.0
    %v2969 = vmul.f32 %v2968, %v2926
    %v2970 = vand.u32 2147483647, %v2926
    %vm2971 = vcmp.lt.f32.partialorder %v2970, 0.0004427343
    %v2972 = vsel %vm2971, %v2969, %v2966
    %v2973 = vadd.f32 %v2928, 1.0
    %v2974 = vlog2.pop %v2973
    %v2975 = vmul.f32 %v2974, 0.6931472
    %v2976 = vmul.f32 -0.5, %v2928
    %v2977 = vadd.f32 %v2976, 1.0
    %v2978 = vmul.f32 %v2977, %v2928
    %v2979 = vand.u32 2147483647, %v2928
    %vm2980 = vcmp.lt.f32.partialorder %v2979, 0.0004427343
    %v2981 = vsel %vm2980, %v2978, %v2975
    %v2982 = vadd.f32 %v2930, 1.0
    %v2983 = vlog2.pop %v2982
    %v2984 = vmul.f32 %v2983, 0.6931472
    %v2985 = vmul.f32 -0.5, %v2930
    %v2986 = vadd.f32 %v2985, 1.0
    %v2987 = vmul.f32 %v2986, %v2930
    %v2988 = vand.u32 2147483647, %v2930
    %vm2989 = vcmp.lt.f32.partialorder %v2988, 0.0004427343
    %v2990 = vsel %vm2989, %v2987, %v2984
    %v2991 = vadd.f32 %v2932, 1.0
    %v2992 = vlog2.pop %v2991
    %v2993 = vmul.f32 %v2992, 0.6931472
    %v2994 = vmul.f32 -0.5, %v2932
    %v2995 = vadd.f32 %v2994, 1.0
    %v2996 = vmul.f32 %v2995, %v2932
    %v2997 = vand.u32 2147483647, %v2932
    %vm2998 = vcmp.lt.f32.partialorder %v2997, 0.0004427343
    %v2999 = vsel %vm2998, %v2996, %v2993
    %v3000 = vadd.f32 %v2934, 1.0
    %v3001 = vlog2.pop %v3000
    %v3002 = vmul.f32 %v3001, 0.6931472
    %v3003 = vmul.f32 -0.5, %v2934
    %v3004 = vadd.f32 %v3003, 1.0
    %v3005 = vmul.f32 %v3004, %v2934
    %v3006 = vand.u32 2147483647, %v2934
    %vm3007 = vcmp.lt.f32.partialorder %v3006, 0.0004427343
    %v3008 = vsel %vm3007, %v3005, %v3002
    %v3009 = vadd.f32 %v2936, 1.0
    %v3010 = vlog2.pop %v3009
    %v3011 = vmul.f32 %v3010, 0.6931472
    %v3012 = vmul.f32 -0.5, %v2936
    %v3013 = vadd.f32 %v3012, 1.0
    %v3014 = vmul.f32 %v3013, %v2936
    %v3015 = vand.u32 2147483647, %v2936
    %vm3016 = vcmp.lt.f32.partialorder %v3015, 0.0004427343
    %v3017 = vsel %vm3016, %v3014, %v3011
    %v3018 = vadd.f32 %v2938, 1.0
    %v3019 = vlog2.pop %v3018
    %v3020 = vmul.f32 %v3019, 0.6931472
    %v3021 = vmul.f32 -0.5, %v2938
    %v3022 = vadd.f32 %v3021, 1.0
    %v3023 = vmul.f32 %v3022, %v2938
    %v3024 = vand.u32 2147483647, %v2938
    %vm3025 = vcmp.lt.f32.partialorder %v3024, 0.0004427343
    %v3026 = vsel %vm3025, %v3023, %v3020
    %v3027 = vadd.f32 %v2940, 1.0
    %v3028 = vlog2.pop %v3027
    %v3029 = vmul.f32 %v3028, 0.6931472
    %v3030 = vmul.f32 -0.5, %v2940
    %v3031 = vadd.f32 %v3030, 1.0
    %v3032 = vmul.f32 %v3031, %v2940
    %v3033 = vand.u32 2147483647, %v2940
    %vm3034 = vcmp.lt.f32.partialorder %v3033, 0.0004427343
    %v3035 = vsel %vm3034, %v3032, %v3029
    %v3036 = vadd.f32 %v2942, 1.0
    %v3037 = vlog2.pop %v3036
    %v3038 = vmul.f32 %v3037, 0.6931472
    %v3039 = vmul.f32 -0.5, %v2942
    %v3040 = vadd.f32 %v3039, 1.0
    %v3041 = vmul.f32 %v3040, %v2942
    %v3042 = vand.u32 2147483647, %v2942
    %vm3043 = vcmp.lt.f32.partialorder %v3042, 0.0004427343
    %v3044 = vsel %vm3043, %v3041, %v3038
    %v3045 = vadd.f32 %v2944, 1.0
    %v3046 = vlog2.pop %v3045
    %v3047 = vmul.f32 %v3046, 0.6931472
    %v3048 = vmul.f32 -0.5, %v2944
    %v3049 = vadd.f32 %v3048, 1.0
    %v3050 = vmul.f32 %v3049, %v2944
    %v3051 = vand.u32 2147483647, %v2944
    %vm3052 = vcmp.lt.f32.partialorder %v3051, 0.0004427343
    %v3053 = vsel %vm3052, %v3050, %v3047
    %v3054 = vadd.f32 %v2946, 1.0
    %v3055 = vlog2.pop %v3054
    %v3056 = vmul.f32 %v3055, 0.6931472
    %v3057 = vmul.f32 -0.5, %v2946
    %v3058 = vadd.f32 %v3057, 1.0
    %v3059 = vmul.f32 %v3058, %v2946
    %v3060 = vand.u32 2147483647, %v2946
    %vm3061 = vcmp.lt.f32.partialorder %v3060, 0.0004427343
    %v3062 = vsel %vm3061, %v3059, %v3056
    %v3063 = vadd.f32 %v2948, 1.0
    %v3064 = vlog2.pop %v3063
    %v3065 = vmul.f32 %v3064, 0.6931472
    %v3066 = vmul.f32 -0.5, %v2948
    %v3067 = vadd.f32 %v3066, 1.0
    %v3068 = vmul.f32 %v3067, %v2948
    %v3069 = vand.u32 2147483647, %v2948
    %vm3070 = vcmp.lt.f32.partialorder %v3069, 0.0004427343
    %v3071 = vsel %vm3070, %v3068, %v3065
    %v3072 = vadd.f32 %v2950, 1.0
    %v3073 = vlog2.pop %v3072
    %v3074 = vmul.f32 %v3073, 0.6931472
    %v3075 = vmul.f32 -0.5, %v2950
    %v3076 = vadd.f32 %v3075, 1.0
    %v3077 = vmul.f32 %v3076, %v2950
    %v3078 = vand.u32 2147483647, %v2950
    %vm3079 = vcmp.lt.f32.partialorder %v3078, 0.0004427343
    %v3080 = vsel %vm3079, %v3077, %v3074
    %v3081 = vadd.f32 %v2952, 1.0
    %v3082 = vlog2.pop %v3081
    %v3083 = vmul.f32 %v3082, 0.6931472
    %v3084 = vmul.f32 -0.5, %v2952
    %v3085 = vadd.f32 %v3084, 1.0
    %v3086 = vmul.f32 %v3085, %v2952
    %v3087 = vand.u32 2147483647, %v2952
    %vm3088 = vcmp.lt.f32.partialorder %v3087, 0.0004427343
    %v3089 = vsel %vm3088, %v3086, %v3083
    %v3090 = vadd.f32 %v2954, 1.0
    %v3091 = vlog2.pop %v3090
    %v3092 = vmul.f32 %v3091, 0.6931472
    %v3093 = vmul.f32 -0.5, %v2954
    %v3094 = vadd.f32 %v3093, 1.0
    %v3095 = vmul.f32 %v3094, %v2954
    %v3096 = vand.u32 2147483647, %v2954
    %vm3097 = vcmp.lt.f32.partialorder %v3096, 0.0004427343
    %v3098 = vsel %vm3097, %v3095, %v3092
    %v3099 = vadd.f32 %v2843, %v2963
    %v3100 = vadd.f32 %v2844, %v2972
    %v3101 = vadd.f32 %v2845, %v2981
    %v3102 = vadd.f32 %v2846, %v2990
    %v3103 = vadd.f32 %v2847, %v2999
    %v3104 = vadd.f32 %v2848, %v3008
    %v3105 = vadd.f32 %v2849, %v3017
    %v3106 = vadd.f32 %v2850, %v3026
    %v3107 = vadd.f32 %v2851, %v3035
    %v3108 = vadd.f32 %v2852, %v3044
    %v3109 = vadd.f32 %v2853, %v3053
    %v3110 = vadd.f32 %v2854, %v3062
    %v3111 = vadd.f32 %v2855, %v3071
    %v3112 = vadd.f32 %v2856, %v3080
    %v3113 = vadd.f32 %v2857, %v3089
    %v3114 = vadd.f32 %v2858, %v3098
    %v3115 = vsel %vm2859, %v2875, %v3099
    %v3116 = vsel %vm2860, %v2876, %v3100
    %v3117 = vsel %vm2861, %v2877, %v3101
    %v3118 = vsel %vm2862, %v2878, %v3102
    %v3119 = vsel %vm2863, %v2879, %v3103
    %v3120 = vsel %vm2864, %v2880, %v3104
    %v3121 = vsel %vm2865, %v2881, %v3105
    %v3122 = vsel %vm2866, %v2882, %v3106
    %v3123 = vsel %vm2867, %v2883, %v3107
    %v3124 = vsel %vm2868, %v2884, %v3108
    %v3125 = vsel %vm2869, %v2885, %v3109
    %v3126 = vsel %vm2870, %v2886, %v3110
    %v3127 = vsel %vm2871, %v2887, %v3111
    %v3128 = vsel %vm2872, %v2888, %v3112
    %v3129 = vsel %vm2873, %v2889, %v3113
    %v3130 = vsel %vm2874, %v2890, %v3114
    %v3131 = vadd.f32 %v2827, %v3115
    %v3132 = vadd.f32 %v2828, %v3116
    %v3133 = vadd.f32 %v2829, %v3117
    %v3134 = vadd.f32 %v2830, %v3118
    %v3135 = vadd.f32 %v2831, %v3119
    %v3136 = vadd.f32 %v2832, %v3120
    %v3137 = vadd.f32 %v2833, %v3121
    %v3138 = vadd.f32 %v2834, %v3122
    %v3139 = vadd.f32 %v2835, %v3123
    %v3140 = vadd.f32 %v2836, %v3124
    %v3141 = vadd.f32 %v2837, %v3125
    %v3142 = vadd.f32 %v2838, %v3126
    %v3143 = vadd.f32 %v2839, %v3127
    %v3144 = vadd.f32 %v2840, %v3128
    %v3145 = vadd.f32 %v2841, %v3129
    %v3146 = vadd.f32 %v2842, %v3130
    %v3148 = vlaneseq
    %v3149 = vshrl.u32 %v3148, 7
    %v3150 = vsub.s32 0, %v3149
    %v3151 = vrot.slane %v2538, %v3150
    %3153 = vbcast.lane.b32.xlu0 %v3151, 256
    %v3154 = vpop.permute.xlu0 %3153
    %s3156 = sor.u32 256, 8
    %3157 = vbcast.lane.b32.xlu0 %v3151, %s3156
    %v3158 = vpop.permute.xlu0 %3157
    %s3160 = sor.u32 256, 16
    %3161 = vbcast.lane.b32.xlu0 %v3151, %s3160
    %v3162 = vpop.permute.xlu0 %3161
    %s3164 = sor.u32 256, 24
    %3165 = vbcast.lane.b32.xlu0 %v3151, %s3164
    %v3166 = vpop.permute.xlu0 %3165
    %s3168 = sor.u32 256, 32
    %3169 = vbcast.lane.b32.xlu0 %v3151, %s3168
    %v3170 = vpop.permute.xlu0 %3169
    %s3172 = sor.u32 256, 40
    %3173 = vbcast.lane.b32.xlu0 %v3151, %s3172
    %v3174 = vpop.permute.xlu0 %3173
    %s3176 = sor.u32 256, 48
    %3177 = vbcast.lane.b32.xlu0 %v3151, %s3176
    %v3178 = vpop.permute.xlu0 %3177
    %s3180 = sor.u32 256, 56
    %3181 = vbcast.lane.b32.xlu0 %v3151, %s3180
    %v3182 = vpop.permute.xlu0 %3181
    %s3184 = sor.u32 256, 64
    %3185 = vbcast.lane.b32.xlu0 %v3151, %s3184
    %v3186 = vpop.permute.xlu0 %3185
    %s3188 = sor.u32 256, 72
    %3189 = vbcast.lane.b32.xlu0 %v3151, %s3188
    %v3190 = vpop.permute.xlu0 %3189
    %s3192 = sor.u32 256, 80
    %3193 = vbcast.lane.b32.xlu0 %v3151, %s3192
    %v3194 = vpop.permute.xlu0 %3193
    %s3196 = sor.u32 256, 88
    %3197 = vbcast.lane.b32.xlu0 %v3151, %s3196
    %v3198 = vpop.permute.xlu0 %3197
    %s3200 = sor.u32 256, 96
    %3201 = vbcast.lane.b32.xlu0 %v3151, %s3200
    %v3202 = vpop.permute.xlu0 %3201
    %s3204 = sor.u32 256, 104
    %3205 = vbcast.lane.b32.xlu0 %v3151, %s3204
    %v3206 = vpop.permute.xlu0 %3205
    %s3208 = sor.u32 256, 112
    %3209 = vbcast.lane.b32.xlu0 %v3151, %s3208
    %v3210 = vpop.permute.xlu0 %3209
    %s3212 = sor.u32 256, 120
    %3213 = vbcast.lane.b32.xlu0 %v3151, %s3212
    %v3214 = vpop.permute.xlu0 %3213
    %v3231 = vmul.f32 %v3131, %v3154
    %v3232 = vmul.f32 %v3132, %v3158
    %v3233 = vmul.f32 %v3133, %v3162
    %v3234 = vmul.f32 %v3134, %v3166
    %v3235 = vmul.f32 %v3135, %v3170
    %v3236 = vmul.f32 %v3136, %v3174
    %v3237 = vmul.f32 %v3137, %v3178
    %v3238 = vmul.f32 %v3138, %v3182
    %v3239 = vmul.f32 %v3139, %v3186
    %v3240 = vmul.f32 %v3140, %v3190
    %v3241 = vmul.f32 %v3141, %v3194
    %v3242 = vmul.f32 %v3142, %v3198
    %v3243 = vmul.f32 %v3143, %v3202
    %v3244 = vmul.f32 %v3144, %v3206
    %v3245 = vmul.f32 %v3145, %v3210
    %v3246 = vmul.f32 %v3146, %v3214
    %v3247 = vmul.f32 %v3231, 0.5
    %v3248 = vmul.f32 %v3232, 0.5
    %v3249 = vmul.f32 %v3233, 0.5
    %v3250 = vmul.f32 %v3234, 0.5
    %v3251 = vmul.f32 %v3235, 0.5
    %v3252 = vmul.f32 %v3236, 0.5
    %v3253 = vmul.f32 %v3237, 0.5
    %v3254 = vmul.f32 %v3238, 0.5
    %v3255 = vmul.f32 %v3239, 0.5
    %v3256 = vmul.f32 %v3240, 0.5
    %v3257 = vmul.f32 %v3241, 0.5
    %v3258 = vmul.f32 %v3242, 0.5
    %v3259 = vmul.f32 %v3243, 0.5
    %v3260 = vmul.f32 %v3244, 0.5
    %v3261 = vmul.f32 %v3245, 0.5
    %v3262 = vmul.f32 %v3246, 0.5
    %3279 = vset.pattern.permute.xlu0 0
    %3280 = vperm.xlu0 %3279, %v3247
    %v3281 = vpop.permute.xlu0 %3280
    %3282 = vset.pattern.permute.xlu0 0
    %3283 = vperm.xlu0 %3282, %v3248
    %v3284 = vpop.permute.xlu0 %3283
    %3285 = vset.pattern.permute.xlu0 0
    %3286 = vperm.xlu0 %3285, %v3249
    %v3287 = vpop.permute.xlu0 %3286
    %3288 = vset.pattern.permute.xlu0 0
    %3289 = vperm.xlu0 %3288, %v3250
    %v3290 = vpop.permute.xlu0 %3289
    %3291 = vset.pattern.permute.xlu0 0
    %3292 = vperm.xlu0 %3291, %v3251
    %v3293 = vpop.permute.xlu0 %3292
    %3294 = vset.pattern.permute.xlu0 0
    %3295 = vperm.xlu0 %3294, %v3252
    %v3296 = vpop.permute.xlu0 %3295
    %3297 = vset.pattern.permute.xlu0 0
    %3298 = vperm.xlu0 %3297, %v3253
    %v3299 = vpop.permute.xlu0 %3298
    %3300 = vset.pattern.permute.xlu0 0
    %3301 = vperm.xlu0 %3300, %v3254
    %v3302 = vpop.permute.xlu0 %3301
    %3303 = vset.pattern.permute.xlu0 0
    %3304 = vperm.xlu0 %3303, %v3255
    %v3305 = vpop.permute.xlu0 %3304
    %3306 = vset.pattern.permute.xlu0 0
    %3307 = vperm.xlu0 %3306, %v3256
    %v3308 = vpop.permute.xlu0 %3307
    %3309 = vset.pattern.permute.xlu0 0
    %3310 = vperm.xlu0 %3309, %v3257
    %v3311 = vpop.permute.xlu0 %3310
    %3312 = vset.pattern.permute.xlu0 0
    %3313 = vperm.xlu0 %3312, %v3258
    %v3314 = vpop.permute.xlu0 %3313
    %3315 = vset.pattern.permute.xlu0 0
    %3316 = vperm.xlu0 %3315, %v3259
    %v3317 = vpop.permute.xlu0 %3316
    %3318 = vset.pattern.permute.xlu0 0
    %3319 = vperm.xlu0 %3318, %v3260
    %v3320 = vpop.permute.xlu0 %3319
    %3321 = vset.pattern.permute.xlu0 0
    %3322 = vperm.xlu0 %3321, %v3261
    %v3323 = vpop.permute.xlu0 %3322
    %3324 = vset.pattern.permute.xlu0 0
    %3325 = vperm.xlu0 %3324, %v3262
    %v3326 = vpop.permute.xlu0 %3325
    %v3327 = vlaneseq
    %v3328 = vshrl.u32 %v3327, 7
    %v3329 = vsub.s32 %v2530, %v3328
    %v3330 = vrot.slane %v3281, %v3329
    %v3331 = vadd.s32 %v2530, 4294967288
    %v3332 = vlaneseq
    %v3333 = vshrl.u32 %v3332, 7
    %v3334 = vsub.s32 %v3331, %v3333
    %v3335 = vrot.slane %v3284, %v3334
    %vm3336 = vcmask 130112
    %v3337 = vsel %vm3336, %v3335, %v3330
    %v3338 = vadd.s32 %v2530, 4294967280
    %v3339 = vlaneseq
    %v3340 = vshrl.u32 %v3339, 7
    %v3341 = vsub.s32 %v3338, %v3340
    %v3342 = vrot.slane %v3287, %v3341
    %vm3343 = vcmask 195712
    %v3344 = vsel %vm3343, %v3342, %v3337
    %v3345 = vadd.s32 %v2530, 4294967272
    %v3346 = vlaneseq
    %v3347 = vshrl.u32 %v3346, 7
    %v3348 = vsub.s32 %v3345, %v3347
    %v3349 = vrot.slane %v3290, %v3348
    %vm3350 = vcmask 261312
    %v3351 = vsel %vm3350, %v3349, %v3344
    %v3352 = vadd.s32 %v2530, 4294967264
    %v3353 = vlaneseq
    %v3354 = vshrl.u32 %v3353, 7
    %v3355 = vsub.s32 %v3352, %v3354
    %v3356 = vrot.slane %v3293, %v3355
    %vm3357 = vcmask 326912
    %v3358 = vsel %vm3357, %v3356, %v3351
    %v3359 = vadd.s32 %v2530, 4294967256
    %v3360 = vlaneseq
    %v3361 = vshrl.u32 %v3360, 7
    %v3362 = vsub.s32 %v3359, %v3361
    %v3363 = vrot.slane %v3296, %v3362
    %vm3364 = vcmask 392512
    %v3365 = vsel %vm3364, %v3363, %v3358
    %v3366 = vadd.s32 %v2530, 4294967248
    %v3367 = vlaneseq
    %v3368 = vshrl.u32 %v3367, 7
    %v3369 = vsub.s32 %v3366, %v3368
    %v3370 = vrot.slane %v3299, %v3369
    %vm3371 = vcmask 458112
    %v3372 = vsel %vm3371, %v3370, %v3365
    %v3373 = vadd.s32 %v2530, 4294967240
    %v3374 = vlaneseq
    %v3375 = vshrl.u32 %v3374, 7
    %v3376 = vsub.s32 %v3373, %v3375
    %v3377 = vrot.slane %v3302, %v3376
    %vm3378 = vcmask 523712
    %v3379 = vsel %vm3378, %v3377, %v3372
    %v3380 = vadd.s32 %v2530, 4294967232
    %v3381 = vlaneseq
    %v3382 = vshrl.u32 %v3381, 7
    %v3383 = vsub.s32 %v3380, %v3382
    %v3384 = vrot.slane %v3305, %v3383
    %vm3385 = vcmask 589312
    %v3386 = vsel %vm3385, %v3384, %v3379
    %v3387 = vadd.s32 %v2530, 4294967224
    %v3388 = vlaneseq
    %v3389 = vshrl.u32 %v3388, 7
    %v3390 = vsub.s32 %v3387, %v3389
    %v3391 = vrot.slane %v3308, %v3390
    %vm3392 = vcmask 654912
    %v3393 = vsel %vm3392, %v3391, %v3386
    %v3394 = vadd.s32 %v2530, 4294967216
    %v3395 = vlaneseq
    %v3396 = vshrl.u32 %v3395, 7
    %v3397 = vsub.s32 %v3394, %v3396
    %v3398 = vrot.slane %v3311, %v3397
    %vm3399 = vcmask 720512
    %v3400 = vsel %vm3399, %v3398, %v3393
    %v3401 = vadd.s32 %v2530, 4294967208
    %v3402 = vlaneseq
    %v3403 = vshrl.u32 %v3402, 7
    %v3404 = vsub.s32 %v3401, %v3403
    %v3405 = vrot.slane %v3314, %v3404
    %vm3406 = vcmask 786112
    %v3407 = vsel %vm3406, %v3405, %v3400
    %v3408 = vadd.s32 %v2530, 4294967200
    %v3409 = vlaneseq
    %v3410 = vshrl.u32 %v3409, 7
    %v3411 = vsub.s32 %v3408, %v3410
    %v3412 = vrot.slane %v3317, %v3411
    %vm3413 = vcmask 851712
    %v3414 = vsel %vm3413, %v3412, %v3407
    %v3415 = vadd.s32 %v2530, 4294967192
    %v3416 = vlaneseq
    %v3417 = vshrl.u32 %v3416, 7
    %v3418 = vsub.s32 %v3415, %v3417
    %v3419 = vrot.slane %v3320, %v3418
    %vm3420 = vcmask 917312
    %v3421 = vsel %vm3420, %v3419, %v3414
    %v3422 = vadd.s32 %v2530, 4294967184
    %v3423 = vlaneseq
    %v3424 = vshrl.u32 %v3423, 7
    %v3425 = vsub.s32 %v3422, %v3424
    %v3426 = vrot.slane %v3323, %v3425
    %vm3427 = vcmask 982912
    %v3428 = vsel %vm3427, %v3426, %v3421
    %v3429 = vadd.s32 %v2530, 4294967176
    %v3430 = vlaneseq
    %v3431 = vshrl.u32 %v3430, 7
    %v3432 = vsub.s32 %v3429, %v3431
    %v3433 = vrot.slane %v3326, %v3432
    %vm3434 = vcmask 1048512
    %v3435 = vsel %vm3434, %v3433, %v3428
    %v3437 = vsel %vm2536, %v3435, 0.0
    %v3438 = vld [vmem:[#allocation11] sm:$0x1]
    %v3439 = vadd.f32 %v3438, %v3437
    %3440 = vst [vmem:[#allocation11] sm:$0x1] %v3439
    %v3441 = vld [vmem:[#allocation12] sm:$0x1]
    %v3442 = vadd.f32 %v3441, %v2538
    %3443 = vst [vmem:[#allocation12] sm:$0x1] %v3442
    // Predicated region
    $region38: #{tpu_custom_call.1} parent=1 // pred_check
      _
    $region39: #{tpu_custom_call.1} parent=1 // pred_check_branch
      %3445 = sbr.rel (0) target = $region41
    $region40: #{tpu_custom_call.1} parent=1 // pred_region
      %s3447 = ssub.s32 16, 16
      %3448 = vsyncadd [#allocation5], %s3447
      %s3450 = sshll.u32 [#allocation11], 4
      %s3451 = int_to_ptr.vmem [resolvable:$true] %s3450
      %3453 = dma.vmem_to_hbm [thread:$0]  %s3451, 16, %s4, [#allocation5]
    $region41: #{tpu_custom_call.1} parent=1 // pred_fallthru
      _
    // Predicated region
    $region42: #{tpu_custom_call.1} parent=1 // pred_check
      _
    $region43: #{tpu_custom_call.1} parent=1 // pred_check_branch
      %3455 = sbr.rel (0) target = $region45
    $region44: #{tpu_custom_call.1} parent=1 // pred_region
      %s3457 = ssub.s32 16, 16
      %3458 = vsyncadd [#allocation13], %s3457
      %s3460 = sshll.u32 [#allocation12], 4
      %s3461 = int_to_ptr.vmem [resolvable:$true] %s3460
      %3463 = dma.vmem_to_hbm [thread:$0]  %s3461, 16, %s5, [#allocation13]
    $region45: #{tpu_custom_call.1} parent=1 // pred_fallthru
      _
    // Predicated region
    $region46: #{tpu_custom_call.1} parent=1 // pred_check
      _
    $region47: #{tpu_custom_call.1} parent=1 // pred_check_branch
      %3465 = sbr.rel (0) target = $region49
    $region48: #{tpu_custom_call.1} parent=1 // pred_region
      %3466 = dma.done [#allocation5], 16
    $region49: #{tpu_custom_call.1} parent=1 // pred_fallthru
      _
    // Predicated region
    $region50: #{tpu_custom_call.1} parent=1 // pred_check
      _
    $region51: #{tpu_custom_call.1} parent=1 // pred_check_branch
      %3468 = sbr.rel (0) target = $region53
    $region52: #{tpu_custom_call.1} parent=1 // pred_region
      %3469 = dma.done [#allocation13], 16
    $region53: #{tpu_custom_call.1} parent=1 // pred_fallthru
      _
    %3470 = vsyncpa [#allocation4], 1
    %3471 = vsyncpa [#allocation7], 1
    %3472 = vsyncpa [#allocation10], 1
    %3473 = vsyncpa [#allocation5], 1
    %3474 = vsyncpa [#allocation13], 1

</llo_original>
